<compile_context>
chip_gen: v6e
topology: v6e:2x2x1
jax: 0.10.0
libtpu: 0.0.40
codegen_flags: <defaults>
</compile_context>

<pallas_src>
import functools

import jax
import jax.numpy as jnp
import numpy as np
from jax.experimental import pallas as pl
from jax.experimental.pallas import tpu as pltpu

# ---- scaled-down cfg (YOLACT defaults shrunk for a small self-test) ----------
HEAD_FEATURES = 128   # cfg.extra_head_net out channels (256 in full YOLACT)
NUM_PRIORS = 3        # sum(len(ars) * len(scales))
NUM_CLASSES = 21      # cfg.num_classes (81 in full YOLACT)
MASK_DIM = 16         # cfg.mask_dim    (32 in full YOLACT)
# cfg.extra_layers = (0, 0, 0) -> bbox/conf/mask_extra are identity.


def _round_up(x, m):
    return (x + m - 1) // m * m


# ------------------------------- Pallas kernel --------------------------------
def _prediction_kernel(x1_ref, w1_ref, b1_ref, w2_ref, b2_ref, o_ref, upad_ref,
                       *, H, W, F, tanh_lo, tanh_hi):
    """Fused upfeature conv+ReLU and bbox/conf/mask head convs (+tanh on mask).

    x1_ref : (1, H*W, 9*Cin) bf16  raw input, 3x3 taps pre-packed into channels
    w1_ref : (9*Cin, F)      bf16  upfeature weights (im2col layout)
    b1_ref : (1, F)          f32
    w2_ref : (9*F, Cpad)     bf16  concat(bbox, conf, mask) weights, zero-padded
    b2_ref : (1, Cpad)       f32
    o_ref  : (1, H*W, Cpad)  f32   lane-dense packed head outputs
    upad_ref: (H+2, W+2, F)  f32   VMEM scratch: zero-padded upfeature map
    """
    P = H * W

    # --- upfeature: single deep matmul (contraction 9*Cin), bias+ReLU epilogue.
    u = jnp.dot(x1_ref[0], w1_ref[...], preferred_element_type=jnp.float32)
    u = jnp.maximum(u + b1_ref[...], 0.0)

    # --- keep the pad=1 upfeature map resident in VMEM (never touches HBM).
    upad_ref[...] = jnp.zeros(upad_ref.shape, upad_ref.dtype)
    upad_ref[pl.ds(1, H), pl.ds(1, W), :] = u.reshape(H, W, F)

    # --- in-VMEM im2col: 9 lane-aligned (P, F) tap views packed along lanes,
    #     then ONE matmul (contraction 9*F) computes all three heads at once.
    taps = [upad_ref[pl.ds(dy, H), pl.ds(dx, W), :]
            .reshape(P, F).astype(jnp.bfloat16)
            for dy in range(3) for dx in range(3)]
    a2 = jnp.concatenate(taps, axis=-1)                        # (P, 9*F) bf16
    heads = jnp.dot(a2, w2_ref[...], preferred_element_type=jnp.float32)
    heads = heads + b2_ref[...]

    # tanh only on the mask columns (EUP + lane select); bbox/conf untouched.
    cols = jax.lax.broadcasted_iota(jnp.int32, heads.shape, 1)
    heads = jnp.where((cols >= tanh_lo) & (cols < tanh_hi),
                      jnp.tanh(heads), heads)

    o_ref[0] = heads.astype(o_ref.dtype)


def _prediction_pallas(x1, w1, b1, w2, b2, *, H, W, F, Cpad, tanh_lo, tanh_hi):
    N, P, Cin9 = x1.shape
    kernel = functools.partial(_prediction_kernel, H=H, W=W, F=F,
                               tanh_lo=tanh_lo, tanh_hi=tanh_hi)
    return pl.pallas_call(
        kernel,
        grid=(N,),
        in_specs=[
            pl.BlockSpec((1, P, Cin9), lambda n: (n, 0, 0)),
            pl.BlockSpec((Cin9, F), lambda n: (0, 0)),      # DMA'd once
            pl.BlockSpec((1, F), lambda n: (0, 0)),
            pl.BlockSpec((9 * F, Cpad), lambda n: (0, 0)),  # DMA'd once
            pl.BlockSpec((1, Cpad), lambda n: (0, 0)),
        ],
        out_specs=pl.BlockSpec((1, P, Cpad), lambda n: (n, 0, 0)),
        out_shape=jax.ShapeDtypeStruct((N, P, Cpad), jnp.float32),
        scratch_shapes=[pltpu.VMEM((H + 2, W + 2, F), jnp.float32)],
        compiler_params=pltpu.CompilerParams(
            dimension_semantics=("parallel",)),
    )(x1, w1, b1, w2, b2)


# ------------------------------- wrapper ---------------------------------------
def _im2col_pack(x_nhwc):
    """Pack the 3x3 taps of the (small) raw input into the channel axis once.

    Cheap for the Cin-channel raw input; the wide F-channel intermediate is
    never materialized this way (it is im2col'ed inside the kernel from VMEM).
    """
    N, H, W, C = x_nhwc.shape
    xp = jnp.pad(x_nhwc, ((0, 0), (1, 1), (1, 1), (0, 0)))
    parts = [xp[:, dy:dy + H, dx:dx + W, :]
             for dy in range(3) for dx in range(3)]
    return jnp.concatenate(parts, axis=-1).reshape(N, H * W, 9 * C)


def prediction_forward(x_nchw, params):
    x = jnp.transpose(x_nchw, (0, 2, 3, 1))            # NCHW -> NHWC
    N, H, W, Cin = x.shape
    F = params['up'][0].shape[-1]

    x1 = _im2col_pack(x).astype(jnp.bfloat16)
    w1 = params['up'][0].reshape(9 * Cin, F).astype(jnp.bfloat16)
    b1 = params['up'][1].reshape(1, F).astype(jnp.float32)

    # Concatenate the three head convs into one weight matrix, zero-pad the
    # output channels to a multiple of 128 so stores are lane-dense.
    wh = jnp.concatenate([params[k][0] for k in ('bbox', 'conf', 'mask')],
                         axis=-1)                       # (3,3,F,Ctot)
    bh = jnp.concatenate([params[k][1] for k in ('bbox', 'conf', 'mask')])
    nb = params['bbox'][0].shape[-1]
    nc = params['conf'][0].shape[-1]
    nm = params['mask'][0].shape[-1]
    Ctot = nb + nc + nm
    Cpad = _round_up(Ctot, 128)
    wh = jnp.pad(wh, ((0, 0), (0, 0), (0, 0), (0, Cpad - Ctot)))
    w2 = wh.reshape(9 * F, Cpad).astype(jnp.bfloat16)
    b2 = jnp.pad(bh, (0, Cpad - Ctot)).reshape(1, Cpad).astype(jnp.float32)

    heads = _prediction_pallas(x1, w1, b1, w2, b2, H=H, W=W, F=F, Cpad=Cpad,
                               tanh_lo=nb + nc, tanh_hi=Ctot)  # (N, H*W, Cpad)

    bbox = heads[:, :, :nb].reshape(N, -1, 4)
    conf = heads[:, :, nb:nb + nc].reshape(N, -1, NUM_CLASSES)
    mask = heads[:, :, nb + nc:Ctot].reshape(N, -1, MASK_DIM)  # tanh already applied
    return bbox, conf, mask


# ------------------------------- parameters ------------------------------------
def make_params(key, in_channels):
    F = HEAD_FEATURES

    def conv_p(k, cin, cout):
        k1, k2 = jax.random.split(k)
        return (jax.random.normal(k1, (3, 3, cin, cout), jnp.float32) * 0.05,
                jax.random.normal(k2, (cout,), jnp.float32) * 0.05)

    keys = jax.random.split(key, 4)
    return {
        'up':   conv_p(keys[0], in_channels, F),
        'bbox': conv_p(keys[1], F, NUM_PRIORS * 4),
        'conf': conv_p(keys[2], F, NUM_PRIORS * NUM_CLASSES),
        'mask': conv_p(keys[3], F, NUM_PRIORS * MASK_DIM),
    }


# ---------------------------- pure-JAX reference --------------------------------
def _ref_conv(x, w_hwio, b, relu=False):
    y = jax.lax.conv_general_dilated(
        x, w_hwio, (1, 1), ((1, 1), (1, 1)),
        dimension_numbers=('NHWC', 'HWIO', 'NHWC')) + b
    return jnp.maximum(y, 0.0) if relu else y


def prediction_reference(x_nchw, params):
    x = jnp.transpose(x_nchw, (0, 2, 3, 1))
    N = x.shape[0]
    u = _ref_conv(x, *params['up'], relu=True)          # upfeature (+ReLU)
    # extra_layers = (0,0,0) -> bbox_x = conf_x = mask_x = u
    bbox = _ref_conv(u, *params['bbox']).reshape(N, -1, 4)
    conf = _ref_conv(u, *params['conf']).reshape(N, -1, NUM_CLASSES)
    mask = jnp.tanh(_ref_conv(u, *params['mask'])).reshape(N, -1, MASK_DIM)
    return bbox, conf, mask


# ----------------------------------- main ---------------------------------------
if __name__ == "__main__":
    key = jax.random.PRNGKey(0)
    kx, kp = jax.random.split(key)
    in_channels, H, W = 32, 16, 16
    x = jax.random.normal(kx, (2, in_channels, H, W), jnp.float32)  # NCHW input
    params = make_params(kp, in_channels)

    outs = jax.block_until_ready(prediction_forward(x, params))
    refs = prediction_reference(x, params)

    # bf16 operands with f32 accumulation vs. pure-f32 reference.
    for o, r in zip(outs, refs):
        np.testing.assert_allclose(np.asarray(o), np.asarray(r),
                                   rtol=3e-2, atol=3e-2)
    print("KERNEL_OK")
</pallas_src>

<mosaic_0001>
module attributes {stable_mosaic.version = 11 : i64} {
  func.func @_prediction_kernel(%arg0: i32, %arg1: memref<1x256x288xbf16, #tpu.memory_space<vmem>>, %arg2: memref<288x128xbf16, #tpu.memory_space<vmem>>, %arg3: memref<1x128xf32, #tpu.memory_space<vmem>>, %arg4: memref<1152x128xbf16, #tpu.memory_space<vmem>>, %arg5: memref<1x128xf32, #tpu.memory_space<vmem>>, %arg6: memref<1x256x128xf32, #tpu.memory_space<vmem>>, %arg7: memref<18x18x128xf32, #tpu.memory_space<vmem>>) attributes {dimension_semantics = [#tpu.dimension_semantics<parallel>], iteration_bounds = array<i64: 2>, scalar_prefetch = 0 : i64, scratch_operands = 1 : i64, tpu.core_type = #tpu.core_type<tc>, window_params = [{transform_indices = @transform_0, window_bounds = array<i64: 1, 256, 288>}, {pipeline_mode = #tpu.pipeline_mode<synchronous>, transform_indices = @transform_1, window_bounds = array<i64: 288, 128>}, {pipeline_mode = #tpu.pipeline_mode<synchronous>, transform_indices = @transform_2, window_bounds = array<i64: 1, 128>}, {pipeline_mode = #tpu.pipeline_mode<synchronous>, transform_indices = @transform_3, window_bounds = array<i64: 1152, 128>}, {pipeline_mode = #tpu.pipeline_mode<synchronous>, transform_indices = @transform_4, window_bounds = array<i64: 1, 128>}, {transform_indices = @transform_5, window_bounds = array<i64: 1, 256, 128>}]} {
    %c0 = arith.constant 0 : index
    %c0_0 = arith.constant 0 : index
    %c0_1 = arith.constant 0 : index
    %0 = vector.load %arg1[%c0, %c0_0, %c0_1] : memref<1x256x288xbf16, #tpu.memory_space<vmem>>, vector<1x256x288xbf16>
    %1 = vector.shape_cast %0 : vector<1x256x288xbf16> to vector<256x288xbf16>
    %c0_2 = arith.constant 0 : index
    %c0_3 = arith.constant 0 : index
    %2 = vector.load %arg2[%c0_2, %c0_3] : memref<288x128xbf16, #tpu.memory_space<vmem>>, vector<288x128xbf16>
    %cst = arith.constant dense<0.000000e+00> : vector<256x128xf32>
    %3 = tpu.matmul %1, %2, %cst {dimension_numbers = #tpu.dot_dimension_numbers<[1], [0], [0], [1], [0, 0, 1, 1], [], []>} : vector<256x288xbf16>, vector<288x128xbf16>, vector<256x128xf32> -> vector<256x128xf32>
    %c0_4 = arith.constant 0 : index
    %c0_5 = arith.constant 0 : index
    %4 = vector.load %arg3[%c0_4, %c0_5] : memref<1x128xf32, #tpu.memory_space<vmem>>, vector<1x128xf32>
    %5 = vector.broadcast %4 : vector<1x128xf32> to vector<256x128xf32>
    %6 = arith.addf %3, %5 : vector<256x128xf32>
    %cst_6 = arith.constant 0.000000e+00 : f32
    %7 = vector.broadcast %cst_6 : f32 to vector<256x128xf32>
    %8 = arith.maximumf %6, %7 : vector<256x128xf32>
    %cst_7 = arith.constant 0.000000e+00 : f32
    %9 = vector.broadcast %cst_7 : f32 to vector<18x18x128xf32>
    %c0_8 = arith.constant 0 : index
    %c0_9 = arith.constant 0 : index
    %c0_10 = arith.constant 0 : index
    %10 = vector.load %arg7[%c0_8, %c0_9, %c0_10] : memref<18x18x128xf32, #tpu.memory_space<vmem>>, vector<18x18x128xf32>
    tpu.vector_store %arg7[%c0_8, %c0_9, %c0_10], %9 {strides = array<i32>} : memref<18x18x128xf32, #tpu.memory_space<vmem>>, vector<18x18x128xf32>,
    %11 = vector.shape_cast %8 : vector<256x128xf32> to vector<16x16x128xf32>
    %c1 = arith.constant 1 : index
    %c1_11 = arith.constant 1 : index
    %c0_12 = arith.constant 0 : index
    %12 = vector.load %arg7[%c1, %c1_11, %c0_12] : memref<18x18x128xf32, #tpu.memory_space<vmem>>, vector<16x16x128xf32>
    tpu.vector_store %arg7[%c1, %c1_11, %c0_12], %11 {strides = array<i32>} : memref<18x18x128xf32, #tpu.memory_space<vmem>>, vector<16x16x128xf32>,
    %c0_13 = arith.constant 0 : index
    %c0_14 = arith.constant 0 : index
    %c0_15 = arith.constant 0 : index
    %13 = vector.load %arg7[%c0_13, %c0_14, %c0_15] : memref<18x18x128xf32, #tpu.memory_space<vmem>>, vector<16x16x128xf32>
    %14 = vector.shape_cast %13 : vector<16x16x128xf32> to vector<256x128xf32>
    %15 = arith.truncf %14 : vector<256x128xf32> to vector<256x128xbf16>
    %c0_16 = arith.constant 0 : index
    %c1_17 = arith.constant 1 : index
    %c0_18 = arith.constant 0 : index
    %16 = vector.load %arg7[%c0_16, %c1_17, %c0_18] : memref<18x18x128xf32, #tpu.memory_space<vmem>>, vector<16x16x128xf32>
    %17 = vector.shape_cast %16 : vector<16x16x128xf32> to vector<256x128xf32>
    %18 = arith.truncf %17 : vector<256x128xf32> to vector<256x128xbf16>
    %c0_19 = arith.constant 0 : index
    %c2 = arith.constant 2 : index
    %c0_20 = arith.constant 0 : index
    %19 = vector.load %arg7[%c0_19, %c2, %c0_20] : memref<18x18x128xf32, #tpu.memory_space<vmem>>, vector<16x16x128xf32>
    %20 = vector.shape_cast %19 : vector<16x16x128xf32> to vector<256x128xf32>
    %21 = arith.truncf %20 : vector<256x128xf32> to vector<256x128xbf16>
    %c1_21 = arith.constant 1 : index
    %c0_22 = arith.constant 0 : index
    %c0_23 = arith.constant 0 : index
    %22 = vector.load %arg7[%c1_21, %c0_22, %c0_23] : memref<18x18x128xf32, #tpu.memory_space<vmem>>, vector<16x16x128xf32>
    %23 = vector.shape_cast %22 : vector<16x16x128xf32> to vector<256x128xf32>
    %24 = arith.truncf %23 : vector<256x128xf32> to vector<256x128xbf16>
    %c1_24 = arith.constant 1 : index
    %c1_25 = arith.constant 1 : index
    %c0_26 = arith.constant 0 : index
    %25 = vector.load %arg7[%c1_24, %c1_25, %c0_26] : memref<18x18x128xf32, #tpu.memory_space<vmem>>, vector<16x16x128xf32>
    %26 = vector.shape_cast %25 : vector<16x16x128xf32> to vector<256x128xf32>
    %27 = arith.truncf %26 : vector<256x128xf32> to vector<256x128xbf16>
    %c1_27 = arith.constant 1 : index
    %c2_28 = arith.constant 2 : index
    %c0_29 = arith.constant 0 : index
    %28 = vector.load %arg7[%c1_27, %c2_28, %c0_29] : memref<18x18x128xf32, #tpu.memory_space<vmem>>, vector<16x16x128xf32>
    %29 = vector.shape_cast %28 : vector<16x16x128xf32> to vector<256x128xf32>
    %30 = arith.truncf %29 : vector<256x128xf32> to vector<256x128xbf16>
    %c2_30 = arith.constant 2 : index
    %c0_31 = arith.constant 0 : index
    %c0_32 = arith.constant 0 : index
    %31 = vector.load %arg7[%c2_30, %c0_31, %c0_32] : memref<18x18x128xf32, #tpu.memory_space<vmem>>, vector<16x16x128xf32>
    %32 = vector.shape_cast %31 : vector<16x16x128xf32> to vector<256x128xf32>
    %33 = arith.truncf %32 : vector<256x128xf32> to vector<256x128xbf16>
    %c2_33 = arith.constant 2 : index
    %c1_34 = arith.constant 1 : index
    %c0_35 = arith.constant 0 : index
    %34 = vector.load %arg7[%c2_33, %c1_34, %c0_35] : memref<18x18x128xf32, #tpu.memory_space<vmem>>, vector<16x16x128xf32>
    %35 = vector.shape_cast %34 : vector<16x16x128xf32> to vector<256x128xf32>
    %36 = arith.truncf %35 : vector<256x128xf32> to vector<256x128xbf16>
    %c2_36 = arith.constant 2 : index
    %c2_37 = arith.constant 2 : index
    %c0_38 = arith.constant 0 : index
    %37 = vector.load %arg7[%c2_36, %c2_37, %c0_38] : memref<18x18x128xf32, #tpu.memory_space<vmem>>, vector<16x16x128xf32>
    %38 = vector.shape_cast %37 : vector<16x16x128xf32> to vector<256x128xf32>
    %39 = arith.truncf %38 : vector<256x128xf32> to vector<256x128xbf16>
    %40 = tpu.concatenate %15, %18, %21, %24, %27, %30, %33, %36, %39 in 1 : vector<256x128xbf16>, vector<256x128xbf16>, vector<256x128xbf16>, vector<256x128xbf16>, vector<256x128xbf16>, vector<256x128xbf16>, vector<256x128xbf16>, vector<256x128xbf16>, vector<256x128xbf16> -> vector<256x1152xbf16>
    %c0_39 = arith.constant 0 : index
    %c0_40 = arith.constant 0 : index
    %41 = vector.load %arg4[%c0_39, %c0_40] : memref<1152x128xbf16, #tpu.memory_space<vmem>>, vector<1152x128xbf16>
    %cst_41 = arith.constant dense<0.000000e+00> : vector<256x128xf32>
    %42 = tpu.matmul %40, %41, %cst_41 {dimension_numbers = #tpu.dot_dimension_numbers<[1], [0], [0], [1], [0, 0, 1, 1], [], []>} : vector<256x1152xbf16>, vector<1152x128xbf16>, vector<256x128xf32> -> vector<256x128xf32>
    %c0_42 = arith.constant 0 : index
    %c0_43 = arith.constant 0 : index
    %43 = vector.load %arg5[%c0_42, %c0_43] : memref<1x128xf32, #tpu.memory_space<vmem>>, vector<1x128xf32>
    %44 = vector.broadcast %43 : vector<1x128xf32> to vector<256x128xf32>
    %45 = arith.addf %42, %44 : vector<256x128xf32>
    %46 = tpu.iota {dimensions = array<i32: 1>} : vector<256x128xi32>
    %c75_i32 = arith.constant 75 : i32
    %47 = vector.broadcast %c75_i32 : i32 to vector<256x128xi32>
    %48 = arith.cmpi sge, %46, %47 : vector<256x128xi32>
    %c123_i32 = arith.constant 123 : i32
    %49 = vector.broadcast %c123_i32 : i32 to vector<256x128xi32>
    %50 = arith.cmpi slt, %46, %49 : vector<256x128xi32>
    %51 = arith.andi %48, %50 : vector<256x128xi1>
    %52 = math.tanh %45 : vector<256x128xf32>
    %53 = arith.select %51, %52, %45 : vector<256x128xi1>, vector<256x128xf32>
    %c0_44 = arith.constant 0 : index
    %c0_45 = arith.constant 0 : index
    %c0_46 = arith.constant 0 : index
    %54 = vector.load %arg6[%c0_44, %c0_45, %c0_46] : memref<1x256x128xf32, #tpu.memory_space<vmem>>, vector<1x256x128xf32>
    %55 = vector.shape_cast %54 : vector<1x256x128xf32> to vector<256x128xf32>
    %56 = vector.shape_cast %53 : vector<256x128xf32> to vector<1x256x128xf32>
    tpu.vector_store %arg6[%c0_44, %c0_45, %c0_46], %56 {strides = array<i32>} : memref<1x256x128xf32, #tpu.memory_space<vmem>>, vector<1x256x128xf32>,
    return
  }
  func.func @transform_0(%arg0: i32) -> (i32, i32, i32) {
    %c0_i32 = arith.constant 0 : i32
    %c0_i32_0 = arith.constant 0 : i32
    %c0_i32_1 = arith.constant 0 : i32
    return %arg0, %c0_i32, %c0_i32_0 : i32, i32, i32
  }
  func.func @transform_1(%arg0: i32) -> (i32, i32) {
    %c0_i32 = arith.constant 0 : i32
    %c0_i32_0 = arith.constant 0 : i32
    %c0_i32_1 = arith.constant 0 : i32
    return %c0_i32, %c0_i32_0 : i32, i32
  }
  func.func @transform_2(%arg0: i32) -> (i32, i32) {
    %c0_i32 = arith.constant 0 : i32
    %c0_i32_0 = arith.constant 0 : i32
    %c0_i32_1 = arith.constant 0 : i32
    return %c0_i32, %c0_i32_0 : i32, i32
  }
  func.func @transform_3(%arg0: i32) -> (i32, i32) {
    %c0_i32 = arith.constant 0 : i32
    %c0_i32_0 = arith.constant 0 : i32
    %c0_i32_1 = arith.constant 0 : i32
    return %c0_i32, %c0_i32_0 : i32, i32
  }
  func.func @transform_4(%arg0: i32) -> (i32, i32) {
    %c0_i32 = arith.constant 0 : i32
    %c0_i32_0 = arith.constant 0 : i32
    %c0_i32_1 = arith.constant 0 : i32
    return %c0_i32, %c0_i32_0 : i32, i32
  }
  func.func @transform_5(%arg0: i32) -> (i32, i32, i32) {
    %c0_i32 = arith.constant 0 : i32
    %c0_i32_0 = arith.constant 0 : i32
    %c0_i32_1 = arith.constant 0 : i32
    return %arg0, %c0_i32, %c0_i32_0 : i32, i32, i32
  }
}

</mosaic_0001>

<llo_original>
// kernel: tpu_custom_call.1
$region0: #{tpu_custom_call.1}
  #allocation0 [shape = 'u32[]', space=smem, size = 0x4, offset = 0x4, fixed_abs, tag = 'smem constant byte address 0x4 - core index']
  #allocation1 [shape = 'u32[144,128]{1,0:T(1,128)}', space=vmem, size = 0x12000, scoped, tag = 'internal scratch']
  #allocation2 [shape = 'f32[18,18,128]{2,1,0:T(8,128)}', space=vmem, size = 0x36000, scoped, tag = 'scratch operand']
  %s0 = inlined_call_operand.vmem [shape: bf16[2,256,288], index: 0, kind: input, shape index: {}]
  %s1 = inlined_call_operand.vmem [shape: bf16[288,128], index: 1, kind: input, shape index: {}]
  %s2 = inlined_call_operand.vmem [shape: f32[1,128], index: 2, kind: input, shape index: {}]
  %s3 = inlined_call_operand.vmem [shape: bf16[1152,128], index: 3, kind: input, shape index: {}]
  %s4 = inlined_call_operand.vmem [shape: f32[1,128], index: 4, kind: input, shape index: {}]
  %s5 = inlined_call_operand.hbm [shape: f32[2,256,128], index: 5, kind: output, shape index: {}]
  %s6 = sld [smem:[#allocation0]]
  $region53: #{tpu_custom_call.1} parent=0
    _
  %s8 = ssub.s32 1, %s6
  %s9 = scalar_select 0, %s8, %s6
  $region1: #{tpu_custom_call.1} parent=0
    #allocation3 [shape = 'u8[262144]{0}', space=vmem, size = 0x40000, scoped, tag = 'output window, operand 0']
    #allocation4 [shape = 's32[2]{0}', space=sflag, size = 0x8, scoped, tag = 'scoped memory for tpu_custom_call.1']
    %10 = vsyncpa [#allocation4], 0
    %s11 = scalar_lea.sflag [#allocation4], 1
    %12 = vsyncpa %s11, 0
    loop: start=0, step=1, limit=4
    $region2: #{tpu_custom_call.1} parent=1 // loop_pre_header
      _
    $region3: #{tpu_custom_call.1} parent=1 // loop_header
      %s14 = sphi 0, %s18
      %p15 = scmp.ge.s32.totalorder %s14, 4
      %s24 = sphi 0, %s26
      %s27 = sphi 0, %s24
      %s28 = sphi 0, %s27
      %s44 = sphi 0, %s28
      %s48 = sphi 0, %s48
      %s50 = sphi 0, %s48
      %s51 = sphi 0, %s50
      %s65 = sphi 0, %s51
      %s69 = sphi 0, %s69
      %s71 = sphi 0, %s69
      %s72 = sphi 0, %s71
      %s86 = sphi 0, %s72
      %s90 = sphi 0, %s90
      %s92 = sphi 0, %s90
      %s93 = sphi 0, %s92
      %s107 = sphi 0, %s93
      %s111 = sphi 0, %s111
      %s113 = sphi 0, %s111
      %s114 = sphi 0, %s113
      %s128 = sphi 0, %s114
      %s134 = sphi 0, %s136
      %s137 = sphi 0, %s134
      %s138 = sphi 0, %s137
      %s154 = sphi 0, %s138
    $region4: #{tpu_custom_call.1} parent=1 // loop_header_branch
      %17 = sbr.rel (%p15) target = $region8
    $region5: #{tpu_custom_call.1} parent=1 // loop_body
      %s19 = ssub.s32 %s14, 1
      %s20 = ssub.s32 %s14, 2
      %s21 = sadd.s32 %s14, 1
      %s22 = ssub.s32 %s14, %s21
      %p23 = scmp.eq.s32.totalorder %s22, 0
      %s25 = sadd.s32 %s24, 1
      %s26 = scalar_select %p23, %s24, %s25
      %p29 = pneg %p23
      %p30 = scmp.eq.s32.totalorder %s14, 1
      %p31 = por %p29, %p30
      %p32 = scmp.ne.s32.totalorder %s24, %s27
      %p33 = scmp.eq.s32.totalorder %s14, 0
      %p34 = por %p32, %p33
      %p35 = scmp.ne.s32.totalorder %s24, %s27
      %p36 = scmp.eq.s32.totalorder %s19, 1
      %p37 = por %p35, %p36
      %p38 = scmp.ne.s32.totalorder %s27, %s28
      %p39 = scmp.eq.s32.totalorder %s19, 0
      %p40 = por %p38, %p39
      %p41 = scmp.ne.s32.totalorder %s27, %s28
      %p42 = scmp.eq.s32.totalorder %s20, 1
      %p43 = por %p41, %p42
      %p45 = scmp.ne.s32.totalorder %s28, %s44
      %p46 = scmp.eq.s32.totalorder %s20, 0
      %p47 = por %p45, %p46
      %s49 = sadd.s32 %s48, 1
      %p52 = scmp.eq.s32.totalorder %s14, 1
      %p53 = scmp.ne.s32.totalorder %s48, %s50
      %p54 = scmp.eq.s32.totalorder %s14, 0
      %p55 = por %p53, %p54
      %p56 = scmp.ne.s32.totalorder %s48, %s50
      %p57 = scmp.eq.s32.totalorder %s19, 1
      %p58 = por %p56, %p57
      %p59 = scmp.ne.s32.totalorder %s50, %s51
      %p60 = scmp.eq.s32.totalorder %s19, 0
      %p61 = por %p59, %p60
      %p62 = scmp.ne.s32.totalorder %s50, %s51
      %p63 = scmp.eq.s32.totalorder %s20, 1
      %p64 = por %p62, %p63
      %p66 = scmp.ne.s32.totalorder %s51, %s65
      %p67 = scmp.eq.s32.totalorder %s20, 0
      %p68 = por %p66, %p67
      %s70 = sadd.s32 %s69, 1
      %p73 = scmp.eq.s32.totalorder %s14, 1
      %p74 = scmp.ne.s32.totalorder %s69, %s71
      %p75 = scmp.eq.s32.totalorder %s14, 0
      %p76 = por %p74, %p75
      %p77 = scmp.ne.s32.totalorder %s69, %s71
      %p78 = scmp.eq.s32.totalorder %s19, 1
      %p79 = por %p77, %p78
      %p80 = scmp.ne.s32.totalorder %s71, %s72
      %p81 = scmp.eq.s32.totalorder %s19, 0
      %p82 = por %p80, %p81
      %p83 = scmp.ne.s32.totalorder %s71, %s72
      %p84 = scmp.eq.s32.totalorder %s20, 1
      %p85 = por %p83, %p84
      %p87 = scmp.ne.s32.totalorder %s72, %s86
      %p88 = scmp.eq.s32.totalorder %s20, 0
      %p89 = por %p87, %p88
      %s91 = sadd.s32 %s90, 1
      %p94 = scmp.eq.s32.totalorder %s14, 1
      %p95 = scmp.ne.s32.totalorder %s90, %s92
      %p96 = scmp.eq.s32.totalorder %s14, 0
      %p97 = por %p95, %p96
      %p98 = scmp.ne.s32.totalorder %s90, %s92
      %p99 = scmp.eq.s32.totalorder %s19, 1
      %p100 = por %p98, %p99
      %p101 = scmp.ne.s32.totalorder %s92, %s93
      %p102 = scmp.eq.s32.totalorder %s19, 0
      %p103 = por %p101, %p102
      %p104 = scmp.ne.s32.totalorder %s92, %s93
      %p105 = scmp.eq.s32.totalorder %s20, 1
      %p106 = por %p104, %p105
      %p108 = scmp.ne.s32.totalorder %s93, %s107
      %p109 = scmp.eq.s32.totalorder %s20, 0
      %p110 = por %p108, %p109
      %s112 = sadd.s32 %s111, 1
      %p115 = scmp.eq.s32.totalorder %s14, 1
      %p116 = scmp.ne.s32.totalorder %s111, %s113
      %p117 = scmp.eq.s32.totalorder %s14, 0
      %p118 = por %p116, %p117
      %p119 = scmp.ne.s32.totalorder %s111, %s113
      %p120 = scmp.eq.s32.totalorder %s19, 1
      %p121 = por %p119, %p120
      %p122 = scmp.ne.s32.totalorder %s113, %s114
      %p123 = scmp.eq.s32.totalorder %s19, 0
      %p124 = por %p122, %p123
      %p125 = scmp.ne.s32.totalorder %s113, %s114
      %p126 = scmp.eq.s32.totalorder %s20, 1
      %p127 = por %p125, %p126
      %p129 = scmp.ne.s32.totalorder %s114, %s128
      %p130 = scmp.eq.s32.totalorder %s20, 0
      %p131 = por %p129, %p130
      %s132 = ssub.s32 %s14, %s21
      %p133 = scmp.eq.s32.totalorder %s132, 0
      %s135 = sadd.s32 %s134, 1
      %s136 = scalar_select %p133, %s134, %s135
      %p139 = pneg %p133
      %p140 = scmp.eq.s32.totalorder %s14, 1
      %p141 = por %p139, %p140
      %p142 = scmp.ne.s32.totalorder %s134, %s137
      %p143 = scmp.eq.s32.totalorder %s14, 0
      %p144 = por %p142, %p143
      %p145 = scmp.ne.s32.totalorder %s134, %s137
      %p146 = scmp.eq.s32.totalorder %s19, 1
      %p147 = por %p145, %p146
      %p148 = scmp.ne.s32.totalorder %s137, %s138
      %p149 = scmp.eq.s32.totalorder %s19, 0
      %p150 = por %p148, %p149
      %p151 = scmp.ne.s32.totalorder %s137, %s138
      %p152 = scmp.eq.s32.totalorder %s20, 1
      %p153 = por %p151, %p152
      %p155 = scmp.ne.s32.totalorder %s138, %s154
      %p156 = scmp.eq.s32.totalorder %s20, 0
      %p157 = por %p155, %p156
      %p158 = scmp.le.s32.totalorder 1, %s14
      %p159 = scmp.lt.s32.totalorder %s14, 3
      %p160 = pnand %p158, %p159
      %p161 = pneg %p160
      // Predicated region
      $region9: #{tpu_custom_call.1} parent=5 // pred_check
        _
      $region10: #{tpu_custom_call.1} parent=5 // pred_check_branch
        %163 = sbr.rel (%p160) target = $region12
      $region11: #{tpu_custom_call.1} parent=5 // pred_region
        %s164 = ssub.s32 %s14, 1
        // Predicated region
        $region13: #{tpu_custom_call.1} parent=11 // pred_check
          %p165 = pneg %p61
        $region14: #{tpu_custom_call.1} parent=11 // pred_check_branch
          %167 = sbr.rel (%p165) target = $region16
        $region15: #{tpu_custom_call.1} parent=11 // pred_region
          _
        $region16: #{tpu_custom_call.1} parent=11 // pred_fallthru
          _
        // Predicated region
        $region17: #{tpu_custom_call.1} parent=11 // pred_check
          %p168 = pneg %p82
        $region18: #{tpu_custom_call.1} parent=11 // pred_check_branch
          %170 = sbr.rel (%p168) target = $region20
        $region19: #{tpu_custom_call.1} parent=11 // pred_region
          _
        $region20: #{tpu_custom_call.1} parent=11 // pred_fallthru
          _
        // Predicated region
        $region21: #{tpu_custom_call.1} parent=11 // pred_check
          %p171 = pneg %p103
        $region22: #{tpu_custom_call.1} parent=11 // pred_check_branch
          %173 = sbr.rel (%p171) target = $region24
        $region23: #{tpu_custom_call.1} parent=11 // pred_region
          _
        $region24: #{tpu_custom_call.1} parent=11 // pred_fallthru
          _
        // Predicated region
        $region25: #{tpu_custom_call.1} parent=11 // pred_check
          %p174 = pneg %p124
        $region26: #{tpu_custom_call.1} parent=11 // pred_check_branch
          %176 = sbr.rel (%p174) target = $region28
        $region27: #{tpu_custom_call.1} parent=11 // pred_region
          _
        $region28: #{tpu_custom_call.1} parent=11 // pred_fallthru
          _
      $region12: #{tpu_custom_call.1} parent=5 // pred_fallthru
        _
      %p177 = scmp.lt.s32.totalorder %s14, 2
      // Predicated region
      $region29: #{tpu_custom_call.1} parent=5 // pred_check
        %p178 = pneg %p177
      $region30: #{tpu_custom_call.1} parent=5 // pred_check_branch
        %180 = sbr.rel (%p178) target = $region32
      $region31: #{tpu_custom_call.1} parent=5 // pred_region
        // Predicated region
        $region33: #{tpu_custom_call.1} parent=31 // pred_check
          %p181 = pneg %p34
        $region34: #{tpu_custom_call.1} parent=31 // pred_check_branch
          %183 = sbr.rel (%p181) target = $region36
        $region35: #{tpu_custom_call.1} parent=31 // pred_region
          %p184 = scmp.lt.s32.totalorder %s14, 1
          %s185 = scalar_select %p184, %s14, 1
          %s186 = smul.addr %s185, 96
          %s187 = smul.addr %s186, 4
          %s188 = scalar_lea.vmem %s0, %s187
        $region36: #{tpu_custom_call.1} parent=31 // pred_fallthru
          _
      $region32: #{tpu_custom_call.1} parent=5 // pred_fallthru
        _
      %p189 = scmp.le.s32.totalorder 1, %s14
      %p190 = scmp.lt.s32.totalorder %s14, 3
      %p191 = pnand %p189, %p190
      %p192 = pneg %p191
      // Predicated region
      $region37: #{tpu_custom_call.1} parent=5 // pred_check
        _
      $region38: #{tpu_custom_call.1} parent=5 // pred_check_branch
        %194 = sbr.rel (%p191) target = $region40
      $region39: #{tpu_custom_call.1} parent=5 // pred_region
        %s195 = ssub.s32 %s14, 1
        %p196 = scmp.lt.s32.totalorder %s19, 1
        %s197 = scalar_select %p196, %s19, 1
        %s198 = smul.addr %s197, 96
        %s199 = smul.addr %s198, 4
        %s200 = scalar_lea.vmem %s0, %s199
        %p201 = pneg %p40
        %p202 = pneg %p37
        %p203 = pneg %p61
        %p204 = pneg %p58
        %p205 = pneg %p82
        %p206 = pneg %p79
        %p207 = pneg %p103
        %p208 = pneg %p100
        %p209 = pneg %p124
        %p210 = pneg %p121
        %p211 = pneg %p150
        %p212 = pneg %p147
        %s213 = sand.u32 %s137, 1
        %s214 = scalar_lea.sflag [#allocation4], %s213
        %s215 = sand.u32 %s137, 1
        %s216 = smul.addr %s215, 256
        %s217 = scalar_lea.vmem [#allocation3], %s216
        %p218 = scmp.lt.s32.totalorder %s19, 1
        %s219 = scalar_select %p218, %s19, 1
        %s220 = smul.addr %s219, 96
        %s221 = smul.addr %s220, 4
        %s222 = scalar_lea.vmem %s0, %s221
        %v224 = vld [vmem:[%s222] sm:$0xff]
        %v225 = vld [vmem:[%s222 + $0x8] sm:$0xf]
        %v226 = vld [vmem:[%s222 + $0xc] sm:$0xff]
        %v227 = vld [vmem:[%s222 + $0x14] sm:$0xf]
        %v228 = vld [vmem:[%s222 + $0x18] sm:$0xff]
        %v229 = vld [vmem:[%s222 + $0x20] sm:$0xf]
        %v230 = vld [vmem:[%s222 + $0x24] sm:$0xff]
        %v231 = vld [vmem:[%s222 + $0x2c] sm:$0xf]
        %v232 = vld [vmem:[%s222 + $0x30] sm:$0xff]
        %v233 = vld [vmem:[%s222 + $0x38] sm:$0xf]
        %v234 = vld [vmem:[%s222 + $0x3c] sm:$0xff]
        %v235 = vld [vmem:[%s222 + $0x44] sm:$0xf]
        %v236 = vld [vmem:[%s222 + $0x48] sm:$0xff]
        %v237 = vld [vmem:[%s222 + $0x50] sm:$0xf]
        %v238 = vld [vmem:[%s222 + $0x54] sm:$0xff]
        %v239 = vld [vmem:[%s222 + $0x5c] sm:$0xf]
        %v240 = vld [vmem:[%s222 + $0x60] sm:$0xff]
        %v241 = vld [vmem:[%s222 + $0x68] sm:$0xf]
        %v242 = vld [vmem:[%s222 + $0x6c] sm:$0xff]
        %v243 = vld [vmem:[%s222 + $0x74] sm:$0xf]
        %v244 = vld [vmem:[%s222 + $0x78] sm:$0xff]
        %v245 = vld [vmem:[%s222 + $0x80] sm:$0xf]
        %v246 = vld [vmem:[%s222 + $0x84] sm:$0xff]
        %v247 = vld [vmem:[%s222 + $0x8c] sm:$0xf]
        %v248 = vld [vmem:[%s222 + $0x90] sm:$0xff]
        %v249 = vld [vmem:[%s222 + $0x98] sm:$0xf]
        %v250 = vld [vmem:[%s222 + $0x9c] sm:$0xff]
        %v251 = vld [vmem:[%s222 + $0xa4] sm:$0xf]
        %v252 = vld [vmem:[%s222 + $0xa8] sm:$0xff]
        %v253 = vld [vmem:[%s222 + $0xb0] sm:$0xf]
        %v254 = vld [vmem:[%s222 + $0xb4] sm:$0xff]
        %v255 = vld [vmem:[%s222 + $0xbc] sm:$0xf]
        %v256 = vld [vmem:[%s222 + $0xc0] sm:$0xff]
        %v257 = vld [vmem:[%s222 + $0xc8] sm:$0xf]
        %v258 = vld [vmem:[%s222 + $0xcc] sm:$0xff]
        %v259 = vld [vmem:[%s222 + $0xd4] sm:$0xf]
        %v260 = vld [vmem:[%s222 + $0xd8] sm:$0xff]
        %v261 = vld [vmem:[%s222 + $0xe0] sm:$0xf]
        %v262 = vld [vmem:[%s222 + $0xe4] sm:$0xff]
        %v263 = vld [vmem:[%s222 + $0xec] sm:$0xf]
        %v264 = vld [vmem:[%s222 + $0xf0] sm:$0xff]
        %v265 = vld [vmem:[%s222 + $0xf8] sm:$0xf]
        %v266 = vld [vmem:[%s222 + $0xfc] sm:$0xff]
        %v267 = vld [vmem:[%s222 + $0x104] sm:$0xf]
        %v268 = vld [vmem:[%s222 + $0x108] sm:$0xff]
        %v269 = vld [vmem:[%s222 + $0x110] sm:$0xf]
        %v270 = vld [vmem:[%s222 + $0x114] sm:$0xff]
        %v271 = vld [vmem:[%s222 + $0x11c] sm:$0xf]
        %v272 = vld [vmem:[%s222 + $0x120] sm:$0xff]
        %v273 = vld [vmem:[%s222 + $0x128] sm:$0xf]
        %v274 = vld [vmem:[%s222 + $0x12c] sm:$0xff]
        %v275 = vld [vmem:[%s222 + $0x134] sm:$0xf]
        %v276 = vld [vmem:[%s222 + $0x138] sm:$0xff]
        %v277 = vld [vmem:[%s222 + $0x140] sm:$0xf]
        %v278 = vld [vmem:[%s222 + $0x144] sm:$0xff]
        %v279 = vld [vmem:[%s222 + $0x14c] sm:$0xf]
        %v280 = vld [vmem:[%s222 + $0x150] sm:$0xff]
        %v281 = vld [vmem:[%s222 + $0x158] sm:$0xf]
        %v282 = vld [vmem:[%s222 + $0x15c] sm:$0xff]
        %v283 = vld [vmem:[%s222 + $0x164] sm:$0xf]
        %v284 = vld [vmem:[%s222 + $0x168] sm:$0xff]
        %v285 = vld [vmem:[%s222 + $0x170] sm:$0xf]
        %v286 = vld [vmem:[%s222 + $0x174] sm:$0xff]
        %v287 = vld [vmem:[%s222 + $0x17c] sm:$0xf]
        %v288 = vld [vmem:[%s1] sm:$0xf]
        %v289 = vld [vmem:[%s1 + $0x4] sm:$0xf]
        %v290 = vld [vmem:[%s1 + $0x8] sm:$0xf]
        %v291 = vld [vmem:[%s1 + $0xc] sm:$0xf]
        %v292 = vld [vmem:[%s1 + $0x10] sm:$0xf]
        %v293 = vld [vmem:[%s1 + $0x14] sm:$0xf]
        %v294 = vld [vmem:[%s1 + $0x18] sm:$0xf]
        %v295 = vld [vmem:[%s1 + $0x1c] sm:$0xf]
        %v296 = vld [vmem:[%s1 + $0x20] sm:$0xf]
        %v297 = vld [vmem:[%s1 + $0x24] sm:$0xf]
        %v298 = vld [vmem:[%s1 + $0x28] sm:$0xf]
        %v299 = vld [vmem:[%s1 + $0x2c] sm:$0xf]
        %v300 = vld [vmem:[%s1 + $0x30] sm:$0xf]
        %v301 = vld [vmem:[%s1 + $0x34] sm:$0xf]
        %v302 = vld [vmem:[%s1 + $0x38] sm:$0xf]
        %v303 = vld [vmem:[%s1 + $0x3c] sm:$0xf]
        %v304 = vld [vmem:[%s1 + $0x40] sm:$0xf]
        %v305 = vld [vmem:[%s1 + $0x44] sm:$0xf]
        %v306 = vld [vmem:[%s1 + $0x48] sm:$0xf]
        %v307 = vld [vmem:[%s1 + $0x4c] sm:$0xf]
        %v308 = vld [vmem:[%s1 + $0x50] sm:$0xf]
        %v309 = vld [vmem:[%s1 + $0x54] sm:$0xf]
        %v310 = vld [vmem:[%s1 + $0x58] sm:$0xf]
        %v311 = vld [vmem:[%s1 + $0x5c] sm:$0xf]
        %v312 = vld [vmem:[%s1 + $0x60] sm:$0xf]
        %v313 = vld [vmem:[%s1 + $0x64] sm:$0xf]
        %v314 = vld [vmem:[%s1 + $0x68] sm:$0xf]
        %v315 = vld [vmem:[%s1 + $0x6c] sm:$0xf]
        %v316 = vld [vmem:[%s1 + $0x70] sm:$0xf]
        %v317 = vld [vmem:[%s1 + $0x74] sm:$0xf]
        %v318 = vld [vmem:[%s1 + $0x78] sm:$0xf]
        %v319 = vld [vmem:[%s1 + $0x7c] sm:$0xf]
        %v320 = vld [vmem:[%s1 + $0x80] sm:$0xf]
        %v321 = vld [vmem:[%s1 + $0x84] sm:$0xf]
        %v322 = vld [vmem:[%s1 + $0x88] sm:$0xf]
        %v323 = vld [vmem:[%s1 + $0x8c] sm:$0xf]
        %v324 = vld [vmem:[%s2] sm:$0x1]
        %v326 = vlaneseq
        %v327 = vshrl.u32 %v326, 7
        %v328 = vsub.s32 0, %v327
        %v329 = vrot.slane %v324, %v328
        %v395 = vunpack.c.l.b16 %v224
        %v396 = vunpack.c.h.b16 %v224
        %v397 = vunpack.c.l.b16 %v225
        %v398 = vunpack.c.l.b16 %v226
        %v399 = vunpack.c.h.b16 %v226
        %v400 = vunpack.c.l.b16 %v227
        %v401 = vunpack.c.l.b16 %v228
        %v402 = vunpack.c.h.b16 %v228
        %v403 = vunpack.c.l.b16 %v229
        %v404 = vunpack.c.l.b16 %v230
        %v405 = vunpack.c.h.b16 %v230
        %v406 = vunpack.c.l.b16 %v231
        %v407 = vunpack.c.l.b16 %v232
        %v408 = vunpack.c.h.b16 %v232
        %v409 = vunpack.c.l.b16 %v233
        %v410 = vunpack.c.l.b16 %v234
        %v411 = vunpack.c.h.b16 %v234
        %v412 = vunpack.c.l.b16 %v235
        %v413 = vunpack.c.l.b16 %v236
        %v414 = vunpack.c.h.b16 %v236
        %v415 = vunpack.c.l.b16 %v237
        %v416 = vunpack.c.l.b16 %v238
        %v417 = vunpack.c.h.b16 %v238
        %v418 = vunpack.c.l.b16 %v239
        %v419 = vunpack.c.l.b16 %v240
        %v420 = vunpack.c.h.b16 %v240
        %v421 = vunpack.c.l.b16 %v241
        %v422 = vunpack.c.l.b16 %v242
        %v423 = vunpack.c.h.b16 %v242
        %v424 = vunpack.c.l.b16 %v243
        %v425 = vunpack.c.l.b16 %v244
        %v426 = vunpack.c.h.b16 %v244
        %v427 = vunpack.c.l.b16 %v245
        %v428 = vunpack.c.l.b16 %v246
        %v429 = vunpack.c.h.b16 %v246
        %v430 = vunpack.c.l.b16 %v247
        %v431 = vunpack.c.l.b16 %v248
        %v432 = vunpack.c.h.b16 %v248
        %v433 = vunpack.c.l.b16 %v249
        %v434 = vunpack.c.l.b16 %v250
        %v435 = vunpack.c.h.b16 %v250
        %v436 = vunpack.c.l.b16 %v251
        %v437 = vunpack.c.l.b16 %v252
        %v438 = vunpack.c.h.b16 %v252
        %v439 = vunpack.c.l.b16 %v253
        %v440 = vunpack.c.l.b16 %v254
        %v441 = vunpack.c.h.b16 %v254
        %v442 = vunpack.c.l.b16 %v255
        %v443 = vunpack.c.l.b16 %v256
        %v444 = vunpack.c.h.b16 %v256
        %v445 = vunpack.c.l.b16 %v257
        %v446 = vunpack.c.l.b16 %v258
        %v447 = vunpack.c.h.b16 %v258
        %v448 = vunpack.c.l.b16 %v259
        %v449 = vunpack.c.l.b16 %v260
        %v450 = vunpack.c.h.b16 %v260
        %v451 = vunpack.c.l.b16 %v261
        %v452 = vunpack.c.l.b16 %v262
        %v453 = vunpack.c.h.b16 %v262
        %v454 = vunpack.c.l.b16 %v263
        %v455 = vunpack.c.l.b16 %v264
        %v456 = vunpack.c.h.b16 %v264
        %v457 = vunpack.c.l.b16 %v265
        %v458 = vunpack.c.l.b16 %v266
        %v459 = vunpack.c.h.b16 %v266
        %v460 = vunpack.c.l.b16 %v267
        %v461 = vunpack.c.l.b16 %v268
        %v462 = vunpack.c.h.b16 %v268
        %v463 = vunpack.c.l.b16 %v269
        %v464 = vunpack.c.l.b16 %v270
        %v465 = vunpack.c.h.b16 %v270
        %v466 = vunpack.c.l.b16 %v271
        %v467 = vunpack.c.l.b16 %v272
        %v468 = vunpack.c.h.b16 %v272
        %v469 = vunpack.c.l.b16 %v273
        %v470 = vunpack.c.l.b16 %v274
        %v471 = vunpack.c.h.b16 %v274
        %v472 = vunpack.c.l.b16 %v275
        %v473 = vunpack.c.l.b16 %v276
        %v474 = vunpack.c.h.b16 %v276
        %v475 = vunpack.c.l.b16 %v277
        %v476 = vunpack.c.l.b16 %v278
        %v477 = vunpack.c.h.b16 %v278
        %v478 = vunpack.c.l.b16 %v279
        %v479 = vunpack.c.l.b16 %v280
        %v480 = vunpack.c.h.b16 %v280
        %v481 = vunpack.c.l.b16 %v281
        %v482 = vunpack.c.l.b16 %v282
        %v483 = vunpack.c.h.b16 %v282
        %v484 = vunpack.c.l.b16 %v283
        %v485 = vunpack.c.l.b16 %v284
        %v486 = vunpack.c.h.b16 %v284
        %v487 = vunpack.c.l.b16 %v285
        %v488 = vunpack.c.l.b16 %v286
        %v489 = vunpack.c.h.b16 %v286
        %v490 = vunpack.c.l.b16 %v287
        %v491 = vpack.c.b16 %v398, %v395
        %v492 = vpack.c.b16 %v399, %v396
        %v493 = vpack.c.b16 %v400, %v397
        %v494 = vpack.c.b16 %v404, %v401
        %v495 = vpack.c.b16 %v405, %v402
        %v496 = vpack.c.b16 %v406, %v403
        %v497 = vpack.c.b16 %v410, %v407
        %v498 = vpack.c.b16 %v411, %v408
        %v499 = vpack.c.b16 %v412, %v409
        %v500 = vpack.c.b16 %v416, %v413
        %v501 = vpack.c.b16 %v417, %v414
        %v502 = vpack.c.b16 %v418, %v415
        %v503 = vpack.c.b16 %v422, %v419
        %v504 = vpack.c.b16 %v423, %v420
        %v505 = vpack.c.b16 %v424, %v421
        %v506 = vpack.c.b16 %v428, %v425
        %v507 = vpack.c.b16 %v429, %v426
        %v508 = vpack.c.b16 %v430, %v427
        %v509 = vpack.c.b16 %v434, %v431
        %v510 = vpack.c.b16 %v435, %v432
        %v511 = vpack.c.b16 %v436, %v433
        %v512 = vpack.c.b16 %v440, %v437
        %v513 = vpack.c.b16 %v441, %v438
        %v514 = vpack.c.b16 %v442, %v439
        %v515 = vpack.c.b16 %v446, %v443
        %v516 = vpack.c.b16 %v447, %v444
        %v517 = vpack.c.b16 %v448, %v445
        %v518 = vpack.c.b16 %v452, %v449
        %v519 = vpack.c.b16 %v453, %v450
        %v520 = vpack.c.b16 %v454, %v451
        %v521 = vpack.c.b16 %v458, %v455
        %v522 = vpack.c.b16 %v459, %v456
        %v523 = vpack.c.b16 %v460, %v457
        %v524 = vpack.c.b16 %v464, %v461
        %v525 = vpack.c.b16 %v465, %v462
        %v526 = vpack.c.b16 %v466, %v463
        %v527 = vpack.c.b16 %v470, %v467
        %v528 = vpack.c.b16 %v471, %v468
        %v529 = vpack.c.b16 %v472, %v469
        %v530 = vpack.c.b16 %v476, %v473
        %v531 = vpack.c.b16 %v477, %v474
        %v532 = vpack.c.b16 %v478, %v475
        %v533 = vpack.c.b16 %v482, %v479
        %v534 = vpack.c.b16 %v483, %v480
        %v535 = vpack.c.b16 %v484, %v481
        %v536 = vpack.c.b16 %v488, %v485
        %v537 = vpack.c.b16 %v489, %v486
        %v538 = vpack.c.b16 %v490, %v487
        %v607 = vunpack.c.l.b16 %v288
        %v608 = vunpack.c.l.b16 %v289
        %v609 = vunpack.c.l.b16 %v290
        %v610 = vunpack.c.l.b16 %v291
        %v611 = vunpack.c.l.b16 %v292
        %v612 = vunpack.c.l.b16 %v293
        %v613 = vunpack.c.l.b16 %v294
        %v614 = vunpack.c.l.b16 %v295
        %v615 = vunpack.c.l.b16 %v296
        %v616 = vunpack.c.l.b16 %v297
        %v617 = vunpack.c.l.b16 %v298
        %v618 = vunpack.c.l.b16 %v299
        %v619 = vunpack.c.l.b16 %v300
        %v620 = vunpack.c.l.b16 %v301
        %v621 = vunpack.c.l.b16 %v302
        %v622 = vunpack.c.l.b16 %v303
        %v623 = vunpack.c.l.b16 %v304
        %v624 = vunpack.c.l.b16 %v305
        %v625 = vunpack.c.l.b16 %v306
        %v626 = vunpack.c.l.b16 %v307
        %v627 = vunpack.c.l.b16 %v308
        %v628 = vunpack.c.l.b16 %v309
        %v629 = vunpack.c.l.b16 %v310
        %v630 = vunpack.c.l.b16 %v311
        %v631 = vunpack.c.l.b16 %v312
        %v632 = vunpack.c.l.b16 %v313
        %v633 = vunpack.c.l.b16 %v314
        %v634 = vunpack.c.l.b16 %v315
        %v635 = vunpack.c.l.b16 %v316
        %v636 = vunpack.c.l.b16 %v317
        %v637 = vunpack.c.l.b16 %v318
        %v638 = vunpack.c.l.b16 %v319
        %v639 = vunpack.c.l.b16 %v320
        %v640 = vunpack.c.l.b16 %v321
        %v641 = vunpack.c.l.b16 %v322
        %v642 = vunpack.c.l.b16 %v323
        %v643 = vpack.c.b16 %v608, %v607
        %v644 = vpack.c.b16 %v610, %v609
        %v645 = vpack.c.b16 %v612, %v611
        %v646 = vpack.c.b16 %v614, %v613
        %v647 = vpack.c.b16 %v616, %v615
        %v648 = vpack.c.b16 %v618, %v617
        %v649 = vpack.c.b16 %v620, %v619
        %v650 = vpack.c.b16 %v622, %v621
        %v651 = vpack.c.b16 %v624, %v623
        %v652 = vpack.c.b16 %v626, %v625
        %v653 = vpack.c.b16 %v628, %v627
        %v654 = vpack.c.b16 %v630, %v629
        %v655 = vpack.c.b16 %v632, %v631
        %v656 = vpack.c.b16 %v634, %v633
        %v657 = vpack.c.b16 %v636, %v635
        %v658 = vpack.c.b16 %v638, %v637
        %v659 = vpack.c.b16 %v640, %v639
        %v660 = vpack.c.b16 %v642, %v641
        %vm679 = vcmask 261120
        %v681 = vsel %vm679, %v493, 0
        %v684 = vsel %vm679, %v496, 0
        %v687 = vsel %vm679, %v499, 0
        %v690 = vsel %vm679, %v502, 0
        %v693 = vsel %vm679, %v505, 0
        %v696 = vsel %vm679, %v508, 0
        %v699 = vsel %vm679, %v511, 0
        %v702 = vsel %vm679, %v514, 0
        %v705 = vsel %vm679, %v517, 0
        %v708 = vsel %vm679, %v520, 0
        %v711 = vsel %vm679, %v523, 0
        %v714 = vsel %vm679, %v526, 0
        %v717 = vsel %vm679, %v529, 0
        %v720 = vsel %vm679, %v532, 0
        %v723 = vsel %vm679, %v535, 0
        %v726 = vsel %vm679, %v538, 0
        %728 = vmatprep.subr.bf16.mxu0 0
        %729 = vmatpush1.bf16.msra.mxu0 %v650
        %730 = vmatprep.subr.bf16.mxu0 0
        %731 = vmatpush1.bf16.msra.mxu0 %v649
        %732 = vmatprep.subr.bf16.mxu0 0
        %733 = vmatpush1.bf16.msra.mxu0 %v648
        %734 = vmatprep.subr.bf16.mxu0 0
        %735 = vmatpush1.bf16.msra.mxu0 %v647
        %736 = vmatprep.subr.bf16.mxu0 0
        %737 = vmatpush1.bf16.msra.mxu0 %v646
        %738 = vmatprep.subr.bf16.mxu0 0
        %739 = vmatpush1.bf16.msra.mxu0 %v645
        %740 = vmatprep.subr.bf16.mxu0 0
        %741 = vmatpush1.bf16.msra.mxu0 %v644
        %742 = vmatprep.subr.bf16.mxu0 0
        %743 = vmatpush1.bf16.msra.mxu0 %v643
        %744 = vmatprep.subr.bf16.mxu0 0
        %745 = vmatpush2.bf16.msra.mxu0 %v658
        %746 = vmatprep.subr.bf16.mxu0 0
        %747 = vmatpush2.bf16.msra.mxu0 %v657
        %748 = vmatprep.subr.bf16.mxu0 0
        %749 = vmatpush2.bf16.msra.mxu0 %v656
        %750 = vmatprep.subr.bf16.mxu0 0
        %751 = vmatpush2.bf16.msra.mxu0 %v655
        %752 = vmatprep.subr.bf16.mxu0 0
        %753 = vmatpush2.bf16.msra.mxu0 %v654
        %754 = vmatprep.subr.bf16.mxu0 0
        %755 = vmatpush2.bf16.msra.mxu0 %v653
        %756 = vmatprep.subr.bf16.mxu0 0
        %757 = vmatpush2.bf16.msra.mxu0 %v652
        %758 = vmatprep.subr.bf16.mxu0 0
        %759 = vmatpush2.bf16.msra.mxu0 %v651
        %760 = vmatprep.mubr.bf16.mxu0 %v492
        %761 = vmatmul.mubr.bf16.gmra.mxu0 %v491
        %v762 = vpop.f32.mrf.mxu0
        %v763 = vadd.f32 %v329, %v762
        %v764 = vpop.f32.mrf.mxu0
        %v765 = vpop.f32.mrf.mxu0
        %v766 = vadd.f32 %v329, %v765
        %v767 = vpop.f32.mrf.mxu0
        %768 = vmatprep.mubr.bf16.mxu0 %v495
        %769 = vmatmul.mubr.bf16.gmra.mxu0 %v494
        %v770 = vpop.f32.mrf.mxu0
        %v771 = vadd.f32 %v329, %v770
        %v772 = vpop.f32.mrf.mxu0
        %v773 = vpop.f32.mrf.mxu0
        %v774 = vadd.f32 %v329, %v773
        %v775 = vpop.f32.mrf.mxu0
        %776 = vmatprep.mubr.bf16.mxu0 %v498
        %777 = vmatmul.mubr.bf16.gmra.mxu0 %v497
        %v778 = vpop.f32.mrf.mxu0
        %v779 = vadd.f32 %v329, %v778
        %v780 = vpop.f32.mrf.mxu0
        %v781 = vpop.f32.mrf.mxu0
        %v782 = vadd.f32 %v329, %v781
        %v783 = vpop.f32.mrf.mxu0
        %784 = vmatprep.mubr.bf16.mxu0 %v501
        %785 = vmatmul.mubr.bf16.gmra.mxu0 %v500
        %v786 = vpop.f32.mrf.mxu0
        %v787 = vadd.f32 %v329, %v786
        %v788 = vpop.f32.mrf.mxu0
        %v789 = vpop.f32.mrf.mxu0
        %v790 = vadd.f32 %v329, %v789
        %v791 = vpop.f32.mrf.mxu0
        %792 = vmatprep.mubr.bf16.mxu0 %v504
        %793 = vmatmul.mubr.bf16.gmra.mxu0 %v503
        %v794 = vpop.f32.mrf.mxu0
        %v795 = vadd.f32 %v329, %v794
        %v796 = vpop.f32.mrf.mxu0
        %v797 = vpop.f32.mrf.mxu0
        %v798 = vadd.f32 %v329, %v797
        %v799 = vpop.f32.mrf.mxu0
        %800 = vmatprep.mubr.bf16.mxu0 %v507
        %801 = vmatmul.mubr.bf16.gmra.mxu0 %v506
        %v802 = vpop.f32.mrf.mxu0
        %v803 = vadd.f32 %v329, %v802
        %v804 = vpop.f32.mrf.mxu0
        %v805 = vpop.f32.mrf.mxu0
        %v806 = vadd.f32 %v329, %v805
        %v807 = vpop.f32.mrf.mxu0
        %808 = vmatprep.mubr.bf16.mxu0 %v510
        %809 = vmatmul.mubr.bf16.gmra.mxu0 %v509
        %v810 = vpop.f32.mrf.mxu0
        %v811 = vadd.f32 %v329, %v810
        %v812 = vpop.f32.mrf.mxu0
        %v813 = vpop.f32.mrf.mxu0
        %v814 = vadd.f32 %v329, %v813
        %v815 = vpop.f32.mrf.mxu0
        %816 = vmatprep.mubr.bf16.mxu0 %v513
        %817 = vmatmul.mubr.bf16.gmra.mxu0 %v512
        %v818 = vpop.f32.mrf.mxu0
        %v819 = vadd.f32 %v329, %v818
        %v820 = vpop.f32.mrf.mxu0
        %v821 = vpop.f32.mrf.mxu0
        %v822 = vadd.f32 %v329, %v821
        %v823 = vpop.f32.mrf.mxu0
        %824 = vmatprep.mubr.bf16.mxu0 %v516
        %825 = vmatmul.mubr.bf16.gmra.mxu0 %v515
        %v826 = vpop.f32.mrf.mxu0
        %v827 = vadd.f32 %v329, %v826
        %v828 = vpop.f32.mrf.mxu0
        %v829 = vpop.f32.mrf.mxu0
        %v830 = vadd.f32 %v329, %v829
        %v831 = vpop.f32.mrf.mxu0
        %832 = vmatprep.mubr.bf16.mxu0 %v519
        %833 = vmatmul.mubr.bf16.gmra.mxu0 %v518
        %v834 = vpop.f32.mrf.mxu0
        %v835 = vadd.f32 %v329, %v834
        %v836 = vpop.f32.mrf.mxu0
        %v837 = vpop.f32.mrf.mxu0
        %v838 = vadd.f32 %v329, %v837
        %v839 = vpop.f32.mrf.mxu0
        %840 = vmatprep.mubr.bf16.mxu0 %v522
        %841 = vmatmul.mubr.bf16.gmra.mxu0 %v521
        %v842 = vpop.f32.mrf.mxu0
        %v843 = vadd.f32 %v329, %v842
        %v844 = vpop.f32.mrf.mxu0
        %v845 = vpop.f32.mrf.mxu0
        %v846 = vadd.f32 %v329, %v845
        %v847 = vpop.f32.mrf.mxu0
        %848 = vmatprep.mubr.bf16.mxu0 %v525
        %849 = vmatmul.mubr.bf16.gmra.mxu0 %v524
        %v850 = vpop.f32.mrf.mxu0
        %v851 = vadd.f32 %v329, %v850
        %v852 = vpop.f32.mrf.mxu0
        %v853 = vpop.f32.mrf.mxu0
        %v854 = vadd.f32 %v329, %v853
        %v855 = vpop.f32.mrf.mxu0
        %856 = vmatprep.mubr.bf16.mxu0 %v528
        %857 = vmatmul.mubr.bf16.gmra.mxu0 %v527
        %v858 = vpop.f32.mrf.mxu0
        %v859 = vadd.f32 %v329, %v858
        %v860 = vpop.f32.mrf.mxu0
        %v861 = vpop.f32.mrf.mxu0
        %v862 = vadd.f32 %v329, %v861
        %v863 = vpop.f32.mrf.mxu0
        %864 = vmatprep.mubr.bf16.mxu0 %v531
        %865 = vmatmul.mubr.bf16.gmra.mxu0 %v530
        %v866 = vpop.f32.mrf.mxu0
        %v867 = vadd.f32 %v329, %v866
        %v868 = vpop.f32.mrf.mxu0
        %v869 = vpop.f32.mrf.mxu0
        %v870 = vadd.f32 %v329, %v869
        %v871 = vpop.f32.mrf.mxu0
        %872 = vmatprep.mubr.bf16.mxu0 %v534
        %873 = vmatmul.mubr.bf16.gmra.mxu0 %v533
        %v874 = vpop.f32.mrf.mxu0
        %v875 = vadd.f32 %v329, %v874
        %v876 = vpop.f32.mrf.mxu0
        %v877 = vpop.f32.mrf.mxu0
        %v878 = vadd.f32 %v329, %v877
        %v879 = vpop.f32.mrf.mxu0
        %880 = vmatprep.mubr.bf16.mxu0 %v537
        %881 = vmatmul.mubr.bf16.gmra.mxu0 %v536
        %v882 = vpop.f32.mrf.mxu0
        %v883 = vadd.f32 %v329, %v882
        %v884 = vpop.f32.mrf.mxu0
        %v885 = vpop.f32.mrf.mxu0
        %v886 = vadd.f32 %v329, %v885
        %v887 = vpop.f32.mrf.mxu0
        %888 = vdwg.mxu0
        %889 = vmatprep.subr.bf16.mxu0 0
        %890 = vmatpush1.bf16.msra.mxu0 0
        %891 = vmatprep.subr.bf16.mxu0 0
        %892 = vmatpush1.bf16.msra.mxu0 0
        %893 = vmatprep.subr.bf16.mxu0 0
        %894 = vmatpush1.bf16.msra.mxu0 0
        %895 = vmatprep.subr.bf16.mxu0 0
        %896 = vmatpush1.bf16.msra.mxu0 0
        %897 = vmatprep.subr.bf16.mxu0 0
        %898 = vmatpush1.bf16.msra.mxu0 0
        %899 = vmatprep.subr.bf16.mxu0 0
        %900 = vmatpush1.bf16.msra.mxu0 0
        %901 = vmatprep.subr.bf16.mxu0 0
        %902 = vmatpush1.bf16.msra.mxu0 %v660
        %903 = vmatprep.subr.bf16.mxu0 0
        %904 = vmatpush1.bf16.msra.mxu0 %v659
        %905 = vmatprep.subr.bf16.mxu0 0
        %906 = vmatpush2.bf16.msra.mxu0 0
        %907 = vmatprep.subr.bf16.mxu0 0
        %908 = vmatpush2.bf16.msra.mxu0 0
        %909 = vmatprep.subr.bf16.mxu0 0
        %910 = vmatpush2.bf16.msra.mxu0 0
        %911 = vmatprep.subr.bf16.mxu0 0
        %912 = vmatpush2.bf16.msra.mxu0 0
        %913 = vmatprep.subr.bf16.mxu0 0
        %914 = vmatpush2.bf16.msra.mxu0 0
        %915 = vmatprep.subr.bf16.mxu0 0
        %916 = vmatpush2.bf16.msra.mxu0 0
        %917 = vmatprep.subr.bf16.mxu0 0
        %918 = vmatpush2.bf16.msra.mxu0 0
        %919 = vmatprep.subr.bf16.mxu0 0
        %920 = vmatpush2.bf16.msra.mxu0 0
        %921 = vmatprep.mubr.bf16.mxu0 0
        %922 = vmatmul.mubr.bf16.gmra.mxu0 %v681
        %v923 = vpop.f32.mrf.mxu0
        %v924 = vadd.f32 %v763, %v923
        %v925 = vpop.f32.mrf.mxu0
        %v926 = vpop.f32.mrf.mxu0
        %v927 = vadd.f32 %v766, %v926
        %v928 = vpop.f32.mrf.mxu0
        %929 = vmatprep.mubr.bf16.mxu0 0
        %930 = vmatmul.mubr.bf16.gmra.mxu0 %v684
        %v931 = vpop.f32.mrf.mxu0
        %v932 = vadd.f32 %v771, %v931
        %v933 = vpop.f32.mrf.mxu0
        %v934 = vpop.f32.mrf.mxu0
        %v935 = vadd.f32 %v774, %v934
        %v936 = vpop.f32.mrf.mxu0
        %937 = vmatprep.mubr.bf16.mxu0 0
        %938 = vmatmul.mubr.bf16.gmra.mxu0 %v687
        %v939 = vpop.f32.mrf.mxu0
        %v940 = vadd.f32 %v779, %v939
        %v941 = vpop.f32.mrf.mxu0
        %v942 = vpop.f32.mrf.mxu0
        %v943 = vadd.f32 %v782, %v942
        %v944 = vpop.f32.mrf.mxu0
        %945 = vmatprep.mubr.bf16.mxu0 0
        %946 = vmatmul.mubr.bf16.gmra.mxu0 %v690
        %v947 = vpop.f32.mrf.mxu0
        %v948 = vadd.f32 %v787, %v947
        %v949 = vpop.f32.mrf.mxu0
        %v950 = vpop.f32.mrf.mxu0
        %v951 = vadd.f32 %v790, %v950
        %v952 = vpop.f32.mrf.mxu0
        %953 = vmatprep.mubr.bf16.mxu0 0
        %954 = vmatmul.mubr.bf16.gmra.mxu0 %v693
        %v955 = vpop.f32.mrf.mxu0
        %v956 = vadd.f32 %v795, %v955
        %v957 = vpop.f32.mrf.mxu0
        %v958 = vpop.f32.mrf.mxu0
        %v959 = vadd.f32 %v798, %v958
        %v960 = vpop.f32.mrf.mxu0
        %961 = vmatprep.mubr.bf16.mxu0 0
        %962 = vmatmul.mubr.bf16.gmra.mxu0 %v696
        %v963 = vpop.f32.mrf.mxu0
        %v964 = vadd.f32 %v803, %v963
        %v965 = vpop.f32.mrf.mxu0
        %v966 = vpop.f32.mrf.mxu0
        %v967 = vadd.f32 %v806, %v966
        %v968 = vpop.f32.mrf.mxu0
        %969 = vmatprep.mubr.bf16.mxu0 0
        %970 = vmatmul.mubr.bf16.gmra.mxu0 %v699
        %v971 = vpop.f32.mrf.mxu0
        %v972 = vadd.f32 %v811, %v971
        %v973 = vpop.f32.mrf.mxu0
        %v974 = vpop.f32.mrf.mxu0
        %v975 = vadd.f32 %v814, %v974
        %v976 = vpop.f32.mrf.mxu0
        %977 = vmatprep.mubr.bf16.mxu0 0
        %978 = vmatmul.mubr.bf16.gmra.mxu0 %v702
        %v979 = vpop.f32.mrf.mxu0
        %v980 = vadd.f32 %v819, %v979
        %v981 = vpop.f32.mrf.mxu0
        %v982 = vpop.f32.mrf.mxu0
        %v983 = vadd.f32 %v822, %v982
        %v984 = vpop.f32.mrf.mxu0
        %985 = vmatprep.mubr.bf16.mxu0 0
        %986 = vmatmul.mubr.bf16.gmra.mxu0 %v705
        %v987 = vpop.f32.mrf.mxu0
        %v988 = vadd.f32 %v827, %v987
        %v989 = vpop.f32.mrf.mxu0
        %v990 = vpop.f32.mrf.mxu0
        %v991 = vadd.f32 %v830, %v990
        %v992 = vpop.f32.mrf.mxu0
        %993 = vmatprep.mubr.bf16.mxu0 0
        %994 = vmatmul.mubr.bf16.gmra.mxu0 %v708
        %v995 = vpop.f32.mrf.mxu0
        %v996 = vadd.f32 %v835, %v995
        %v997 = vpop.f32.mrf.mxu0
        %v998 = vpop.f32.mrf.mxu0
        %v999 = vadd.f32 %v838, %v998
        %v1000 = vpop.f32.mrf.mxu0
        %1001 = vmatprep.mubr.bf16.mxu0 0
        %1002 = vmatmul.mubr.bf16.gmra.mxu0 %v711
        %v1003 = vpop.f32.mrf.mxu0
        %v1004 = vadd.f32 %v843, %v1003
        %v1005 = vpop.f32.mrf.mxu0
        %v1006 = vpop.f32.mrf.mxu0
        %v1007 = vadd.f32 %v846, %v1006
        %v1008 = vpop.f32.mrf.mxu0
        %1009 = vmatprep.mubr.bf16.mxu0 0
        %1010 = vmatmul.mubr.bf16.gmra.mxu0 %v714
        %v1011 = vpop.f32.mrf.mxu0
        %v1012 = vadd.f32 %v851, %v1011
        %v1013 = vpop.f32.mrf.mxu0
        %v1014 = vpop.f32.mrf.mxu0
        %v1015 = vadd.f32 %v854, %v1014
        %v1016 = vpop.f32.mrf.mxu0
        %1017 = vmatprep.mubr.bf16.mxu0 0
        %1018 = vmatmul.mubr.bf16.gmra.mxu0 %v717
        %v1019 = vpop.f32.mrf.mxu0
        %v1020 = vadd.f32 %v859, %v1019
        %v1021 = vpop.f32.mrf.mxu0
        %v1022 = vpop.f32.mrf.mxu0
        %v1023 = vadd.f32 %v862, %v1022
        %v1024 = vpop.f32.mrf.mxu0
        %1025 = vmatprep.mubr.bf16.mxu0 0
        %1026 = vmatmul.mubr.bf16.gmra.mxu0 %v720
        %v1027 = vpop.f32.mrf.mxu0
        %v1028 = vadd.f32 %v867, %v1027
        %v1029 = vpop.f32.mrf.mxu0
        %v1030 = vpop.f32.mrf.mxu0
        %v1031 = vadd.f32 %v870, %v1030
        %v1032 = vpop.f32.mrf.mxu0
        %1033 = vmatprep.mubr.bf16.mxu0 0
        %1034 = vmatmul.mubr.bf16.gmra.mxu0 %v723
        %v1035 = vpop.f32.mrf.mxu0
        %v1036 = vadd.f32 %v875, %v1035
        %v1037 = vpop.f32.mrf.mxu0
        %v1038 = vpop.f32.mrf.mxu0
        %v1039 = vadd.f32 %v878, %v1038
        %v1040 = vpop.f32.mrf.mxu0
        %1041 = vmatprep.mubr.bf16.mxu0 0
        %1042 = vmatmul.mubr.bf16.gmra.mxu0 %v726
        %v1043 = vpop.f32.mrf.mxu0
        %v1044 = vadd.f32 %v883, %v1043
        %v1045 = vpop.f32.mrf.mxu0
        %v1046 = vpop.f32.mrf.mxu0
        %v1047 = vadd.f32 %v886, %v1046
        %v1048 = vpop.f32.mrf.mxu0
        %1049 = vdwg.mxu0
        %v1050 = vmax.f32 %v924, 0.0
        %v1051 = vmax.f32 %v927, 0.0
        %v1052 = vmax.f32 %v932, 0.0
        %v1053 = vmax.f32 %v935, 0.0
        %v1054 = vmax.f32 %v940, 0.0
        %v1055 = vmax.f32 %v943, 0.0
        %v1056 = vmax.f32 %v948, 0.0
        %v1057 = vmax.f32 %v951, 0.0
        %v1058 = vmax.f32 %v956, 0.0
        %v1059 = vmax.f32 %v959, 0.0
        %v1060 = vmax.f32 %v964, 0.0
        %v1061 = vmax.f32 %v967, 0.0
        %v1062 = vmax.f32 %v972, 0.0
        %v1063 = vmax.f32 %v975, 0.0
        %v1064 = vmax.f32 %v980, 0.0
        %v1065 = vmax.f32 %v983, 0.0
        %v1066 = vmax.f32 %v988, 0.0
        %v1067 = vmax.f32 %v991, 0.0
        %v1068 = vmax.f32 %v996, 0.0
        %v1069 = vmax.f32 %v999, 0.0
        %v1070 = vmax.f32 %v1004, 0.0
        %v1071 = vmax.f32 %v1007, 0.0
        %v1072 = vmax.f32 %v1012, 0.0
        %v1073 = vmax.f32 %v1015, 0.0
        %v1074 = vmax.f32 %v1020, 0.0
        %v1075 = vmax.f32 %v1023, 0.0
        %v1076 = vmax.f32 %v1028, 0.0
        %v1077 = vmax.f32 %v1031, 0.0
        %v1078 = vmax.f32 %v1036, 0.0
        %v1079 = vmax.f32 %v1039, 0.0
        %v1080 = vmax.f32 %v1044, 0.0
        %v1081 = vmax.f32 %v1047, 0.0
        %1082 = vst [vmem:[#allocation2] sm:$0xff] 0.0
        %1083 = vst [vmem:[#allocation2 + $0x8] sm:$0xff] 0.0
        %1084 = vst [vmem:[#allocation2 + $0x10] sm:$0x3] 0.0
        %1085 = vst [vmem:[#allocation2 + $0x18] sm:$0xff] 0.0
        %1086 = vst [vmem:[#allocation2 + $0x20] sm:$0xff] 0.0
        %1087 = vst [vmem:[#allocation2 + $0x28] sm:$0x3] 0.0
        %1088 = vst [vmem:[#allocation2 + $0x30] sm:$0xff] 0.0
        %1089 = vst [vmem:[#allocation2 + $0x38] sm:$0xff] 0.0
        %1090 = vst [vmem:[#allocation2 + $0x40] sm:$0x3] 0.0
        %1091 = vst [vmem:[#allocation2 + $0x48] sm:$0xff] 0.0
        %1092 = vst [vmem:[#allocation2 + $0x50] sm:$0xff] 0.0
        %1093 = vst [vmem:[#allocation2 + $0x58] sm:$0x3] 0.0
        %1094 = vst [vmem:[#allocation2 + $0x60] sm:$0xff] 0.0
        %1095 = vst [vmem:[#allocation2 + $0x68] sm:$0xff] 0.0
        %1096 = vst [vmem:[#allocation2 + $0x70] sm:$0x3] 0.0
        %1097 = vst [vmem:[#allocation2 + $0x78] sm:$0xff] 0.0
        %1098 = vst [vmem:[#allocation2 + $0x80] sm:$0xff] 0.0
        %1099 = vst [vmem:[#allocation2 + $0x88] sm:$0x3] 0.0
        %1100 = vst [vmem:[#allocation2 + $0x90] sm:$0xff] 0.0
        %1101 = vst [vmem:[#allocation2 + $0x98] sm:$0xff] 0.0
        %1102 = vst [vmem:[#allocation2 + $0xa0] sm:$0x3] 0.0
        %1103 = vst [vmem:[#allocation2 + $0xa8] sm:$0xff] 0.0
        %1104 = vst [vmem:[#allocation2 + $0xb0] sm:$0xff] 0.0
        %1105 = vst [vmem:[#allocation2 + $0xb8] sm:$0x3] 0.0
        %1106 = vst [vmem:[#allocation2 + $0xc0] sm:$0xff] 0.0
        %1107 = vst [vmem:[#allocation2 + $0xc8] sm:$0xff] 0.0
        %1108 = vst [vmem:[#allocation2 + $0xd0] sm:$0x3] 0.0
        %1109 = vst [vmem:[#allocation2 + $0xd8] sm:$0xff] 0.0
        %1110 = vst [vmem:[#allocation2 + $0xe0] sm:$0xff] 0.0
        %1111 = vst [vmem:[#allocation2 + $0xe8] sm:$0x3] 0.0
        %1112 = vst [vmem:[#allocation2 + $0xf0] sm:$0xff] 0.0
        %1113 = vst [vmem:[#allocation2 + $0xf8] sm:$0xff] 0.0
        %1114 = vst [vmem:[#allocation2 + $0x100] sm:$0x3] 0.0
        %1115 = vst [vmem:[#allocation2 + $0x108] sm:$0xff] 0.0
        %1116 = vst [vmem:[#allocation2 + $0x110] sm:$0xff] 0.0
        %1117 = vst [vmem:[#allocation2 + $0x118] sm:$0x3] 0.0
        %1118 = vst [vmem:[#allocation2 + $0x120] sm:$0xff] 0.0
        %1119 = vst [vmem:[#allocation2 + $0x128] sm:$0xff] 0.0
        %1120 = vst [vmem:[#allocation2 + $0x130] sm:$0x3] 0.0
        %1121 = vst [vmem:[#allocation2 + $0x138] sm:$0xff] 0.0
        %1122 = vst [vmem:[#allocation2 + $0x140] sm:$0xff] 0.0
        %1123 = vst [vmem:[#allocation2 + $0x148] sm:$0x3] 0.0
        %1124 = vst [vmem:[#allocation2 + $0x150] sm:$0xff] 0.0
        %1125 = vst [vmem:[#allocation2 + $0x158] sm:$0xff] 0.0
        %1126 = vst [vmem:[#allocation2 + $0x160] sm:$0x3] 0.0
        %1127 = vst [vmem:[#allocation2 + $0x168] sm:$0xff] 0.0
        %1128 = vst [vmem:[#allocation2 + $0x170] sm:$0xff] 0.0
        %1129 = vst [vmem:[#allocation2 + $0x178] sm:$0x3] 0.0
        %1130 = vst [vmem:[#allocation2 + $0x180] sm:$0xff] 0.0
        %1131 = vst [vmem:[#allocation2 + $0x188] sm:$0xff] 0.0
        %1132 = vst [vmem:[#allocation2 + $0x190] sm:$0x3] 0.0
        %1133 = vst [vmem:[#allocation2 + $0x198] sm:$0xff] 0.0
        %1134 = vst [vmem:[#allocation2 + $0x1a0] sm:$0xff] 0.0
        %1135 = vst [vmem:[#allocation2 + $0x1a8] sm:$0x3] 0.0
        %s1136 = scalar_lea.vmem [#allocation2], 24
        %1137 = vst [vmem:[%s1136 + $0x1] sm:$0xff] %v1050
        %1138 = vst [vmem:[%s1136 + $0x9] sm:$0xff] %v1051
        %1139 = vst [vmem:[%s1136 + $0x19] sm:$0xff] %v1052
        %1140 = vst [vmem:[%s1136 + $0x21] sm:$0xff] %v1053
        %1141 = vst [vmem:[%s1136 + $0x31] sm:$0xff] %v1054
        %1142 = vst [vmem:[%s1136 + $0x39] sm:$0xff] %v1055
        %1143 = vst [vmem:[%s1136 + $0x49] sm:$0xff] %v1056
        %1144 = vst [vmem:[%s1136 + $0x51] sm:$0xff] %v1057
        %1145 = vst [vmem:[%s1136 + $0x61] sm:$0xff] %v1058
        %1146 = vst [vmem:[%s1136 + $0x69] sm:$0xff] %v1059
        %1147 = vst [vmem:[%s1136 + $0x79] sm:$0xff] %v1060
        %1148 = vst [vmem:[%s1136 + $0x81] sm:$0xff] %v1061
        %1149 = vst [vmem:[%s1136 + $0x91] sm:$0xff] %v1062
        %1150 = vst [vmem:[%s1136 + $0x99] sm:$0xff] %v1063
        %1151 = vst [vmem:[%s1136 + $0xa9] sm:$0xff] %v1064
        %1152 = vst [vmem:[%s1136 + $0xb1] sm:$0xff] %v1065
        %1153 = vst [vmem:[%s1136 + $0xc1] sm:$0xff] %v1066
        %1154 = vst [vmem:[%s1136 + $0xc9] sm:$0xff] %v1067
        %1155 = vst [vmem:[%s1136 + $0xd9] sm:$0xff] %v1068
        %1156 = vst [vmem:[%s1136 + $0xe1] sm:$0xff] %v1069
        %1157 = vst [vmem:[%s1136 + $0xf1] sm:$0xff] %v1070
        %1158 = vst [vmem:[%s1136 + $0xf9] sm:$0xff] %v1071
        %1159 = vst [vmem:[%s1136 + $0x109] sm:$0xff] %v1072
        %1160 = vst [vmem:[%s1136 + $0x111] sm:$0xff] %v1073
        %1161 = vst [vmem:[%s1136 + $0x121] sm:$0xff] %v1074
        %1162 = vst [vmem:[%s1136 + $0x129] sm:$0xff] %v1075
        %1163 = vst [vmem:[%s1136 + $0x139] sm:$0xff] %v1076
        %1164 = vst [vmem:[%s1136 + $0x141] sm:$0xff] %v1077
        %1165 = vst [vmem:[%s1136 + $0x151] sm:$0xff] %v1078
        %1166 = vst [vmem:[%s1136 + $0x159] sm:$0xff] %v1079
        %1167 = vst [vmem:[%s1136 + $0x169] sm:$0xff] %v1080
        %1168 = vst [vmem:[%s1136 + $0x171] sm:$0xff] %v1081
        %v1169 = vld [vmem:[#allocation2] sm:$0xff]
        %v1170 = vld [vmem:[#allocation2 + $0x8] sm:$0xff]
        %v1171 = vld [vmem:[#allocation2 + $0x18] sm:$0xff]
        %v1172 = vld [vmem:[#allocation2 + $0x20] sm:$0xff]
        %v1173 = vld [vmem:[#allocation2 + $0x30] sm:$0xff]
        %v1174 = vld [vmem:[#allocation2 + $0x38] sm:$0xff]
        %v1175 = vld [vmem:[#allocation2 + $0x48] sm:$0xff]
        %v1176 = vld [vmem:[#allocation2 + $0x50] sm:$0xff]
        %v1177 = vld [vmem:[#allocation2 + $0x60] sm:$0xff]
        %v1178 = vld [vmem:[#allocation2 + $0x68] sm:$0xff]
        %v1179 = vld [vmem:[#allocation2 + $0x78] sm:$0xff]
        %v1180 = vld [vmem:[#allocation2 + $0x80] sm:$0xff]
        %v1181 = vld [vmem:[#allocation2 + $0x90] sm:$0xff]
        %v1182 = vld [vmem:[#allocation2 + $0x98] sm:$0xff]
        %v1183 = vld [vmem:[#allocation2 + $0xa8] sm:$0xff]
        %v1184 = vld [vmem:[#allocation2 + $0xb0] sm:$0xff]
        %v1185 = vld [vmem:[#allocation2 + $0xc0] sm:$0xff]
        %v1186 = vld [vmem:[#allocation2 + $0xc8] sm:$0xff]
        %v1187 = vld [vmem:[#allocation2 + $0xd8] sm:$0xff]
        %v1188 = vld [vmem:[#allocation2 + $0xe0] sm:$0xff]
        %v1189 = vld [vmem:[#allocation2 + $0xf0] sm:$0xff]
        %v1190 = vld [vmem:[#allocation2 + $0xf8] sm:$0xff]
        %v1191 = vld [vmem:[#allocation2 + $0x108] sm:$0xff]
        %v1192 = vld [vmem:[#allocation2 + $0x110] sm:$0xff]
        %v1193 = vld [vmem:[#allocation2 + $0x120] sm:$0xff]
        %v1194 = vld [vmem:[#allocation2 + $0x128] sm:$0xff]
        %v1195 = vld [vmem:[#allocation2 + $0x138] sm:$0xff]
        %v1196 = vld [vmem:[#allocation2 + $0x140] sm:$0xff]
        %v1197 = vld [vmem:[#allocation2 + $0x150] sm:$0xff]
        %v1198 = vld [vmem:[#allocation2 + $0x158] sm:$0xff]
        %v1199 = vld [vmem:[#allocation2 + $0x168] sm:$0xff]
        %v1200 = vld [vmem:[#allocation2 + $0x170] sm:$0xff]
        %v1201 = vpack.c.bf16 %v1170, %v1169
        %v1202 = vpack.c.bf16 %v1172, %v1171
        %v1203 = vpack.c.bf16 %v1174, %v1173
        %v1204 = vpack.c.bf16 %v1176, %v1175
        %v1205 = vpack.c.bf16 %v1178, %v1177
        %v1206 = vpack.c.bf16 %v1180, %v1179
        %v1207 = vpack.c.bf16 %v1182, %v1181
        %v1208 = vpack.c.bf16 %v1184, %v1183
        %v1209 = vpack.c.bf16 %v1186, %v1185
        %v1210 = vpack.c.bf16 %v1188, %v1187
        %v1211 = vpack.c.bf16 %v1190, %v1189
        %v1212 = vpack.c.bf16 %v1192, %v1191
        %v1213 = vpack.c.bf16 %v1194, %v1193
        %v1214 = vpack.c.bf16 %v1196, %v1195
        %v1215 = vpack.c.bf16 %v1198, %v1197
        %v1216 = vpack.c.bf16 %v1200, %v1199
        %v1217 = vld [vmem:[#allocation2 + $0x1] sm:$0xff]
        %v1218 = vld [vmem:[#allocation2 + $0x9] sm:$0xff]
        %v1219 = vld [vmem:[#allocation2 + $0x19] sm:$0xff]
        %v1220 = vld [vmem:[#allocation2 + $0x21] sm:$0xff]
        %v1221 = vld [vmem:[#allocation2 + $0x31] sm:$0xff]
        %v1222 = vld [vmem:[#allocation2 + $0x39] sm:$0xff]
        %v1223 = vld [vmem:[#allocation2 + $0x49] sm:$0xff]
        %v1224 = vld [vmem:[#allocation2 + $0x51] sm:$0xff]
        %v1225 = vld [vmem:[#allocation2 + $0x61] sm:$0xff]
        %v1226 = vld [vmem:[#allocation2 + $0x69] sm:$0xff]
        %v1227 = vld [vmem:[#allocation2 + $0x79] sm:$0xff]
        %v1228 = vld [vmem:[#allocation2 + $0x81] sm:$0xff]
        %v1229 = vld [vmem:[#allocation2 + $0x91] sm:$0xff]
        %v1230 = vld [vmem:[#allocation2 + $0x99] sm:$0xff]
        %v1231 = vld [vmem:[#allocation2 + $0xa9] sm:$0xff]
        %v1232 = vld [vmem:[#allocation2 + $0xb1] sm:$0xff]
        %v1233 = vld [vmem:[#allocation2 + $0xc1] sm:$0xff]
        %v1234 = vld [vmem:[#allocation2 + $0xc9] sm:$0xff]
        %v1235 = vld [vmem:[#allocation2 + $0xd9] sm:$0xff]
        %v1236 = vld [vmem:[#allocation2 + $0xe1] sm:$0xff]
        %v1237 = vld [vmem:[#allocation2 + $0xf1] sm:$0xff]
        %v1238 = vld [vmem:[#allocation2 + $0xf9] sm:$0xff]
        %v1239 = vld [vmem:[#allocation2 + $0x109] sm:$0xff]
        %v1240 = vld [vmem:[#allocation2 + $0x111] sm:$0xff]
        %v1241 = vld [vmem:[#allocation2 + $0x121] sm:$0xff]
        %v1242 = vld [vmem:[#allocation2 + $0x129] sm:$0xff]
        %v1243 = vld [vmem:[#allocation2 + $0x139] sm:$0xff]
        %v1244 = vld [vmem:[#allocation2 + $0x141] sm:$0xff]
        %v1245 = vld [vmem:[#allocation2 + $0x151] sm:$0xff]
        %v1246 = vld [vmem:[#allocation2 + $0x159] sm:$0xff]
        %v1247 = vld [vmem:[#allocation2 + $0x169] sm:$0xff]
        %v1248 = vld [vmem:[#allocation2 + $0x171] sm:$0xff]
        %v1249 = vpack.c.bf16 %v1218, %v1217
        %v1250 = vpack.c.bf16 %v1220, %v1219
        %v1251 = vpack.c.bf16 %v1222, %v1221
        %v1252 = vpack.c.bf16 %v1224, %v1223
        %v1253 = vpack.c.bf16 %v1226, %v1225
        %v1254 = vpack.c.bf16 %v1228, %v1227
        %v1255 = vpack.c.bf16 %v1230, %v1229
        %v1256 = vpack.c.bf16 %v1232, %v1231
        %v1257 = vpack.c.bf16 %v1234, %v1233
        %v1258 = vpack.c.bf16 %v1236, %v1235
        %v1259 = vpack.c.bf16 %v1238, %v1237
        %v1260 = vpack.c.bf16 %v1240, %v1239
        %v1261 = vpack.c.bf16 %v1242, %v1241
        %v1262 = vpack.c.bf16 %v1244, %v1243
        %v1263 = vpack.c.bf16 %v1246, %v1245
        %v1264 = vpack.c.bf16 %v1248, %v1247
        %v1265 = vld [vmem:[#allocation2 + $0x2] sm:$0xff]
        %v1266 = vld [vmem:[#allocation2 + $0xa] sm:$0xff]
        %v1267 = vld [vmem:[#allocation2 + $0x1a] sm:$0xff]
        %v1268 = vld [vmem:[#allocation2 + $0x22] sm:$0xff]
        %v1269 = vld [vmem:[#allocation2 + $0x32] sm:$0xff]
        %v1270 = vld [vmem:[#allocation2 + $0x3a] sm:$0xff]
        %v1271 = vld [vmem:[#allocation2 + $0x4a] sm:$0xff]
        %v1272 = vld [vmem:[#allocation2 + $0x52] sm:$0xff]
        %v1273 = vld [vmem:[#allocation2 + $0x62] sm:$0xff]
        %v1274 = vld [vmem:[#allocation2 + $0x6a] sm:$0xff]
        %v1275 = vld [vmem:[#allocation2 + $0x7a] sm:$0xff]
        %v1276 = vld [vmem:[#allocation2 + $0x82] sm:$0xff]
        %v1277 = vld [vmem:[#allocation2 + $0x92] sm:$0xff]
        %v1278 = vld [vmem:[#allocation2 + $0x9a] sm:$0xff]
        %v1279 = vld [vmem:[#allocation2 + $0xaa] sm:$0xff]
        %v1280 = vld [vmem:[#allocation2 + $0xb2] sm:$0xff]
        %v1281 = vld [vmem:[#allocation2 + $0xc2] sm:$0xff]
        %v1282 = vld [vmem:[#allocation2 + $0xca] sm:$0xff]
        %v1283 = vld [vmem:[#allocation2 + $0xda] sm:$0xff]
        %v1284 = vld [vmem:[#allocation2 + $0xe2] sm:$0xff]
        %v1285 = vld [vmem:[#allocation2 + $0xf2] sm:$0xff]
        %v1286 = vld [vmem:[#allocation2 + $0xfa] sm:$0xff]
        %v1287 = vld [vmem:[#allocation2 + $0x10a] sm:$0xff]
        %v1288 = vld [vmem:[#allocation2 + $0x112] sm:$0xff]
        %v1289 = vld [vmem:[#allocation2 + $0x122] sm:$0xff]
        %v1290 = vld [vmem:[#allocation2 + $0x12a] sm:$0xff]
        %v1291 = vld [vmem:[#allocation2 + $0x13a] sm:$0xff]
        %v1292 = vld [vmem:[#allocation2 + $0x142] sm:$0xff]
        %v1293 = vld [vmem:[#allocation2 + $0x152] sm:$0xff]
        %v1294 = vld [vmem:[#allocation2 + $0x15a] sm:$0xff]
        %v1295 = vld [vmem:[#allocation2 + $0x16a] sm:$0xff]
        %v1296 = vld [vmem:[#allocation2 + $0x172] sm:$0xff]
        %v1297 = vpack.c.bf16 %v1266, %v1265
        %v1298 = vpack.c.bf16 %v1268, %v1267
        %v1299 = vpack.c.bf16 %v1270, %v1269
        %v1300 = vpack.c.bf16 %v1272, %v1271
        %v1301 = vpack.c.bf16 %v1274, %v1273
        %v1302 = vpack.c.bf16 %v1276, %v1275
        %v1303 = vpack.c.bf16 %v1278, %v1277
        %v1304 = vpack.c.bf16 %v1280, %v1279
        %v1305 = vpack.c.bf16 %v1282, %v1281
        %v1306 = vpack.c.bf16 %v1284, %v1283
        %v1307 = vpack.c.bf16 %v1286, %v1285
        %v1308 = vpack.c.bf16 %v1288, %v1287
        %v1309 = vpack.c.bf16 %v1290, %v1289
        %v1310 = vpack.c.bf16 %v1292, %v1291
        %v1311 = vpack.c.bf16 %v1294, %v1293
        %v1312 = vpack.c.bf16 %v1296, %v1295
        %v1313 = vld [vmem:[%s1136] sm:$0xff]
        %v1314 = vld [vmem:[%s1136 + $0x8] sm:$0xff]
        %v1315 = vld [vmem:[%s1136 + $0x18] sm:$0xff]
        %v1316 = vld [vmem:[%s1136 + $0x20] sm:$0xff]
        %v1317 = vld [vmem:[%s1136 + $0x30] sm:$0xff]
        %v1318 = vld [vmem:[%s1136 + $0x38] sm:$0xff]
        %v1319 = vld [vmem:[%s1136 + $0x48] sm:$0xff]
        %v1320 = vld [vmem:[%s1136 + $0x50] sm:$0xff]
        %v1321 = vld [vmem:[%s1136 + $0x60] sm:$0xff]
        %v1322 = vld [vmem:[%s1136 + $0x68] sm:$0xff]
        %v1323 = vld [vmem:[%s1136 + $0x78] sm:$0xff]
        %v1324 = vld [vmem:[%s1136 + $0x80] sm:$0xff]
        %v1325 = vld [vmem:[%s1136 + $0x90] sm:$0xff]
        %v1326 = vld [vmem:[%s1136 + $0x98] sm:$0xff]
        %v1327 = vld [vmem:[%s1136 + $0xa8] sm:$0xff]
        %v1328 = vld [vmem:[%s1136 + $0xb0] sm:$0xff]
        %v1329 = vld [vmem:[%s1136 + $0xc0] sm:$0xff]
        %v1330 = vld [vmem:[%s1136 + $0xc8] sm:$0xff]
        %v1331 = vld [vmem:[%s1136 + $0xd8] sm:$0xff]
        %v1332 = vld [vmem:[%s1136 + $0xe0] sm:$0xff]
        %v1333 = vld [vmem:[%s1136 + $0xf0] sm:$0xff]
        %v1334 = vld [vmem:[%s1136 + $0xf8] sm:$0xff]
        %v1335 = vld [vmem:[%s1136 + $0x108] sm:$0xff]
        %v1336 = vld [vmem:[%s1136 + $0x110] sm:$0xff]
        %v1337 = vld [vmem:[%s1136 + $0x120] sm:$0xff]
        %v1338 = vld [vmem:[%s1136 + $0x128] sm:$0xff]
        %v1339 = vld [vmem:[%s1136 + $0x138] sm:$0xff]
        %v1340 = vld [vmem:[%s1136 + $0x140] sm:$0xff]
        %v1341 = vld [vmem:[%s1136 + $0x150] sm:$0xff]
        %v1342 = vld [vmem:[%s1136 + $0x158] sm:$0xff]
        %v1343 = vld [vmem:[%s1136 + $0x168] sm:$0xff]
        %v1344 = vld [vmem:[%s1136 + $0x170] sm:$0xff]
        %v1345 = vpack.c.bf16 %v1314, %v1313
        %v1346 = vpack.c.bf16 %v1316, %v1315
        %v1347 = vpack.c.bf16 %v1318, %v1317
        %v1348 = vpack.c.bf16 %v1320, %v1319
        %v1349 = vpack.c.bf16 %v1322, %v1321
        %v1350 = vpack.c.bf16 %v1324, %v1323
        %v1351 = vpack.c.bf16 %v1326, %v1325
        %v1352 = vpack.c.bf16 %v1328, %v1327
        %v1353 = vpack.c.bf16 %v1330, %v1329
        %v1354 = vpack.c.bf16 %v1332, %v1331
        %v1355 = vpack.c.bf16 %v1334, %v1333
        %v1356 = vpack.c.bf16 %v1336, %v1335
        %v1357 = vpack.c.bf16 %v1338, %v1337
        %v1358 = vpack.c.bf16 %v1340, %v1339
        %v1359 = vpack.c.bf16 %v1342, %v1341
        %v1360 = vpack.c.bf16 %v1344, %v1343
        %v1361 = vld [vmem:[%s1136 + $0x1] sm:$0xff]
        %v1362 = vld [vmem:[%s1136 + $0x9] sm:$0xff]
        %v1363 = vld [vmem:[%s1136 + $0x19] sm:$0xff]
        %v1364 = vld [vmem:[%s1136 + $0x21] sm:$0xff]
        %v1365 = vld [vmem:[%s1136 + $0x31] sm:$0xff]
        %v1366 = vld [vmem:[%s1136 + $0x39] sm:$0xff]
        %v1367 = vld [vmem:[%s1136 + $0x49] sm:$0xff]
        %v1368 = vld [vmem:[%s1136 + $0x51] sm:$0xff]
        %v1369 = vld [vmem:[%s1136 + $0x61] sm:$0xff]
        %v1370 = vld [vmem:[%s1136 + $0x69] sm:$0xff]
        %v1371 = vld [vmem:[%s1136 + $0x79] sm:$0xff]
        %v1372 = vld [vmem:[%s1136 + $0x81] sm:$0xff]
        %v1373 = vld [vmem:[%s1136 + $0x91] sm:$0xff]
        %v1374 = vld [vmem:[%s1136 + $0x99] sm:$0xff]
        %v1375 = vld [vmem:[%s1136 + $0xa9] sm:$0xff]
        %v1376 = vld [vmem:[%s1136 + $0xb1] sm:$0xff]
        %v1377 = vld [vmem:[%s1136 + $0xc1] sm:$0xff]
        %v1378 = vld [vmem:[%s1136 + $0xc9] sm:$0xff]
        %v1379 = vld [vmem:[%s1136 + $0xd9] sm:$0xff]
        %v1380 = vld [vmem:[%s1136 + $0xe1] sm:$0xff]
        %v1381 = vld [vmem:[%s1136 + $0xf1] sm:$0xff]
        %v1382 = vld [vmem:[%s1136 + $0xf9] sm:$0xff]
        %v1383 = vld [vmem:[%s1136 + $0x109] sm:$0xff]
        %v1384 = vld [vmem:[%s1136 + $0x111] sm:$0xff]
        %v1385 = vld [vmem:[%s1136 + $0x121] sm:$0xff]
        %v1386 = vld [vmem:[%s1136 + $0x129] sm:$0xff]
        %v1387 = vld [vmem:[%s1136 + $0x139] sm:$0xff]
        %v1388 = vld [vmem:[%s1136 + $0x141] sm:$0xff]
        %v1389 = vld [vmem:[%s1136 + $0x151] sm:$0xff]
        %v1390 = vld [vmem:[%s1136 + $0x159] sm:$0xff]
        %v1391 = vld [vmem:[%s1136 + $0x169] sm:$0xff]
        %v1392 = vld [vmem:[%s1136 + $0x171] sm:$0xff]
        %v1393 = vpack.c.bf16 %v1362, %v1361
        %v1394 = vpack.c.bf16 %v1364, %v1363
        %v1395 = vpack.c.bf16 %v1366, %v1365
        %v1396 = vpack.c.bf16 %v1368, %v1367
        %v1397 = vpack.c.bf16 %v1370, %v1369
        %v1398 = vpack.c.bf16 %v1372, %v1371
        %v1399 = vpack.c.bf16 %v1374, %v1373
        %v1400 = vpack.c.bf16 %v1376, %v1375
        %v1401 = vpack.c.bf16 %v1378, %v1377
        %v1402 = vpack.c.bf16 %v1380, %v1379
        %v1403 = vpack.c.bf16 %v1382, %v1381
        %v1404 = vpack.c.bf16 %v1384, %v1383
        %v1405 = vpack.c.bf16 %v1386, %v1385
        %v1406 = vpack.c.bf16 %v1388, %v1387
        %v1407 = vpack.c.bf16 %v1390, %v1389
        %v1408 = vpack.c.bf16 %v1392, %v1391
        %v1409 = vld [vmem:[%s1136 + $0x2] sm:$0xff]
        %v1410 = vld [vmem:[%s1136 + $0xa] sm:$0xff]
        %v1411 = vld [vmem:[%s1136 + $0x1a] sm:$0xff]
        %v1412 = vld [vmem:[%s1136 + $0x22] sm:$0xff]
        %v1413 = vld [vmem:[%s1136 + $0x32] sm:$0xff]
        %v1414 = vld [vmem:[%s1136 + $0x3a] sm:$0xff]
        %v1415 = vld [vmem:[%s1136 + $0x4a] sm:$0xff]
        %v1416 = vld [vmem:[%s1136 + $0x52] sm:$0xff]
        %v1417 = vld [vmem:[%s1136 + $0x62] sm:$0xff]
        %v1418 = vld [vmem:[%s1136 + $0x6a] sm:$0xff]
        %v1419 = vld [vmem:[%s1136 + $0x7a] sm:$0xff]
        %v1420 = vld [vmem:[%s1136 + $0x82] sm:$0xff]
        %v1421 = vld [vmem:[%s1136 + $0x92] sm:$0xff]
        %v1422 = vld [vmem:[%s1136 + $0x9a] sm:$0xff]
        %v1423 = vld [vmem:[%s1136 + $0xaa] sm:$0xff]
        %v1424 = vld [vmem:[%s1136 + $0xb2] sm:$0xff]
        %v1425 = vld [vmem:[%s1136 + $0xc2] sm:$0xff]
        %v1426 = vld [vmem:[%s1136 + $0xca] sm:$0xff]
        %v1427 = vld [vmem:[%s1136 + $0xda] sm:$0xff]
        %v1428 = vld [vmem:[%s1136 + $0xe2] sm:$0xff]
        %v1429 = vld [vmem:[%s1136 + $0xf2] sm:$0xff]
        %v1430 = vld [vmem:[%s1136 + $0xfa] sm:$0xff]
        %v1431 = vld [vmem:[%s1136 + $0x10a] sm:$0xff]
        %v1432 = vld [vmem:[%s1136 + $0x112] sm:$0xff]
        %v1433 = vld [vmem:[%s1136 + $0x122] sm:$0xff]
        %v1434 = vld [vmem:[%s1136 + $0x12a] sm:$0xff]
        %v1435 = vld [vmem:[%s1136 + $0x13a] sm:$0xff]
        %v1436 = vld [vmem:[%s1136 + $0x142] sm:$0xff]
        %v1437 = vld [vmem:[%s1136 + $0x152] sm:$0xff]
        %v1438 = vld [vmem:[%s1136 + $0x15a] sm:$0xff]
        %v1439 = vld [vmem:[%s1136 + $0x16a] sm:$0xff]
        %v1440 = vld [vmem:[%s1136 + $0x172] sm:$0xff]
        %v1441 = vpack.c.bf16 %v1410, %v1409
        %v1442 = vpack.c.bf16 %v1412, %v1411
        %v1443 = vpack.c.bf16 %v1414, %v1413
        %v1444 = vpack.c.bf16 %v1416, %v1415
        %v1445 = vpack.c.bf16 %v1418, %v1417
        %v1446 = vpack.c.bf16 %v1420, %v1419
        %v1447 = vpack.c.bf16 %v1422, %v1421
        %v1448 = vpack.c.bf16 %v1424, %v1423
        %v1449 = vpack.c.bf16 %v1426, %v1425
        %v1450 = vpack.c.bf16 %v1428, %v1427
        %v1451 = vpack.c.bf16 %v1430, %v1429
        %v1452 = vpack.c.bf16 %v1432, %v1431
        %v1453 = vpack.c.bf16 %v1434, %v1433
        %v1454 = vpack.c.bf16 %v1436, %v1435
        %v1455 = vpack.c.bf16 %v1438, %v1437
        %v1456 = vpack.c.bf16 %v1440, %v1439
        %s1457 = scalar_lea.vmem [#allocation2], 48
        %v1458 = vld [vmem:[%s1457] sm:$0xff]
        %v1459 = vld [vmem:[%s1457 + $0x8] sm:$0xff]
        %v1460 = vld [vmem:[%s1457 + $0x18] sm:$0xff]
        %v1461 = vld [vmem:[%s1457 + $0x20] sm:$0xff]
        %v1462 = vld [vmem:[%s1457 + $0x30] sm:$0xff]
        %v1463 = vld [vmem:[%s1457 + $0x38] sm:$0xff]
        %v1464 = vld [vmem:[%s1457 + $0x48] sm:$0xff]
        %v1465 = vld [vmem:[%s1457 + $0x50] sm:$0xff]
        %v1466 = vld [vmem:[%s1457 + $0x60] sm:$0xff]
        %v1467 = vld [vmem:[%s1457 + $0x68] sm:$0xff]
        %v1468 = vld [vmem:[%s1457 + $0x78] sm:$0xff]
        %v1469 = vld [vmem:[%s1457 + $0x80] sm:$0xff]
        %v1470 = vld [vmem:[%s1457 + $0x90] sm:$0xff]
        %v1471 = vld [vmem:[%s1457 + $0x98] sm:$0xff]
        %v1472 = vld [vmem:[%s1457 + $0xa8] sm:$0xff]
        %v1473 = vld [vmem:[%s1457 + $0xb0] sm:$0xff]
        %v1474 = vld [vmem:[%s1457 + $0xc0] sm:$0xff]
        %v1475 = vld [vmem:[%s1457 + $0xc8] sm:$0xff]
        %v1476 = vld [vmem:[%s1457 + $0xd8] sm:$0xff]
        %v1477 = vld [vmem:[%s1457 + $0xe0] sm:$0xff]
        %v1478 = vld [vmem:[%s1457 + $0xf0] sm:$0xff]
        %v1479 = vld [vmem:[%s1457 + $0xf8] sm:$0xff]
        %v1480 = vld [vmem:[%s1457 + $0x108] sm:$0xff]
        %v1481 = vld [vmem:[%s1457 + $0x110] sm:$0xff]
        %v1482 = vld [vmem:[%s1457 + $0x120] sm:$0xff]
        %v1483 = vld [vmem:[%s1457 + $0x128] sm:$0xff]
        %v1484 = vld [vmem:[%s1457 + $0x138] sm:$0xff]
        %v1485 = vld [vmem:[%s1457 + $0x140] sm:$0xff]
        %v1486 = vld [vmem:[%s1457 + $0x150] sm:$0xff]
        %v1487 = vld [vmem:[%s1457 + $0x158] sm:$0xff]
        %v1488 = vld [vmem:[%s1457 + $0x168] sm:$0xff]
        %v1489 = vld [vmem:[%s1457 + $0x170] sm:$0xff]
        %v1490 = vpack.c.bf16 %v1459, %v1458
        %v1491 = vpack.c.bf16 %v1461, %v1460
        %v1492 = vpack.c.bf16 %v1463, %v1462
        %v1493 = vpack.c.bf16 %v1465, %v1464
        %v1494 = vpack.c.bf16 %v1467, %v1466
        %v1495 = vpack.c.bf16 %v1469, %v1468
        %v1496 = vpack.c.bf16 %v1471, %v1470
        %v1497 = vpack.c.bf16 %v1473, %v1472
        %v1498 = vpack.c.bf16 %v1475, %v1474
        %v1499 = vpack.c.bf16 %v1477, %v1476
        %v1500 = vpack.c.bf16 %v1479, %v1478
        %v1501 = vpack.c.bf16 %v1481, %v1480
        %v1502 = vpack.c.bf16 %v1483, %v1482
        %v1503 = vpack.c.bf16 %v1485, %v1484
        %v1504 = vpack.c.bf16 %v1487, %v1486
        %v1505 = vpack.c.bf16 %v1489, %v1488
        %v1506 = vld [vmem:[%s1457 + $0x1] sm:$0xff]
        %v1507 = vld [vmem:[%s1457 + $0x9] sm:$0xff]
        %v1508 = vld [vmem:[%s1457 + $0x19] sm:$0xff]
        %v1509 = vld [vmem:[%s1457 + $0x21] sm:$0xff]
        %v1510 = vld [vmem:[%s1457 + $0x31] sm:$0xff]
        %v1511 = vld [vmem:[%s1457 + $0x39] sm:$0xff]
        %v1512 = vld [vmem:[%s1457 + $0x49] sm:$0xff]
        %v1513 = vld [vmem:[%s1457 + $0x51] sm:$0xff]
        %v1514 = vld [vmem:[%s1457 + $0x61] sm:$0xff]
        %v1515 = vld [vmem:[%s1457 + $0x69] sm:$0xff]
        %v1516 = vld [vmem:[%s1457 + $0x79] sm:$0xff]
        %v1517 = vld [vmem:[%s1457 + $0x81] sm:$0xff]
        %v1518 = vld [vmem:[%s1457 + $0x91] sm:$0xff]
        %v1519 = vld [vmem:[%s1457 + $0x99] sm:$0xff]
        %v1520 = vld [vmem:[%s1457 + $0xa9] sm:$0xff]
        %v1521 = vld [vmem:[%s1457 + $0xb1] sm:$0xff]
        %v1522 = vld [vmem:[%s1457 + $0xc1] sm:$0xff]
        %v1523 = vld [vmem:[%s1457 + $0xc9] sm:$0xff]
        %v1524 = vld [vmem:[%s1457 + $0xd9] sm:$0xff]
        %v1525 = vld [vmem:[%s1457 + $0xe1] sm:$0xff]
        %v1526 = vld [vmem:[%s1457 + $0xf1] sm:$0xff]
        %v1527 = vld [vmem:[%s1457 + $0xf9] sm:$0xff]
        %v1528 = vld [vmem:[%s1457 + $0x109] sm:$0xff]
        %v1529 = vld [vmem:[%s1457 + $0x111] sm:$0xff]
        %v1530 = vld [vmem:[%s1457 + $0x121] sm:$0xff]
        %v1531 = vld [vmem:[%s1457 + $0x129] sm:$0xff]
        %v1532 = vld [vmem:[%s1457 + $0x139] sm:$0xff]
        %v1533 = vld [vmem:[%s1457 + $0x141] sm:$0xff]
        %v1534 = vld [vmem:[%s1457 + $0x151] sm:$0xff]
        %v1535 = vld [vmem:[%s1457 + $0x159] sm:$0xff]
        %v1536 = vld [vmem:[%s1457 + $0x169] sm:$0xff]
        %v1537 = vld [vmem:[%s1457 + $0x171] sm:$0xff]
        %v1538 = vpack.c.bf16 %v1507, %v1506
        %v1539 = vpack.c.bf16 %v1509, %v1508
        %v1540 = vpack.c.bf16 %v1511, %v1510
        %v1541 = vpack.c.bf16 %v1513, %v1512
        %v1542 = vpack.c.bf16 %v1515, %v1514
        %v1543 = vpack.c.bf16 %v1517, %v1516
        %v1544 = vpack.c.bf16 %v1519, %v1518
        %v1545 = vpack.c.bf16 %v1521, %v1520
        %v1546 = vpack.c.bf16 %v1523, %v1522
        %v1547 = vpack.c.bf16 %v1525, %v1524
        %v1548 = vpack.c.bf16 %v1527, %v1526
        %v1549 = vpack.c.bf16 %v1529, %v1528
        %v1550 = vpack.c.bf16 %v1531, %v1530
        %v1551 = vpack.c.bf16 %v1533, %v1532
        %v1552 = vpack.c.bf16 %v1535, %v1534
        %v1553 = vpack.c.bf16 %v1537, %v1536
        %v1554 = vld [vmem:[%s1457 + $0x2] sm:$0xff]
        %v1555 = vld [vmem:[%s1457 + $0xa] sm:$0xff]
        %v1556 = vld [vmem:[%s1457 + $0x1a] sm:$0xff]
        %v1557 = vld [vmem:[%s1457 + $0x22] sm:$0xff]
        %v1558 = vld [vmem:[%s1457 + $0x32] sm:$0xff]
        %v1559 = vld [vmem:[%s1457 + $0x3a] sm:$0xff]
        %v1560 = vld [vmem:[%s1457 + $0x4a] sm:$0xff]
        %v1561 = vld [vmem:[%s1457 + $0x52] sm:$0xff]
        %v1562 = vld [vmem:[%s1457 + $0x62] sm:$0xff]
        %v1563 = vld [vmem:[%s1457 + $0x6a] sm:$0xff]
        %v1564 = vld [vmem:[%s1457 + $0x7a] sm:$0xff]
        %v1565 = vld [vmem:[%s1457 + $0x82] sm:$0xff]
        %v1566 = vld [vmem:[%s1457 + $0x92] sm:$0xff]
        %v1567 = vld [vmem:[%s1457 + $0x9a] sm:$0xff]
        %v1568 = vld [vmem:[%s1457 + $0xaa] sm:$0xff]
        %v1569 = vld [vmem:[%s1457 + $0xb2] sm:$0xff]
        %v1570 = vld [vmem:[%s1457 + $0xc2] sm:$0xff]
        %v1571 = vld [vmem:[%s1457 + $0xca] sm:$0xff]
        %v1572 = vld [vmem:[%s1457 + $0xda] sm:$0xff]
        %v1573 = vld [vmem:[%s1457 + $0xe2] sm:$0xff]
        %v1574 = vld [vmem:[%s1457 + $0xf2] sm:$0xff]
        %v1575 = vld [vmem:[%s1457 + $0xfa] sm:$0xff]
        %v1576 = vld [vmem:[%s1457 + $0x10a] sm:$0xff]
        %v1577 = vld [vmem:[%s1457 + $0x112] sm:$0xff]
        %v1578 = vld [vmem:[%s1457 + $0x122] sm:$0xff]
        %v1579 = vld [vmem:[%s1457 + $0x12a] sm:$0xff]
        %v1580 = vld [vmem:[%s1457 + $0x13a] sm:$0xff]
        %v1581 = vld [vmem:[%s1457 + $0x142] sm:$0xff]
        %v1582 = vld [vmem:[%s1457 + $0x152] sm:$0xff]
        %v1583 = vld [vmem:[%s1457 + $0x15a] sm:$0xff]
        %v1584 = vld [vmem:[%s1457 + $0x16a] sm:$0xff]
        %v1585 = vld [vmem:[%s1457 + $0x172] sm:$0xff]
        %v1586 = vpack.c.bf16 %v1555, %v1554
        %v1587 = vpack.c.bf16 %v1557, %v1556
        %v1588 = vpack.c.bf16 %v1559, %v1558
        %v1589 = vpack.c.bf16 %v1561, %v1560
        %v1590 = vpack.c.bf16 %v1563, %v1562
        %v1591 = vpack.c.bf16 %v1565, %v1564
        %v1592 = vpack.c.bf16 %v1567, %v1566
        %v1593 = vpack.c.bf16 %v1569, %v1568
        %v1594 = vpack.c.bf16 %v1571, %v1570
        %v1595 = vpack.c.bf16 %v1573, %v1572
        %v1596 = vpack.c.bf16 %v1575, %v1574
        %v1597 = vpack.c.bf16 %v1577, %v1576
        %v1598 = vpack.c.bf16 %v1579, %v1578
        %v1599 = vpack.c.bf16 %v1581, %v1580
        %v1600 = vpack.c.bf16 %v1583, %v1582
        %v1601 = vpack.c.bf16 %v1585, %v1584
        %v1602 = vld [vmem:[%s3] sm:$0xf]
        %v1603 = vld [vmem:[%s3 + $0x4] sm:$0xf]
        %v1604 = vld [vmem:[%s3 + $0x8] sm:$0xf]
        %v1605 = vld [vmem:[%s3 + $0xc] sm:$0xf]
        %v1606 = vld [vmem:[%s3 + $0x10] sm:$0xf]
        %v1607 = vld [vmem:[%s3 + $0x14] sm:$0xf]
        %v1608 = vld [vmem:[%s3 + $0x18] sm:$0xf]
        %v1609 = vld [vmem:[%s3 + $0x1c] sm:$0xf]
        %v1610 = vld [vmem:[%s3 + $0x20] sm:$0xf]
        %v1611 = vld [vmem:[%s3 + $0x24] sm:$0xf]
        %v1612 = vld [vmem:[%s3 + $0x28] sm:$0xf]
        %v1613 = vld [vmem:[%s3 + $0x2c] sm:$0xf]
        %v1614 = vld [vmem:[%s3 + $0x30] sm:$0xf]
        %v1615 = vld [vmem:[%s3 + $0x34] sm:$0xf]
        %v1616 = vld [vmem:[%s3 + $0x38] sm:$0xf]
        %v1617 = vld [vmem:[%s3 + $0x3c] sm:$0xf]
        %v1618 = vld [vmem:[%s3 + $0x40] sm:$0xf]
        %v1619 = vld [vmem:[%s3 + $0x44] sm:$0xf]
        %v1620 = vld [vmem:[%s3 + $0x48] sm:$0xf]
        %v1621 = vld [vmem:[%s3 + $0x4c] sm:$0xf]
        %v1622 = vld [vmem:[%s3 + $0x50] sm:$0xf]
        %v1623 = vld [vmem:[%s3 + $0x54] sm:$0xf]
        %v1624 = vld [vmem:[%s3 + $0x58] sm:$0xf]
        %v1625 = vld [vmem:[%s3 + $0x5c] sm:$0xf]
        %v1626 = vld [vmem:[%s3 + $0x60] sm:$0xf]
        %v1627 = vld [vmem:[%s3 + $0x64] sm:$0xf]
        %v1628 = vld [vmem:[%s3 + $0x68] sm:$0xf]
        %v1629 = vld [vmem:[%s3 + $0x6c] sm:$0xf]
        %v1630 = vld [vmem:[%s3 + $0x70] sm:$0xf]
        %v1631 = vld [vmem:[%s3 + $0x74] sm:$0xf]
        %v1632 = vld [vmem:[%s3 + $0x78] sm:$0xf]
        %v1633 = vld [vmem:[%s3 + $0x7c] sm:$0xf]
        %v1634 = vld [vmem:[%s3 + $0x80] sm:$0xf]
        %v1635 = vld [vmem:[%s3 + $0x84] sm:$0xf]
        %v1636 = vld [vmem:[%s3 + $0x88] sm:$0xf]
        %v1637 = vld [vmem:[%s3 + $0x8c] sm:$0xf]
        %v1638 = vld [vmem:[%s3 + $0x90] sm:$0xf]
        %v1639 = vld [vmem:[%s3 + $0x94] sm:$0xf]
        %v1640 = vld [vmem:[%s3 + $0x98] sm:$0xf]
        %v1641 = vld [vmem:[%s3 + $0x9c] sm:$0xf]
        %v1642 = vld [vmem:[%s3 + $0xa0] sm:$0xf]
        %v1643 = vld [vmem:[%s3 + $0xa4] sm:$0xf]
        %v1644 = vld [vmem:[%s3 + $0xa8] sm:$0xf]
        %v1645 = vld [vmem:[%s3 + $0xac] sm:$0xf]
        %v1646 = vld [vmem:[%s3 + $0xb0] sm:$0xf]
        %v1647 = vld [vmem:[%s3 + $0xb4] sm:$0xf]
        %v1648 = vld [vmem:[%s3 + $0xb8] sm:$0xf]
        %v1649 = vld [vmem:[%s3 + $0xbc] sm:$0xf]
        %v1650 = vld [vmem:[%s3 + $0xc0] sm:$0xf]
        %v1651 = vld [vmem:[%s3 + $0xc4] sm:$0xf]
        %v1652 = vld [vmem:[%s3 + $0xc8] sm:$0xf]
        %v1653 = vld [vmem:[%s3 + $0xcc] sm:$0xf]
        %v1654 = vld [vmem:[%s3 + $0xd0] sm:$0xf]
        %v1655 = vld [vmem:[%s3 + $0xd4] sm:$0xf]
        %v1656 = vld [vmem:[%s3 + $0xd8] sm:$0xf]
        %v1657 = vld [vmem:[%s3 + $0xdc] sm:$0xf]
        %v1658 = vld [vmem:[%s3 + $0xe0] sm:$0xf]
        %v1659 = vld [vmem:[%s3 + $0xe4] sm:$0xf]
        %v1660 = vld [vmem:[%s3 + $0xe8] sm:$0xf]
        %v1661 = vld [vmem:[%s3 + $0xec] sm:$0xf]
        %v1662 = vld [vmem:[%s3 + $0xf0] sm:$0xf]
        %v1663 = vld [vmem:[%s3 + $0xf4] sm:$0xf]
        %v1664 = vld [vmem:[%s3 + $0xf8] sm:$0xf]
        %v1665 = vld [vmem:[%s3 + $0xfc] sm:$0xf]
        %v1666 = vld [vmem:[%s3 + $0x100] sm:$0xf]
        %v1667 = vld [vmem:[%s3 + $0x104] sm:$0xf]
        %v1668 = vld [vmem:[%s3 + $0x108] sm:$0xf]
        %v1669 = vld [vmem:[%s3 + $0x10c] sm:$0xf]
        %v1670 = vld [vmem:[%s3 + $0x110] sm:$0xf]
        %v1671 = vld [vmem:[%s3 + $0x114] sm:$0xf]
        %v1672 = vld [vmem:[%s3 + $0x118] sm:$0xf]
        %v1673 = vld [vmem:[%s3 + $0x11c] sm:$0xf]
        %v1674 = vld [vmem:[%s3 + $0x120] sm:$0xf]
        %v1675 = vld [vmem:[%s3 + $0x124] sm:$0xf]
        %v1676 = vld [vmem:[%s3 + $0x128] sm:$0xf]
        %v1677 = vld [vmem:[%s3 + $0x12c] sm:$0xf]
        %v1678 = vld [vmem:[%s3 + $0x130] sm:$0xf]
        %v1679 = vld [vmem:[%s3 + $0x134] sm:$0xf]
        %v1680 = vld [vmem:[%s3 + $0x138] sm:$0xf]
        %v1681 = vld [vmem:[%s3 + $0x13c] sm:$0xf]
        %v1682 = vld [vmem:[%s3 + $0x140] sm:$0xf]
        %v1683 = vld [vmem:[%s3 + $0x144] sm:$0xf]
        %v1684 = vld [vmem:[%s3 + $0x148] sm:$0xf]
        %v1685 = vld [vmem:[%s3 + $0x14c] sm:$0xf]
        %v1686 = vld [vmem:[%s3 + $0x150] sm:$0xf]
        %v1687 = vld [vmem:[%s3 + $0x154] sm:$0xf]
        %v1688 = vld [vmem:[%s3 + $0x158] sm:$0xf]
        %v1689 = vld [vmem:[%s3 + $0x15c] sm:$0xf]
        %v1690 = vld [vmem:[%s3 + $0x160] sm:$0xf]
        %v1691 = vld [vmem:[%s3 + $0x164] sm:$0xf]
        %v1692 = vld [vmem:[%s3 + $0x168] sm:$0xf]
        %v1693 = vld [vmem:[%s3 + $0x16c] sm:$0xf]
        %v1694 = vld [vmem:[%s3 + $0x170] sm:$0xf]
        %v1695 = vld [vmem:[%s3 + $0x174] sm:$0xf]
        %v1696 = vld [vmem:[%s3 + $0x178] sm:$0xf]
        %v1697 = vld [vmem:[%s3 + $0x17c] sm:$0xf]
        %v1698 = vld [vmem:[%s3 + $0x180] sm:$0xf]
        %v1699 = vld [vmem:[%s3 + $0x184] sm:$0xf]
        %v1700 = vld [vmem:[%s3 + $0x188] sm:$0xf]
        %v1701 = vld [vmem:[%s3 + $0x18c] sm:$0xf]
        %v1702 = vld [vmem:[%s3 + $0x190] sm:$0xf]
        %v1703 = vld [vmem:[%s3 + $0x194] sm:$0xf]
        %v1704 = vld [vmem:[%s3 + $0x198] sm:$0xf]
        %v1705 = vld [vmem:[%s3 + $0x19c] sm:$0xf]
        %v1706 = vld [vmem:[%s3 + $0x1a0] sm:$0xf]
        %v1707 = vld [vmem:[%s3 + $0x1a4] sm:$0xf]
        %v1708 = vld [vmem:[%s3 + $0x1a8] sm:$0xf]
        %v1709 = vld [vmem:[%s3 + $0x1ac] sm:$0xf]
        %v1710 = vld [vmem:[%s3 + $0x1b0] sm:$0xf]
        %v1711 = vld [vmem:[%s3 + $0x1b4] sm:$0xf]
        %v1712 = vld [vmem:[%s3 + $0x1b8] sm:$0xf]
        %v1713 = vld [vmem:[%s3 + $0x1bc] sm:$0xf]
        %v1714 = vld [vmem:[%s3 + $0x1c0] sm:$0xf]
        %v1715 = vld [vmem:[%s3 + $0x1c4] sm:$0xf]
        %v1716 = vld [vmem:[%s3 + $0x1c8] sm:$0xf]
        %v1717 = vld [vmem:[%s3 + $0x1cc] sm:$0xf]
        %v1718 = vld [vmem:[%s3 + $0x1d0] sm:$0xf]
        %v1719 = vld [vmem:[%s3 + $0x1d4] sm:$0xf]
        %v1720 = vld [vmem:[%s3 + $0x1d8] sm:$0xf]
        %v1721 = vld [vmem:[%s3 + $0x1dc] sm:$0xf]
        %v1722 = vld [vmem:[%s3 + $0x1e0] sm:$0xf]
        %v1723 = vld [vmem:[%s3 + $0x1e4] sm:$0xf]
        %v1724 = vld [vmem:[%s3 + $0x1e8] sm:$0xf]
        %v1725 = vld [vmem:[%s3 + $0x1ec] sm:$0xf]
        %v1726 = vld [vmem:[%s3 + $0x1f0] sm:$0xf]
        %v1727 = vld [vmem:[%s3 + $0x1f4] sm:$0xf]
        %v1728 = vld [vmem:[%s3 + $0x1f8] sm:$0xf]
        %v1729 = vld [vmem:[%s3 + $0x1fc] sm:$0xf]
        %v1730 = vld [vmem:[%s3 + $0x200] sm:$0xf]
        %v1731 = vld [vmem:[%s3 + $0x204] sm:$0xf]
        %v1732 = vld [vmem:[%s3 + $0x208] sm:$0xf]
        %v1733 = vld [vmem:[%s3 + $0x20c] sm:$0xf]
        %v1734 = vld [vmem:[%s3 + $0x210] sm:$0xf]
        %v1735 = vld [vmem:[%s3 + $0x214] sm:$0xf]
        %v1736 = vld [vmem:[%s3 + $0x218] sm:$0xf]
        %v1737 = vld [vmem:[%s3 + $0x21c] sm:$0xf]
        %v1738 = vld [vmem:[%s3 + $0x220] sm:$0xf]
        %v1739 = vld [vmem:[%s3 + $0x224] sm:$0xf]
        %v1740 = vld [vmem:[%s3 + $0x228] sm:$0xf]
        %v1741 = vld [vmem:[%s3 + $0x22c] sm:$0xf]
        %v1742 = vld [vmem:[%s3 + $0x230] sm:$0xf]
        %v1743 = vld [vmem:[%s3 + $0x234] sm:$0xf]
        %v1744 = vld [vmem:[%s3 + $0x238] sm:$0xf]
        %v1745 = vld [vmem:[%s3 + $0x23c] sm:$0xf]
        %v1746 = vld [vmem:[%s4] sm:$0x1]
        %v1748 = vlaneseq
        %v1749 = vshrl.u32 %v1748, 7
        %v1750 = vsub.s32 0, %v1749
        %v1751 = vrot.slane %v1746, %v1750
        %v1897 = vunpack.c.l.b16 %v1602
        %v1898 = vunpack.c.l.b16 %v1603
        %v1899 = vunpack.c.l.b16 %v1604
        %v1900 = vunpack.c.l.b16 %v1605
        %v1901 = vunpack.c.l.b16 %v1606
        %v1902 = vunpack.c.l.b16 %v1607
        %v1903 = vunpack.c.l.b16 %v1608
        %v1904 = vunpack.c.l.b16 %v1609
        %v1905 = vunpack.c.l.b16 %v1610
        %v1906 = vunpack.c.l.b16 %v1611
        %v1907 = vunpack.c.l.b16 %v1612
        %v1908 = vunpack.c.l.b16 %v1613
        %v1909 = vunpack.c.l.b16 %v1614
        %v1910 = vunpack.c.l.b16 %v1615
        %v1911 = vunpack.c.l.b16 %v1616
        %v1912 = vunpack.c.l.b16 %v1617
        %v1913 = vunpack.c.l.b16 %v1618
        %v1914 = vunpack.c.l.b16 %v1619
        %v1915 = vunpack.c.l.b16 %v1620
        %v1916 = vunpack.c.l.b16 %v1621
        %v1917 = vunpack.c.l.b16 %v1622
        %v1918 = vunpack.c.l.b16 %v1623
        %v1919 = vunpack.c.l.b16 %v1624
        %v1920 = vunpack.c.l.b16 %v1625
        %v1921 = vunpack.c.l.b16 %v1626
        %v1922 = vunpack.c.l.b16 %v1627
        %v1923 = vunpack.c.l.b16 %v1628
        %v1924 = vunpack.c.l.b16 %v1629
        %v1925 = vunpack.c.l.b16 %v1630
        %v1926 = vunpack.c.l.b16 %v1631
        %v1927 = vunpack.c.l.b16 %v1632
        %v1928 = vunpack.c.l.b16 %v1633
        %v1929 = vunpack.c.l.b16 %v1634
        %v1930 = vunpack.c.l.b16 %v1635
        %v1931 = vunpack.c.l.b16 %v1636
        %v1932 = vunpack.c.l.b16 %v1637
        %v1933 = vunpack.c.l.b16 %v1638
        %v1934 = vunpack.c.l.b16 %v1639
        %v1935 = vunpack.c.l.b16 %v1640
        %v1936 = vunpack.c.l.b16 %v1641
        %v1937 = vunpack.c.l.b16 %v1642
        %v1938 = vunpack.c.l.b16 %v1643
        %v1939 = vunpack.c.l.b16 %v1644
        %v1940 = vunpack.c.l.b16 %v1645
        %v1941 = vunpack.c.l.b16 %v1646
        %v1942 = vunpack.c.l.b16 %v1647
        %v1943 = vunpack.c.l.b16 %v1648
        %v1944 = vunpack.c.l.b16 %v1649
        %v1945 = vunpack.c.l.b16 %v1650
        %v1946 = vunpack.c.l.b16 %v1651
        %v1947 = vunpack.c.l.b16 %v1652
        %v1948 = vunpack.c.l.b16 %v1653
        %v1949 = vunpack.c.l.b16 %v1654
        %v1950 = vunpack.c.l.b16 %v1655
        %v1951 = vunpack.c.l.b16 %v1656
        %v1952 = vunpack.c.l.b16 %v1657
        %v1953 = vunpack.c.l.b16 %v1658
        %v1954 = vunpack.c.l.b16 %v1659
        %v1955 = vunpack.c.l.b16 %v1660
        %v1956 = vunpack.c.l.b16 %v1661
        %v1957 = vunpack.c.l.b16 %v1662
        %v1958 = vunpack.c.l.b16 %v1663
        %v1959 = vunpack.c.l.b16 %v1664
        %v1960 = vunpack.c.l.b16 %v1665
        %v1961 = vunpack.c.l.b16 %v1666
        %v1962 = vunpack.c.l.b16 %v1667
        %v1963 = vunpack.c.l.b16 %v1668
        %v1964 = vunpack.c.l.b16 %v1669
        %v1965 = vunpack.c.l.b16 %v1670
        %v1966 = vunpack.c.l.b16 %v1671
        %v1967 = vunpack.c.l.b16 %v1672
        %v1968 = vunpack.c.l.b16 %v1673
        %v1969 = vunpack.c.l.b16 %v1674
        %v1970 = vunpack.c.l.b16 %v1675
        %v1971 = vunpack.c.l.b16 %v1676
        %v1972 = vunpack.c.l.b16 %v1677
        %v1973 = vunpack.c.l.b16 %v1678
        %v1974 = vunpack.c.l.b16 %v1679
        %v1975 = vunpack.c.l.b16 %v1680
        %v1976 = vunpack.c.l.b16 %v1681
        %v1977 = vunpack.c.l.b16 %v1682
        %v1978 = vunpack.c.l.b16 %v1683
        %v1979 = vunpack.c.l.b16 %v1684
        %v1980 = vunpack.c.l.b16 %v1685
        %v1981 = vunpack.c.l.b16 %v1686
        %v1982 = vunpack.c.l.b16 %v1687
        %v1983 = vunpack.c.l.b16 %v1688
        %v1984 = vunpack.c.l.b16 %v1689
        %v1985 = vunpack.c.l.b16 %v1690
        %v1986 = vunpack.c.l.b16 %v1691
        %v1987 = vunpack.c.l.b16 %v1692
        %v1988 = vunpack.c.l.b16 %v1693
        %v1989 = vunpack.c.l.b16 %v1694
        %v1990 = vunpack.c.l.b16 %v1695
        %v1991 = vunpack.c.l.b16 %v1696
        %v1992 = vunpack.c.l.b16 %v1697
        %v1993 = vunpack.c.l.b16 %v1698
        %v1994 = vunpack.c.l.b16 %v1699
        %v1995 = vunpack.c.l.b16 %v1700
        %v1996 = vunpack.c.l.b16 %v1701
        %v1997 = vunpack.c.l.b16 %v1702
        %v1998 = vunpack.c.l.b16 %v1703
        %v1999 = vunpack.c.l.b16 %v1704
        %v2000 = vunpack.c.l.b16 %v1705
        %v2001 = vunpack.c.l.b16 %v1706
        %v2002 = vunpack.c.l.b16 %v1707
        %v2003 = vunpack.c.l.b16 %v1708
        %v2004 = vunpack.c.l.b16 %v1709
        %v2005 = vunpack.c.l.b16 %v1710
        %v2006 = vunpack.c.l.b16 %v1711
        %v2007 = vunpack.c.l.b16 %v1712
        %v2008 = vunpack.c.l.b16 %v1713
        %v2009 = vunpack.c.l.b16 %v1714
        %v2010 = vunpack.c.l.b16 %v1715
        %v2011 = vunpack.c.l.b16 %v1716
        %v2012 = vunpack.c.l.b16 %v1717
        %v2013 = vunpack.c.l.b16 %v1718
        %v2014 = vunpack.c.l.b16 %v1719
        %v2015 = vunpack.c.l.b16 %v1720
        %v2016 = vunpack.c.l.b16 %v1721
        %v2017 = vunpack.c.l.b16 %v1722
        %v2018 = vunpack.c.l.b16 %v1723
        %v2019 = vunpack.c.l.b16 %v1724
        %v2020 = vunpack.c.l.b16 %v1725
        %v2021 = vunpack.c.l.b16 %v1726
        %v2022 = vunpack.c.l.b16 %v1727
        %v2023 = vunpack.c.l.b16 %v1728
        %v2024 = vunpack.c.l.b16 %v1729
        %v2025 = vunpack.c.l.b16 %v1730
        %v2026 = vunpack.c.l.b16 %v1731
        %v2027 = vunpack.c.l.b16 %v1732
        %v2028 = vunpack.c.l.b16 %v1733
        %v2029 = vunpack.c.l.b16 %v1734
        %v2030 = vunpack.c.l.b16 %v1735
        %v2031 = vunpack.c.l.b16 %v1736
        %v2032 = vunpack.c.l.b16 %v1737
        %v2033 = vunpack.c.l.b16 %v1738
        %v2034 = vunpack.c.l.b16 %v1739
        %v2035 = vunpack.c.l.b16 %v1740
        %v2036 = vunpack.c.l.b16 %v1741
        %v2037 = vunpack.c.l.b16 %v1742
        %v2038 = vunpack.c.l.b16 %v1743
        %v2039 = vunpack.c.l.b16 %v1744
        %v2040 = vunpack.c.l.b16 %v1745
        %v2041 = vpack.c.b16 %v1898, %v1897
        %v2042 = vpack.c.b16 %v1900, %v1899
        %v2043 = vpack.c.b16 %v1902, %v1901
        %v2044 = vpack.c.b16 %v1904, %v1903
        %v2045 = vpack.c.b16 %v1906, %v1905
        %v2046 = vpack.c.b16 %v1908, %v1907
        %v2047 = vpack.c.b16 %v1910, %v1909
        %v2048 = vpack.c.b16 %v1912, %v1911
        %v2049 = vpack.c.b16 %v1914, %v1913
        %v2050 = vpack.c.b16 %v1916, %v1915
        %v2051 = vpack.c.b16 %v1918, %v1917
        %v2052 = vpack.c.b16 %v1920, %v1919
        %v2053 = vpack.c.b16 %v1922, %v1921
        %v2054 = vpack.c.b16 %v1924, %v1923
        %v2055 = vpack.c.b16 %v1926, %v1925
        %v2056 = vpack.c.b16 %v1928, %v1927
        %v2057 = vpack.c.b16 %v1930, %v1929
        %v2058 = vpack.c.b16 %v1932, %v1931
        %v2059 = vpack.c.b16 %v1934, %v1933
        %v2060 = vpack.c.b16 %v1936, %v1935
        %v2061 = vpack.c.b16 %v1938, %v1937
        %v2062 = vpack.c.b16 %v1940, %v1939
        %v2063 = vpack.c.b16 %v1942, %v1941
        %v2064 = vpack.c.b16 %v1944, %v1943
        %v2065 = vpack.c.b16 %v1946, %v1945
        %v2066 = vpack.c.b16 %v1948, %v1947
        %v2067 = vpack.c.b16 %v1950, %v1949
        %v2068 = vpack.c.b16 %v1952, %v1951
        %v2069 = vpack.c.b16 %v1954, %v1953
        %v2070 = vpack.c.b16 %v1956, %v1955
        %v2071 = vpack.c.b16 %v1958, %v1957
        %v2072 = vpack.c.b16 %v1960, %v1959
        %v2073 = vpack.c.b16 %v1962, %v1961
        %v2074 = vpack.c.b16 %v1964, %v1963
        %v2075 = vpack.c.b16 %v1966, %v1965
        %v2076 = vpack.c.b16 %v1968, %v1967
        %v2077 = vpack.c.b16 %v1970, %v1969
        %v2078 = vpack.c.b16 %v1972, %v1971
        %v2079 = vpack.c.b16 %v1974, %v1973
        %v2080 = vpack.c.b16 %v1976, %v1975
        %v2081 = vpack.c.b16 %v1978, %v1977
        %v2082 = vpack.c.b16 %v1980, %v1979
        %v2083 = vpack.c.b16 %v1982, %v1981
        %v2084 = vpack.c.b16 %v1984, %v1983
        %v2085 = vpack.c.b16 %v1986, %v1985
        %v2086 = vpack.c.b16 %v1988, %v1987
        %v2087 = vpack.c.b16 %v1990, %v1989
        %v2088 = vpack.c.b16 %v1992, %v1991
        %v2089 = vpack.c.b16 %v1994, %v1993
        %v2090 = vpack.c.b16 %v1996, %v1995
        %v2091 = vpack.c.b16 %v1998, %v1997
        %v2092 = vpack.c.b16 %v2000, %v1999
        %v2093 = vpack.c.b16 %v2002, %v2001
        %v2094 = vpack.c.b16 %v2004, %v2003
        %v2095 = vpack.c.b16 %v2006, %v2005
        %v2096 = vpack.c.b16 %v2008, %v2007
        %v2097 = vpack.c.b16 %v2010, %v2009
        %v2098 = vpack.c.b16 %v2012, %v2011
        %v2099 = vpack.c.b16 %v2014, %v2013
        %v2100 = vpack.c.b16 %v2016, %v2015
        %v2101 = vpack.c.b16 %v2018, %v2017
        %v2102 = vpack.c.b16 %v2020, %v2019
        %v2103 = vpack.c.b16 %v2022, %v2021
        %v2104 = vpack.c.b16 %v2024, %v2023
        %v2105 = vpack.c.b16 %v2026, %v2025
        %v2106 = vpack.c.b16 %v2028, %v2027
        %v2107 = vpack.c.b16 %v2030, %v2029
        %v2108 = vpack.c.b16 %v2032, %v2031
        %v2109 = vpack.c.b16 %v2034, %v2033
        %v2110 = vpack.c.b16 %v2036, %v2035
        %v2111 = vpack.c.b16 %v2038, %v2037
        %v2112 = vpack.c.b16 %v2040, %v2039
        %2185 = vmatprep.subr.bf16.mxu0 0
        %2186 = vmatpush1.bf16.msra.mxu0 %v2048
        %2187 = vmatprep.subr.bf16.mxu0 0
        %2188 = vmatpush1.bf16.msra.mxu0 %v2047
        %2189 = vmatprep.subr.bf16.mxu0 0
        %2190 = vmatpush1.bf16.msra.mxu0 %v2046
        %2191 = vmatprep.subr.bf16.mxu0 0
        %2192 = vmatpush1.bf16.msra.mxu0 %v2045
        %2193 = vmatprep.subr.bf16.mxu0 0
        %2194 = vmatpush1.bf16.msra.mxu0 %v2044
        %2195 = vmatprep.subr.bf16.mxu0 0
        %2196 = vmatpush1.bf16.msra.mxu0 %v2043
        %2197 = vmatprep.subr.bf16.mxu0 0
        %2198 = vmatpush1.bf16.msra.mxu0 %v2042
        %2199 = vmatprep.subr.bf16.mxu0 0
        %2200 = vmatpush1.bf16.msra.mxu0 %v2041
        %2201 = vmatprep.subr.bf16.mxu0 0
        %2202 = vmatpush2.bf16.msra.mxu0 %v2056
        %2203 = vmatprep.subr.bf16.mxu0 0
        %2204 = vmatpush2.bf16.msra.mxu0 %v2055
        %2205 = vmatprep.subr.bf16.mxu0 0
        %2206 = vmatpush2.bf16.msra.mxu0 %v2054
        %2207 = vmatprep.subr.bf16.mxu0 0
        %2208 = vmatpush2.bf16.msra.mxu0 %v2053
        %2209 = vmatprep.subr.bf16.mxu0 0
        %2210 = vmatpush2.bf16.msra.mxu0 %v2052
        %2211 = vmatprep.subr.bf16.mxu0 0
        %2212 = vmatpush2.bf16.msra.mxu0 %v2051
        %2213 = vmatprep.subr.bf16.mxu0 0
        %2214 = vmatpush2.bf16.msra.mxu0 %v2050
        %2215 = vmatprep.subr.bf16.mxu0 0
        %2216 = vmatpush2.bf16.msra.mxu0 %v2049
        %2217 = vmatprep.mubr.bf16.mxu0 %v1249
        %2218 = vmatmul.mubr.bf16.gmra.mxu0 %v1201
        %v2219 = vpop.f32.mrf.mxu0
        %v2220 = vadd.f32 %v1751, %v2219
        %v2221 = vpop.f32.mrf.mxu0
        %v2222 = vpop.f32.mrf.mxu0
        %v2223 = vadd.f32 %v1751, %v2222
        %v2224 = vpop.f32.mrf.mxu0
        %2225 = vmatprep.mubr.bf16.mxu0 %v1250
        %2226 = vmatmul.mubr.bf16.gmra.mxu0 %v1202
        %v2227 = vpop.f32.mrf.mxu0
        %v2228 = vadd.f32 %v1751, %v2227
        %v2229 = vpop.f32.mrf.mxu0
        %v2230 = vpop.f32.mrf.mxu0
        %v2231 = vadd.f32 %v1751, %v2230
        %v2232 = vpop.f32.mrf.mxu0
        %2233 = vmatprep.mubr.bf16.mxu0 %v1251
        %2234 = vmatmul.mubr.bf16.gmra.mxu0 %v1203
        %v2235 = vpop.f32.mrf.mxu0
        %v2236 = vadd.f32 %v1751, %v2235
        %v2237 = vpop.f32.mrf.mxu0
        %v2238 = vpop.f32.mrf.mxu0
        %v2239 = vadd.f32 %v1751, %v2238
        %v2240 = vpop.f32.mrf.mxu0
        %2241 = vmatprep.mubr.bf16.mxu0 %v1252
        %2242 = vmatmul.mubr.bf16.gmra.mxu0 %v1204
        %v2243 = vpop.f32.mrf.mxu0
        %v2244 = vadd.f32 %v1751, %v2243
        %v2245 = vpop.f32.mrf.mxu0
        %v2246 = vpop.f32.mrf.mxu0
        %v2247 = vadd.f32 %v1751, %v2246
        %v2248 = vpop.f32.mrf.mxu0
        %2249 = vmatprep.mubr.bf16.mxu0 %v1253
        %2250 = vmatmul.mubr.bf16.gmra.mxu0 %v1205
        %v2251 = vpop.f32.mrf.mxu0
        %v2252 = vadd.f32 %v1751, %v2251
        %v2253 = vpop.f32.mrf.mxu0
        %v2254 = vpop.f32.mrf.mxu0
        %v2255 = vadd.f32 %v1751, %v2254
        %v2256 = vpop.f32.mrf.mxu0
        %2257 = vmatprep.mubr.bf16.mxu0 %v1254
        %2258 = vmatmul.mubr.bf16.gmra.mxu0 %v1206
        %v2259 = vpop.f32.mrf.mxu0
        %v2260 = vadd.f32 %v1751, %v2259
        %v2261 = vpop.f32.mrf.mxu0
        %v2262 = vpop.f32.mrf.mxu0
        %v2263 = vadd.f32 %v1751, %v2262
        %v2264 = vpop.f32.mrf.mxu0
        %2265 = vmatprep.mubr.bf16.mxu0 %v1255
        %2266 = vmatmul.mubr.bf16.gmra.mxu0 %v1207
        %v2267 = vpop.f32.mrf.mxu0
        %v2268 = vadd.f32 %v1751, %v2267
        %v2269 = vpop.f32.mrf.mxu0
        %v2270 = vpop.f32.mrf.mxu0
        %v2271 = vadd.f32 %v1751, %v2270
        %v2272 = vpop.f32.mrf.mxu0
        %2273 = vmatprep.mubr.bf16.mxu0 %v1256
        %2274 = vmatmul.mubr.bf16.gmra.mxu0 %v1208
        %v2275 = vpop.f32.mrf.mxu0
        %v2276 = vadd.f32 %v1751, %v2275
        %v2277 = vpop.f32.mrf.mxu0
        %v2278 = vpop.f32.mrf.mxu0
        %v2279 = vadd.f32 %v1751, %v2278
        %v2280 = vpop.f32.mrf.mxu0
        %2281 = vmatprep.mubr.bf16.mxu0 %v1257
        %2282 = vmatmul.mubr.bf16.gmra.mxu0 %v1209
        %v2283 = vpop.f32.mrf.mxu0
        %v2284 = vadd.f32 %v1751, %v2283
        %v2285 = vpop.f32.mrf.mxu0
        %v2286 = vpop.f32.mrf.mxu0
        %v2287 = vadd.f32 %v1751, %v2286
        %v2288 = vpop.f32.mrf.mxu0
        %2289 = vmatprep.mubr.bf16.mxu0 %v1258
        %2290 = vmatmul.mubr.bf16.gmra.mxu0 %v1210
        %v2291 = vpop.f32.mrf.mxu0
        %v2292 = vadd.f32 %v1751, %v2291
        %v2293 = vpop.f32.mrf.mxu0
        %v2294 = vpop.f32.mrf.mxu0
        %v2295 = vadd.f32 %v1751, %v2294
        %v2296 = vpop.f32.mrf.mxu0
        %2297 = vmatprep.mubr.bf16.mxu0 %v1259
        %2298 = vmatmul.mubr.bf16.gmra.mxu0 %v1211
        %v2299 = vpop.f32.mrf.mxu0
        %v2300 = vadd.f32 %v1751, %v2299
        %v2301 = vpop.f32.mrf.mxu0
        %v2302 = vpop.f32.mrf.mxu0
        %v2303 = vadd.f32 %v1751, %v2302
        %v2304 = vpop.f32.mrf.mxu0
        %2305 = vmatprep.mubr.bf16.mxu0 %v1260
        %2306 = vmatmul.mubr.bf16.gmra.mxu0 %v1212
        %v2307 = vpop.f32.mrf.mxu0
        %v2308 = vadd.f32 %v1751, %v2307
        %v2309 = vpop.f32.mrf.mxu0
        %v2310 = vpop.f32.mrf.mxu0
        %v2311 = vadd.f32 %v1751, %v2310
        %v2312 = vpop.f32.mrf.mxu0
        %2313 = vmatprep.mubr.bf16.mxu0 %v1261
        %2314 = vmatmul.mubr.bf16.gmra.mxu0 %v1213
        %v2315 = vpop.f32.mrf.mxu0
        %v2316 = vadd.f32 %v1751, %v2315
        %v2317 = vpop.f32.mrf.mxu0
        %v2318 = vpop.f32.mrf.mxu0
        %v2319 = vadd.f32 %v1751, %v2318
        %v2320 = vpop.f32.mrf.mxu0
        %2321 = vmatprep.mubr.bf16.mxu0 %v1262
        %2322 = vmatmul.mubr.bf16.gmra.mxu0 %v1214
        %v2323 = vpop.f32.mrf.mxu0
        %v2324 = vadd.f32 %v1751, %v2323
        %v2325 = vpop.f32.mrf.mxu0
        %v2326 = vpop.f32.mrf.mxu0
        %v2327 = vadd.f32 %v1751, %v2326
        %v2328 = vpop.f32.mrf.mxu0
        %2329 = vmatprep.mubr.bf16.mxu0 %v1263
        %2330 = vmatmul.mubr.bf16.gmra.mxu0 %v1215
        %v2331 = vpop.f32.mrf.mxu0
        %v2332 = vadd.f32 %v1751, %v2331
        %v2333 = vpop.f32.mrf.mxu0
        %v2334 = vpop.f32.mrf.mxu0
        %v2335 = vadd.f32 %v1751, %v2334
        %v2336 = vpop.f32.mrf.mxu0
        %2337 = vmatprep.mubr.bf16.mxu0 %v1264
        %2338 = vmatmul.mubr.bf16.gmra.mxu0 %v1216
        %v2339 = vpop.f32.mrf.mxu0
        %v2340 = vadd.f32 %v1751, %v2339
        %v2341 = vpop.f32.mrf.mxu0
        %v2342 = vpop.f32.mrf.mxu0
        %v2343 = vadd.f32 %v1751, %v2342
        %v2344 = vpop.f32.mrf.mxu0
        %2345 = vdwg.mxu0
        %2346 = vmatprep.subr.bf16.mxu0 0
        %2347 = vmatpush1.bf16.msra.mxu0 %v2064
        %2348 = vmatprep.subr.bf16.mxu0 0
        %2349 = vmatpush1.bf16.msra.mxu0 %v2063
        %2350 = vmatprep.subr.bf16.mxu0 0
        %2351 = vmatpush1.bf16.msra.mxu0 %v2062
        %2352 = vmatprep.subr.bf16.mxu0 0
        %2353 = vmatpush1.bf16.msra.mxu0 %v2061
        %2354 = vmatprep.subr.bf16.mxu0 0
        %2355 = vmatpush1.bf16.msra.mxu0 %v2060
        %2356 = vmatprep.subr.bf16.mxu0 0
        %2357 = vmatpush1.bf16.msra.mxu0 %v2059
        %2358 = vmatprep.subr.bf16.mxu0 0
        %2359 = vmatpush1.bf16.msra.mxu0 %v2058
        %2360 = vmatprep.subr.bf16.mxu0 0
        %2361 = vmatpush1.bf16.msra.mxu0 %v2057
        %2362 = vmatprep.subr.bf16.mxu0 0
        %2363 = vmatpush2.bf16.msra.mxu0 %v2072
        %2364 = vmatprep.subr.bf16.mxu0 0
        %2365 = vmatpush2.bf16.msra.mxu0 %v2071
        %2366 = vmatprep.subr.bf16.mxu0 0
        %2367 = vmatpush2.bf16.msra.mxu0 %v2070
        %2368 = vmatprep.subr.bf16.mxu0 0
        %2369 = vmatpush2.bf16.msra.mxu0 %v2069
        %2370 = vmatprep.subr.bf16.mxu0 0
        %2371 = vmatpush2.bf16.msra.mxu0 %v2068
        %2372 = vmatprep.subr.bf16.mxu0 0
        %2373 = vmatpush2.bf16.msra.mxu0 %v2067
        %2374 = vmatprep.subr.bf16.mxu0 0
        %2375 = vmatpush2.bf16.msra.mxu0 %v2066
        %2376 = vmatprep.subr.bf16.mxu0 0
        %2377 = vmatpush2.bf16.msra.mxu0 %v2065
        %2378 = vmatprep.mubr.bf16.mxu0 %v1345
        %2379 = vmatmul.mubr.bf16.gmra.mxu0 %v1297
        %v2380 = vpop.f32.mrf.mxu0
        %v2381 = vadd.f32 %v2220, %v2380
        %v2382 = vpop.f32.mrf.mxu0
        %v2383 = vpop.f32.mrf.mxu0
        %v2384 = vadd.f32 %v2223, %v2383
        %v2385 = vpop.f32.mrf.mxu0
        %2386 = vmatprep.mubr.bf16.mxu0 %v1346
        %2387 = vmatmul.mubr.bf16.gmra.mxu0 %v1298
        %v2388 = vpop.f32.mrf.mxu0
        %v2389 = vadd.f32 %v2228, %v2388
        %v2390 = vpop.f32.mrf.mxu0
        %v2391 = vpop.f32.mrf.mxu0
        %v2392 = vadd.f32 %v2231, %v2391
        %v2393 = vpop.f32.mrf.mxu0
        %2394 = vmatprep.mubr.bf16.mxu0 %v1347
        %2395 = vmatmul.mubr.bf16.gmra.mxu0 %v1299
        %v2396 = vpop.f32.mrf.mxu0
        %v2397 = vadd.f32 %v2236, %v2396
        %v2398 = vpop.f32.mrf.mxu0
        %v2399 = vpop.f32.mrf.mxu0
        %v2400 = vadd.f32 %v2239, %v2399
        %v2401 = vpop.f32.mrf.mxu0
        %2402 = vmatprep.mubr.bf16.mxu0 %v1348
        %2403 = vmatmul.mubr.bf16.gmra.mxu0 %v1300
        %v2404 = vpop.f32.mrf.mxu0
        %v2405 = vadd.f32 %v2244, %v2404
        %v2406 = vpop.f32.mrf.mxu0
        %v2407 = vpop.f32.mrf.mxu0
        %v2408 = vadd.f32 %v2247, %v2407
        %v2409 = vpop.f32.mrf.mxu0
        %2410 = vmatprep.mubr.bf16.mxu0 %v1349
        %2411 = vmatmul.mubr.bf16.gmra.mxu0 %v1301
        %v2412 = vpop.f32.mrf.mxu0
        %v2413 = vadd.f32 %v2252, %v2412
        %v2414 = vpop.f32.mrf.mxu0
        %v2415 = vpop.f32.mrf.mxu0
        %v2416 = vadd.f32 %v2255, %v2415
        %v2417 = vpop.f32.mrf.mxu0
        %2418 = vmatprep.mubr.bf16.mxu0 %v1350
        %2419 = vmatmul.mubr.bf16.gmra.mxu0 %v1302
        %v2420 = vpop.f32.mrf.mxu0
        %v2421 = vadd.f32 %v2260, %v2420
        %v2422 = vpop.f32.mrf.mxu0
        %v2423 = vpop.f32.mrf.mxu0
        %v2424 = vadd.f32 %v2263, %v2423
        %v2425 = vpop.f32.mrf.mxu0
        %2426 = vmatprep.mubr.bf16.mxu0 %v1351
        %2427 = vmatmul.mubr.bf16.gmra.mxu0 %v1303
        %v2428 = vpop.f32.mrf.mxu0
        %v2429 = vadd.f32 %v2268, %v2428
        %v2430 = vpop.f32.mrf.mxu0
        %v2431 = vpop.f32.mrf.mxu0
        %v2432 = vadd.f32 %v2271, %v2431
        %v2433 = vpop.f32.mrf.mxu0
        %2434 = vmatprep.mubr.bf16.mxu0 %v1352
        %2435 = vmatmul.mubr.bf16.gmra.mxu0 %v1304
        %v2436 = vpop.f32.mrf.mxu0
        %v2437 = vadd.f32 %v2276, %v2436
        %v2438 = vpop.f32.mrf.mxu0
        %v2439 = vpop.f32.mrf.mxu0
        %v2440 = vadd.f32 %v2279, %v2439
        %v2441 = vpop.f32.mrf.mxu0
        %2442 = vmatprep.mubr.bf16.mxu0 %v1353
        %2443 = vmatmul.mubr.bf16.gmra.mxu0 %v1305
        %v2444 = vpop.f32.mrf.mxu0
        %v2445 = vadd.f32 %v2284, %v2444
        %v2446 = vpop.f32.mrf.mxu0
        %v2447 = vpop.f32.mrf.mxu0
        %v2448 = vadd.f32 %v2287, %v2447
        %v2449 = vpop.f32.mrf.mxu0
        %2450 = vmatprep.mubr.bf16.mxu0 %v1354
        %2451 = vmatmul.mubr.bf16.gmra.mxu0 %v1306
        %v2452 = vpop.f32.mrf.mxu0
        %v2453 = vadd.f32 %v2292, %v2452
        %v2454 = vpop.f32.mrf.mxu0
        %v2455 = vpop.f32.mrf.mxu0
        %v2456 = vadd.f32 %v2295, %v2455
        %v2457 = vpop.f32.mrf.mxu0
        %2458 = vmatprep.mubr.bf16.mxu0 %v1355
        %2459 = vmatmul.mubr.bf16.gmra.mxu0 %v1307
        %v2460 = vpop.f32.mrf.mxu0
        %v2461 = vadd.f32 %v2300, %v2460
        %v2462 = vpop.f32.mrf.mxu0
        %v2463 = vpop.f32.mrf.mxu0
        %v2464 = vadd.f32 %v2303, %v2463
        %v2465 = vpop.f32.mrf.mxu0
        %2466 = vmatprep.mubr.bf16.mxu0 %v1356
        %2467 = vmatmul.mubr.bf16.gmra.mxu0 %v1308
        %v2468 = vpop.f32.mrf.mxu0
        %v2469 = vadd.f32 %v2308, %v2468
        %v2470 = vpop.f32.mrf.mxu0
        %v2471 = vpop.f32.mrf.mxu0
        %v2472 = vadd.f32 %v2311, %v2471
        %v2473 = vpop.f32.mrf.mxu0
        %2474 = vmatprep.mubr.bf16.mxu0 %v1357
        %2475 = vmatmul.mubr.bf16.gmra.mxu0 %v1309
        %v2476 = vpop.f32.mrf.mxu0
        %v2477 = vadd.f32 %v2316, %v2476
        %v2478 = vpop.f32.mrf.mxu0
        %v2479 = vpop.f32.mrf.mxu0
        %v2480 = vadd.f32 %v2319, %v2479
        %v2481 = vpop.f32.mrf.mxu0
        %2482 = vmatprep.mubr.bf16.mxu0 %v1358
        %2483 = vmatmul.mubr.bf16.gmra.mxu0 %v1310
        %v2484 = vpop.f32.mrf.mxu0
        %v2485 = vadd.f32 %v2324, %v2484
        %v2486 = vpop.f32.mrf.mxu0
        %v2487 = vpop.f32.mrf.mxu0
        %v2488 = vadd.f32 %v2327, %v2487
        %v2489 = vpop.f32.mrf.mxu0
        %2490 = vmatprep.mubr.bf16.mxu0 %v1359
        %2491 = vmatmul.mubr.bf16.gmra.mxu0 %v1311
        %v2492 = vpop.f32.mrf.mxu0
        %v2493 = vadd.f32 %v2332, %v2492
        %v2494 = vpop.f32.mrf.mxu0
        %v2495 = vpop.f32.mrf.mxu0
        %v2496 = vadd.f32 %v2335, %v2495
        %v2497 = vpop.f32.mrf.mxu0
        %2498 = vmatprep.mubr.bf16.mxu0 %v1360
        %2499 = vmatmul.mubr.bf16.gmra.mxu0 %v1312
        %v2500 = vpop.f32.mrf.mxu0
        %v2501 = vadd.f32 %v2340, %v2500
        %v2502 = vpop.f32.mrf.mxu0
        %v2503 = vpop.f32.mrf.mxu0
        %v2504 = vadd.f32 %v2343, %v2503
        %v2505 = vpop.f32.mrf.mxu0
        %2506 = vdwg.mxu0
        %2507 = vmatprep.subr.bf16.mxu0 0
        %2508 = vmatpush1.bf16.msra.mxu0 %v2080
        %2509 = vmatprep.subr.bf16.mxu0 0
        %2510 = vmatpush1.bf16.msra.mxu0 %v2079
        %2511 = vmatprep.subr.bf16.mxu0 0
        %2512 = vmatpush1.bf16.msra.mxu0 %v2078
        %2513 = vmatprep.subr.bf16.mxu0 0
        %2514 = vmatpush1.bf16.msra.mxu0 %v2077
        %2515 = vmatprep.subr.bf16.mxu0 0
        %2516 = vmatpush1.bf16.msra.mxu0 %v2076
        %2517 = vmatprep.subr.bf16.mxu0 0
        %2518 = vmatpush1.bf16.msra.mxu0 %v2075
        %2519 = vmatprep.subr.bf16.mxu0 0
        %2520 = vmatpush1.bf16.msra.mxu0 %v2074
        %2521 = vmatprep.subr.bf16.mxu0 0
        %2522 = vmatpush1.bf16.msra.mxu0 %v2073
        %2523 = vmatprep.subr.bf16.mxu0 0
        %2524 = vmatpush2.bf16.msra.mxu0 %v2088
        %2525 = vmatprep.subr.bf16.mxu0 0
        %2526 = vmatpush2.bf16.msra.mxu0 %v2087
        %2527 = vmatprep.subr.bf16.mxu0 0
        %2528 = vmatpush2.bf16.msra.mxu0 %v2086
        %2529 = vmatprep.subr.bf16.mxu0 0
        %2530 = vmatpush2.bf16.msra.mxu0 %v2085
        %2531 = vmatprep.subr.bf16.mxu0 0
        %2532 = vmatpush2.bf16.msra.mxu0 %v2084
        %2533 = vmatprep.subr.bf16.mxu0 0
        %2534 = vmatpush2.bf16.msra.mxu0 %v2083
        %2535 = vmatprep.subr.bf16.mxu0 0
        %2536 = vmatpush2.bf16.msra.mxu0 %v2082
        %2537 = vmatprep.subr.bf16.mxu0 0
        %2538 = vmatpush2.bf16.msra.mxu0 %v2081
        %2539 = vmatprep.mubr.bf16.mxu0 %v1441
        %2540 = vmatmul.mubr.bf16.gmra.mxu0 %v1393
        %v2541 = vpop.f32.mrf.mxu0
        %v2542 = vadd.f32 %v2381, %v2541
        %v2543 = vpop.f32.mrf.mxu0
        %v2544 = vpop.f32.mrf.mxu0
        %v2545 = vadd.f32 %v2384, %v2544
        %v2546 = vpop.f32.mrf.mxu0
        %2547 = vmatprep.mubr.bf16.mxu0 %v1442
        %2548 = vmatmul.mubr.bf16.gmra.mxu0 %v1394
        %v2549 = vpop.f32.mrf.mxu0
        %v2550 = vadd.f32 %v2389, %v2549
        %v2551 = vpop.f32.mrf.mxu0
        %v2552 = vpop.f32.mrf.mxu0
        %v2553 = vadd.f32 %v2392, %v2552
        %v2554 = vpop.f32.mrf.mxu0
        %2555 = vmatprep.mubr.bf16.mxu0 %v1443
        %2556 = vmatmul.mubr.bf16.gmra.mxu0 %v1395
        %v2557 = vpop.f32.mrf.mxu0
        %v2558 = vadd.f32 %v2397, %v2557
        %v2559 = vpop.f32.mrf.mxu0
        %v2560 = vpop.f32.mrf.mxu0
        %v2561 = vadd.f32 %v2400, %v2560
        %v2562 = vpop.f32.mrf.mxu0
        %2563 = vmatprep.mubr.bf16.mxu0 %v1444
        %2564 = vmatmul.mubr.bf16.gmra.mxu0 %v1396
        %v2565 = vpop.f32.mrf.mxu0
        %v2566 = vadd.f32 %v2405, %v2565
        %v2567 = vpop.f32.mrf.mxu0
        %v2568 = vpop.f32.mrf.mxu0
        %v2569 = vadd.f32 %v2408, %v2568
        %v2570 = vpop.f32.mrf.mxu0
        %2571 = vmatprep.mubr.bf16.mxu0 %v1445
        %2572 = vmatmul.mubr.bf16.gmra.mxu0 %v1397
        %v2573 = vpop.f32.mrf.mxu0
        %v2574 = vadd.f32 %v2413, %v2573
        %v2575 = vpop.f32.mrf.mxu0
        %v2576 = vpop.f32.mrf.mxu0
        %v2577 = vadd.f32 %v2416, %v2576
        %v2578 = vpop.f32.mrf.mxu0
        %2579 = vmatprep.mubr.bf16.mxu0 %v1446
        %2580 = vmatmul.mubr.bf16.gmra.mxu0 %v1398
        %v2581 = vpop.f32.mrf.mxu0
        %v2582 = vadd.f32 %v2421, %v2581
        %v2583 = vpop.f32.mrf.mxu0
        %v2584 = vpop.f32.mrf.mxu0
        %v2585 = vadd.f32 %v2424, %v2584
        %v2586 = vpop.f32.mrf.mxu0
        %2587 = vmatprep.mubr.bf16.mxu0 %v1447
        %2588 = vmatmul.mubr.bf16.gmra.mxu0 %v1399
        %v2589 = vpop.f32.mrf.mxu0
        %v2590 = vadd.f32 %v2429, %v2589
        %v2591 = vpop.f32.mrf.mxu0
        %v2592 = vpop.f32.mrf.mxu0
        %v2593 = vadd.f32 %v2432, %v2592
        %v2594 = vpop.f32.mrf.mxu0
        %2595 = vmatprep.mubr.bf16.mxu0 %v1448
        %2596 = vmatmul.mubr.bf16.gmra.mxu0 %v1400
        %v2597 = vpop.f32.mrf.mxu0
        %v2598 = vadd.f32 %v2437, %v2597
        %v2599 = vpop.f32.mrf.mxu0
        %v2600 = vpop.f32.mrf.mxu0
        %v2601 = vadd.f32 %v2440, %v2600
        %v2602 = vpop.f32.mrf.mxu0
        %2603 = vmatprep.mubr.bf16.mxu0 %v1449
        %2604 = vmatmul.mubr.bf16.gmra.mxu0 %v1401
        %v2605 = vpop.f32.mrf.mxu0
        %v2606 = vadd.f32 %v2445, %v2605
        %v2607 = vpop.f32.mrf.mxu0
        %v2608 = vpop.f32.mrf.mxu0
        %v2609 = vadd.f32 %v2448, %v2608
        %v2610 = vpop.f32.mrf.mxu0
        %2611 = vmatprep.mubr.bf16.mxu0 %v1450
        %2612 = vmatmul.mubr.bf16.gmra.mxu0 %v1402
        %v2613 = vpop.f32.mrf.mxu0
        %v2614 = vadd.f32 %v2453, %v2613
        %v2615 = vpop.f32.mrf.mxu0
        %v2616 = vpop.f32.mrf.mxu0
        %v2617 = vadd.f32 %v2456, %v2616
        %v2618 = vpop.f32.mrf.mxu0
        %2619 = vmatprep.mubr.bf16.mxu0 %v1451
        %2620 = vmatmul.mubr.bf16.gmra.mxu0 %v1403
        %v2621 = vpop.f32.mrf.mxu0
        %v2622 = vadd.f32 %v2461, %v2621
        %v2623 = vpop.f32.mrf.mxu0
        %v2624 = vpop.f32.mrf.mxu0
        %v2625 = vadd.f32 %v2464, %v2624
        %v2626 = vpop.f32.mrf.mxu0
        %2627 = vmatprep.mubr.bf16.mxu0 %v1452
        %2628 = vmatmul.mubr.bf16.gmra.mxu0 %v1404
        %v2629 = vpop.f32.mrf.mxu0
        %v2630 = vadd.f32 %v2469, %v2629
        %v2631 = vpop.f32.mrf.mxu0
        %v2632 = vpop.f32.mrf.mxu0
        %v2633 = vadd.f32 %v2472, %v2632
        %v2634 = vpop.f32.mrf.mxu0
        %2635 = vmatprep.mubr.bf16.mxu0 %v1453
        %2636 = vmatmul.mubr.bf16.gmra.mxu0 %v1405
        %v2637 = vpop.f32.mrf.mxu0
        %v2638 = vadd.f32 %v2477, %v2637
        %v2639 = vpop.f32.mrf.mxu0
        %v2640 = vpop.f32.mrf.mxu0
        %v2641 = vadd.f32 %v2480, %v2640
        %v2642 = vpop.f32.mrf.mxu0
        %2643 = vmatprep.mubr.bf16.mxu0 %v1454
        %2644 = vmatmul.mubr.bf16.gmra.mxu0 %v1406
        %v2645 = vpop.f32.mrf.mxu0
        %v2646 = vadd.f32 %v2485, %v2645
        %v2647 = vpop.f32.mrf.mxu0
        %v2648 = vpop.f32.mrf.mxu0
        %v2649 = vadd.f32 %v2488, %v2648
        %v2650 = vpop.f32.mrf.mxu0
        %2651 = vmatprep.mubr.bf16.mxu0 %v1455
        %2652 = vmatmul.mubr.bf16.gmra.mxu0 %v1407
        %v2653 = vpop.f32.mrf.mxu0
        %v2654 = vadd.f32 %v2493, %v2653
        %v2655 = vpop.f32.mrf.mxu0
        %v2656 = vpop.f32.mrf.mxu0
        %v2657 = vadd.f32 %v2496, %v2656
        %v2658 = vpop.f32.mrf.mxu0
        %2659 = vmatprep.mubr.bf16.mxu0 %v1456
        %2660 = vmatmul.mubr.bf16.gmra.mxu0 %v1408
        %v2661 = vpop.f32.mrf.mxu0
        %v2662 = vadd.f32 %v2501, %v2661
        %v2663 = vpop.f32.mrf.mxu0
        %v2664 = vpop.f32.mrf.mxu0
        %v2665 = vadd.f32 %v2504, %v2664
        %v2666 = vpop.f32.mrf.mxu0
        %2667 = vdwg.mxu0
        %2668 = vmatprep.subr.bf16.mxu0 0
        %2669 = vmatpush1.bf16.msra.mxu0 %v2096
        %2670 = vmatprep.subr.bf16.mxu0 0
        %2671 = vmatpush1.bf16.msra.mxu0 %v2095
        %2672 = vmatprep.subr.bf16.mxu0 0
        %2673 = vmatpush1.bf16.msra.mxu0 %v2094
        %2674 = vmatprep.subr.bf16.mxu0 0
        %2675 = vmatpush1.bf16.msra.mxu0 %v2093
        %2676 = vmatprep.subr.bf16.mxu0 0
        %2677 = vmatpush1.bf16.msra.mxu0 %v2092
        %2678 = vmatprep.subr.bf16.mxu0 0
        %2679 = vmatpush1.bf16.msra.mxu0 %v2091
        %2680 = vmatprep.subr.bf16.mxu0 0
        %2681 = vmatpush1.bf16.msra.mxu0 %v2090
        %2682 = vmatprep.subr.bf16.mxu0 0
        %2683 = vmatpush1.bf16.msra.mxu0 %v2089
        %2684 = vmatprep.subr.bf16.mxu0 0
        %2685 = vmatpush2.bf16.msra.mxu0 %v2104
        %2686 = vmatprep.subr.bf16.mxu0 0
        %2687 = vmatpush2.bf16.msra.mxu0 %v2103
        %2688 = vmatprep.subr.bf16.mxu0 0
        %2689 = vmatpush2.bf16.msra.mxu0 %v2102
        %2690 = vmatprep.subr.bf16.mxu0 0
        %2691 = vmatpush2.bf16.msra.mxu0 %v2101
        %2692 = vmatprep.subr.bf16.mxu0 0
        %2693 = vmatpush2.bf16.msra.mxu0 %v2100
        %2694 = vmatprep.subr.bf16.mxu0 0
        %2695 = vmatpush2.bf16.msra.mxu0 %v2099
        %2696 = vmatprep.subr.bf16.mxu0 0
        %2697 = vmatpush2.bf16.msra.mxu0 %v2098
        %2698 = vmatprep.subr.bf16.mxu0 0
        %2699 = vmatpush2.bf16.msra.mxu0 %v2097
        %2700 = vmatprep.mubr.bf16.mxu0 %v1538
        %2701 = vmatmul.mubr.bf16.gmra.mxu0 %v1490
        %v2702 = vpop.f32.mrf.mxu0
        %v2703 = vadd.f32 %v2542, %v2702
        %v2704 = vpop.f32.mrf.mxu0
        %v2705 = vpop.f32.mrf.mxu0
        %v2706 = vadd.f32 %v2545, %v2705
        %v2707 = vpop.f32.mrf.mxu0
        %2708 = vmatprep.mubr.bf16.mxu0 %v1539
        %2709 = vmatmul.mubr.bf16.gmra.mxu0 %v1491
        %v2710 = vpop.f32.mrf.mxu0
        %v2711 = vadd.f32 %v2550, %v2710
        %v2712 = vpop.f32.mrf.mxu0
        %v2713 = vpop.f32.mrf.mxu0
        %v2714 = vadd.f32 %v2553, %v2713
        %v2715 = vpop.f32.mrf.mxu0
        %2716 = vmatprep.mubr.bf16.mxu0 %v1540
        %2717 = vmatmul.mubr.bf16.gmra.mxu0 %v1492
        %v2718 = vpop.f32.mrf.mxu0
        %v2719 = vadd.f32 %v2558, %v2718
        %v2720 = vpop.f32.mrf.mxu0
        %v2721 = vpop.f32.mrf.mxu0
        %v2722 = vadd.f32 %v2561, %v2721
        %v2723 = vpop.f32.mrf.mxu0
        %2724 = vmatprep.mubr.bf16.mxu0 %v1541
        %2725 = vmatmul.mubr.bf16.gmra.mxu0 %v1493
        %v2726 = vpop.f32.mrf.mxu0
        %v2727 = vadd.f32 %v2566, %v2726
        %v2728 = vpop.f32.mrf.mxu0
        %v2729 = vpop.f32.mrf.mxu0
        %v2730 = vadd.f32 %v2569, %v2729
        %v2731 = vpop.f32.mrf.mxu0
        %2732 = vmatprep.mubr.bf16.mxu0 %v1542
        %2733 = vmatmul.mubr.bf16.gmra.mxu0 %v1494
        %v2734 = vpop.f32.mrf.mxu0
        %v2735 = vadd.f32 %v2574, %v2734
        %v2736 = vpop.f32.mrf.mxu0
        %v2737 = vpop.f32.mrf.mxu0
        %v2738 = vadd.f32 %v2577, %v2737
        %v2739 = vpop.f32.mrf.mxu0
        %2740 = vmatprep.mubr.bf16.mxu0 %v1543
        %2741 = vmatmul.mubr.bf16.gmra.mxu0 %v1495
        %v2742 = vpop.f32.mrf.mxu0
        %v2743 = vadd.f32 %v2582, %v2742
        %v2744 = vpop.f32.mrf.mxu0
        %v2745 = vpop.f32.mrf.mxu0
        %v2746 = vadd.f32 %v2585, %v2745
        %v2747 = vpop.f32.mrf.mxu0
        %2748 = vmatprep.mubr.bf16.mxu0 %v1544
        %2749 = vmatmul.mubr.bf16.gmra.mxu0 %v1496
        %v2750 = vpop.f32.mrf.mxu0
        %v2751 = vadd.f32 %v2590, %v2750
        %v2752 = vpop.f32.mrf.mxu0
        %v2753 = vpop.f32.mrf.mxu0
        %v2754 = vadd.f32 %v2593, %v2753
        %v2755 = vpop.f32.mrf.mxu0
        %2756 = vmatprep.mubr.bf16.mxu0 %v1545
        %2757 = vmatmul.mubr.bf16.gmra.mxu0 %v1497
        %v2758 = vpop.f32.mrf.mxu0
        %v2759 = vadd.f32 %v2598, %v2758
        %v2760 = vpop.f32.mrf.mxu0
        %v2761 = vpop.f32.mrf.mxu0
        %v2762 = vadd.f32 %v2601, %v2761
        %v2763 = vpop.f32.mrf.mxu0
        %2764 = vmatprep.mubr.bf16.mxu0 %v1546
        %2765 = vmatmul.mubr.bf16.gmra.mxu0 %v1498
        %v2766 = vpop.f32.mrf.mxu0
        %v2767 = vadd.f32 %v2606, %v2766
        %v2768 = vpop.f32.mrf.mxu0
        %v2769 = vpop.f32.mrf.mxu0
        %v2770 = vadd.f32 %v2609, %v2769
        %v2771 = vpop.f32.mrf.mxu0
        %2772 = vmatprep.mubr.bf16.mxu0 %v1547
        %2773 = vmatmul.mubr.bf16.gmra.mxu0 %v1499
        %v2774 = vpop.f32.mrf.mxu0
        %v2775 = vadd.f32 %v2614, %v2774
        %v2776 = vpop.f32.mrf.mxu0
        %v2777 = vpop.f32.mrf.mxu0
        %v2778 = vadd.f32 %v2617, %v2777
        %v2779 = vpop.f32.mrf.mxu0
        %2780 = vmatprep.mubr.bf16.mxu0 %v1548
        %2781 = vmatmul.mubr.bf16.gmra.mxu0 %v1500
        %v2782 = vpop.f32.mrf.mxu0
        %v2783 = vadd.f32 %v2622, %v2782
        %v2784 = vpop.f32.mrf.mxu0
        %v2785 = vpop.f32.mrf.mxu0
        %v2786 = vadd.f32 %v2625, %v2785
        %v2787 = vpop.f32.mrf.mxu0
        %2788 = vmatprep.mubr.bf16.mxu0 %v1549
        %2789 = vmatmul.mubr.bf16.gmra.mxu0 %v1501
        %v2790 = vpop.f32.mrf.mxu0
        %v2791 = vadd.f32 %v2630, %v2790
        %v2792 = vpop.f32.mrf.mxu0
        %v2793 = vpop.f32.mrf.mxu0
        %v2794 = vadd.f32 %v2633, %v2793
        %v2795 = vpop.f32.mrf.mxu0
        %2796 = vmatprep.mubr.bf16.mxu0 %v1550
        %2797 = vmatmul.mubr.bf16.gmra.mxu0 %v1502
        %v2798 = vpop.f32.mrf.mxu0
        %v2799 = vadd.f32 %v2638, %v2798
        %v2800 = vpop.f32.mrf.mxu0
        %v2801 = vpop.f32.mrf.mxu0
        %v2802 = vadd.f32 %v2641, %v2801
        %v2803 = vpop.f32.mrf.mxu0
        %2804 = vmatprep.mubr.bf16.mxu0 %v1551
        %2805 = vmatmul.mubr.bf16.gmra.mxu0 %v1503
        %v2806 = vpop.f32.mrf.mxu0
        %v2807 = vadd.f32 %v2646, %v2806
        %v2808 = vpop.f32.mrf.mxu0
        %v2809 = vpop.f32.mrf.mxu0
        %v2810 = vadd.f32 %v2649, %v2809
        %v2811 = vpop.f32.mrf.mxu0
        %2812 = vmatprep.mubr.bf16.mxu0 %v1552
        %2813 = vmatmul.mubr.bf16.gmra.mxu0 %v1504
        %v2814 = vpop.f32.mrf.mxu0
        %v2815 = vadd.f32 %v2654, %v2814
        %v2816 = vpop.f32.mrf.mxu0
        %v2817 = vpop.f32.mrf.mxu0
        %v2818 = vadd.f32 %v2657, %v2817
        %v2819 = vpop.f32.mrf.mxu0
        %2820 = vmatprep.mubr.bf16.mxu0 %v1553
        %2821 = vmatmul.mubr.bf16.gmra.mxu0 %v1505
        %v2822 = vpop.f32.mrf.mxu0
        %v2823 = vadd.f32 %v2662, %v2822
        %v2824 = vpop.f32.mrf.mxu0
        %v2825 = vpop.f32.mrf.mxu0
        %v2826 = vadd.f32 %v2665, %v2825
        %v2827 = vpop.f32.mrf.mxu0
        %2828 = vdwg.mxu0
        %2829 = vmatprep.subr.bf16.mxu0 0
        %2830 = vmatpush1.bf16.msra.mxu0 %v2112
        %2831 = vmatprep.subr.bf16.mxu0 0
        %2832 = vmatpush1.bf16.msra.mxu0 %v2111
        %2833 = vmatprep.subr.bf16.mxu0 0
        %2834 = vmatpush1.bf16.msra.mxu0 %v2110
        %2835 = vmatprep.subr.bf16.mxu0 0
        %2836 = vmatpush1.bf16.msra.mxu0 %v2109
        %2837 = vmatprep.subr.bf16.mxu0 0
        %2838 = vmatpush1.bf16.msra.mxu0 %v2108
        %2839 = vmatprep.subr.bf16.mxu0 0
        %2840 = vmatpush1.bf16.msra.mxu0 %v2107
        %2841 = vmatprep.subr.bf16.mxu0 0
        %2842 = vmatpush1.bf16.msra.mxu0 %v2106
        %2843 = vmatprep.subr.bf16.mxu0 0
        %2844 = vmatpush1.bf16.msra.mxu0 %v2105
        %2845 = vmatprep.subr.bf16.mxu0 0
        %2846 = vmatpush2.bf16.msra.mxu0 0
        %2847 = vmatprep.subr.bf16.mxu0 0
        %2848 = vmatpush2.bf16.msra.mxu0 0
        %2849 = vmatprep.subr.bf16.mxu0 0
        %2850 = vmatpush2.bf16.msra.mxu0 0
        %2851 = vmatprep.subr.bf16.mxu0 0
        %2852 = vmatpush2.bf16.msra.mxu0 0
        %2853 = vmatprep.subr.bf16.mxu0 0
        %2854 = vmatpush2.bf16.msra.mxu0 0
        %2855 = vmatprep.subr.bf16.mxu0 0
        %2856 = vmatpush2.bf16.msra.mxu0 0
        %2857 = vmatprep.subr.bf16.mxu0 0
        %2858 = vmatpush2.bf16.msra.mxu0 0
        %2859 = vmatprep.subr.bf16.mxu0 0
        %2860 = vmatpush2.bf16.msra.mxu0 0
        %2861 = vmatprep.mubr.bf16.mxu0 0
        %2862 = vmatmul.mubr.bf16.gmra.mxu0 %v1586
        %v2863 = vpop.f32.mrf.mxu0
        %v2864 = vadd.f32 %v2703, %v2863
        %v2865 = vpop.f32.mrf.mxu0
        %v2866 = vpop.f32.mrf.mxu0
        %v2867 = vadd.f32 %v2706, %v2866
        %v2868 = vpop.f32.mrf.mxu0
        %2869 = vmatprep.mubr.bf16.mxu0 0
        %2870 = vmatmul.mubr.bf16.gmra.mxu0 %v1587
        %v2871 = vpop.f32.mrf.mxu0
        %v2872 = vadd.f32 %v2711, %v2871
        %v2873 = vpop.f32.mrf.mxu0
        %v2874 = vpop.f32.mrf.mxu0
        %v2875 = vadd.f32 %v2714, %v2874
        %v2876 = vpop.f32.mrf.mxu0
        %2877 = vmatprep.mubr.bf16.mxu0 0
        %2878 = vmatmul.mubr.bf16.gmra.mxu0 %v1588
        %v2879 = vpop.f32.mrf.mxu0
        %v2880 = vadd.f32 %v2719, %v2879
        %v2881 = vpop.f32.mrf.mxu0
        %v2882 = vpop.f32.mrf.mxu0
        %v2883 = vadd.f32 %v2722, %v2882
        %v2884 = vpop.f32.mrf.mxu0
        %2885 = vmatprep.mubr.bf16.mxu0 0
        %2886 = vmatmul.mubr.bf16.gmra.mxu0 %v1589
        %v2887 = vpop.f32.mrf.mxu0
        %v2888 = vadd.f32 %v2727, %v2887
        %v2889 = vpop.f32.mrf.mxu0
        %v2890 = vpop.f32.mrf.mxu0
        %v2891 = vadd.f32 %v2730, %v2890
        %v2892 = vpop.f32.mrf.mxu0
        %2893 = vmatprep.mubr.bf16.mxu0 0
        %2894 = vmatmul.mubr.bf16.gmra.mxu0 %v1590
        %v2895 = vpop.f32.mrf.mxu0
        %v2896 = vadd.f32 %v2735, %v2895
        %v2897 = vpop.f32.mrf.mxu0
        %v2898 = vpop.f32.mrf.mxu0
        %v2899 = vadd.f32 %v2738, %v2898
        %v2900 = vpop.f32.mrf.mxu0
        %2901 = vmatprep.mubr.bf16.mxu0 0
        %2902 = vmatmul.mubr.bf16.gmra.mxu0 %v1591
        %v2903 = vpop.f32.mrf.mxu0
        %v2904 = vadd.f32 %v2743, %v2903
        %v2905 = vpop.f32.mrf.mxu0
        %v2906 = vpop.f32.mrf.mxu0
        %v2907 = vadd.f32 %v2746, %v2906
        %v2908 = vpop.f32.mrf.mxu0
        %2909 = vmatprep.mubr.bf16.mxu0 0
        %2910 = vmatmul.mubr.bf16.gmra.mxu0 %v1592
        %v2911 = vpop.f32.mrf.mxu0
        %v2912 = vadd.f32 %v2751, %v2911
        %v2913 = vpop.f32.mrf.mxu0
        %v2914 = vpop.f32.mrf.mxu0
        %v2915 = vadd.f32 %v2754, %v2914
        %v2916 = vpop.f32.mrf.mxu0
        %2917 = vmatprep.mubr.bf16.mxu0 0
        %2918 = vmatmul.mubr.bf16.gmra.mxu0 %v1593
        %v2919 = vpop.f32.mrf.mxu0
        %v2920 = vadd.f32 %v2759, %v2919
        %v2921 = vpop.f32.mrf.mxu0
        %v2922 = vpop.f32.mrf.mxu0
        %v2923 = vadd.f32 %v2762, %v2922
        %v2924 = vpop.f32.mrf.mxu0
        %2925 = vmatprep.mubr.bf16.mxu0 0
        %2926 = vmatmul.mubr.bf16.gmra.mxu0 %v1594
        %v2927 = vpop.f32.mrf.mxu0
        %v2928 = vadd.f32 %v2767, %v2927
        %v2929 = vpop.f32.mrf.mxu0
        %v2930 = vpop.f32.mrf.mxu0
        %v2931 = vadd.f32 %v2770, %v2930
        %v2932 = vpop.f32.mrf.mxu0
        %2933 = vmatprep.mubr.bf16.mxu0 0
        %2934 = vmatmul.mubr.bf16.gmra.mxu0 %v1595
        %v2935 = vpop.f32.mrf.mxu0
        %v2936 = vadd.f32 %v2775, %v2935
        %v2937 = vpop.f32.mrf.mxu0
        %v2938 = vpop.f32.mrf.mxu0
        %v2939 = vadd.f32 %v2778, %v2938
        %v2940 = vpop.f32.mrf.mxu0
        %2941 = vmatprep.mubr.bf16.mxu0 0
        %2942 = vmatmul.mubr.bf16.gmra.mxu0 %v1596
        %v2943 = vpop.f32.mrf.mxu0
        %v2944 = vadd.f32 %v2783, %v2943
        %v2945 = vpop.f32.mrf.mxu0
        %v2946 = vpop.f32.mrf.mxu0
        %v2947 = vadd.f32 %v2786, %v2946
        %v2948 = vpop.f32.mrf.mxu0
        %2949 = vmatprep.mubr.bf16.mxu0 0
        %2950 = vmatmul.mubr.bf16.gmra.mxu0 %v1597
        %v2951 = vpop.f32.mrf.mxu0
        %v2952 = vadd.f32 %v2791, %v2951
        %v2953 = vpop.f32.mrf.mxu0
        %v2954 = vpop.f32.mrf.mxu0
        %v2955 = vadd.f32 %v2794, %v2954
        %v2956 = vpop.f32.mrf.mxu0
        %2957 = vmatprep.mubr.bf16.mxu0 0
        %2958 = vmatmul.mubr.bf16.gmra.mxu0 %v1598
        %v2959 = vpop.f32.mrf.mxu0
        %v2960 = vadd.f32 %v2799, %v2959
        %v2961 = vpop.f32.mrf.mxu0
        %v2962 = vpop.f32.mrf.mxu0
        %v2963 = vadd.f32 %v2802, %v2962
        %v2964 = vpop.f32.mrf.mxu0
        %2965 = vmatprep.mubr.bf16.mxu0 0
        %2966 = vmatmul.mubr.bf16.gmra.mxu0 %v1599
        %v2967 = vpop.f32.mrf.mxu0
        %v2968 = vadd.f32 %v2807, %v2967
        %v2969 = vpop.f32.mrf.mxu0
        %v2970 = vpop.f32.mrf.mxu0
        %v2971 = vadd.f32 %v2810, %v2970
        %v2972 = vpop.f32.mrf.mxu0
        %2973 = vmatprep.mubr.bf16.mxu0 0
        %2974 = vmatmul.mubr.bf16.gmra.mxu0 %v1600
        %v2975 = vpop.f32.mrf.mxu0
        %v2976 = vadd.f32 %v2815, %v2975
        %v2977 = vpop.f32.mrf.mxu0
        %v2978 = vpop.f32.mrf.mxu0
        %v2979 = vadd.f32 %v2818, %v2978
        %v2980 = vpop.f32.mrf.mxu0
        %2981 = vmatprep.mubr.bf16.mxu0 0
        %2982 = vmatmul.mubr.bf16.gmra.mxu0 %v1601
        %v2983 = vpop.f32.mrf.mxu0
        %v2984 = vadd.f32 %v2823, %v2983
        %v2985 = vpop.f32.mrf.mxu0
        %v2986 = vpop.f32.mrf.mxu0
        %v2987 = vadd.f32 %v2826, %v2986
        %v2988 = vpop.f32.mrf.mxu0
        %2989 = vdwg.mxu0
        %v2990 = vlaneseq
        %v2991 = vand.u32 %v2990, 127
        %vm2992 = vcmp.ge.s32.totalorder %v2991, 75
        %vm2993 = vcmp.lt.s32.totalorder %v2991, 123
        %vm2994 = vmand %vm2992, %vm2993
        %v2995 = vtanh.pop %v2864
        %v2996 = vtanh.pop %v2867
        %v2997 = vtanh.pop %v2872
        %v2998 = vtanh.pop %v2875
        %v2999 = vtanh.pop %v2880
        %v3000 = vtanh.pop %v2883
        %v3001 = vtanh.pop %v2888
        %v3002 = vtanh.pop %v2891
        %v3003 = vtanh.pop %v2896
        %v3004 = vtanh.pop %v2899
        %v3005 = vtanh.pop %v2904
        %v3006 = vtanh.pop %v2907
        %v3007 = vtanh.pop %v2912
        %v3008 = vtanh.pop %v2915
        %v3009 = vtanh.pop %v2920
        %v3010 = vtanh.pop %v2923
        %v3011 = vtanh.pop %v2928
        %v3012 = vtanh.pop %v2931
        %v3013 = vtanh.pop %v2936
        %v3014 = vtanh.pop %v2939
        %v3015 = vtanh.pop %v2944
        %v3016 = vtanh.pop %v2947
        %v3017 = vtanh.pop %v2952
        %v3018 = vtanh.pop %v2955
        %v3019 = vtanh.pop %v2960
        %v3020 = vtanh.pop %v2963
        %v3021 = vtanh.pop %v2968
        %v3022 = vtanh.pop %v2971
        %v3023 = vtanh.pop %v2976
        %v3024 = vtanh.pop %v2979
        %v3025 = vtanh.pop %v2984
        %v3026 = vtanh.pop %v2987
        %v3027 = vsel %vm2994, %v2995, %v2864
        %v3028 = vsel %vm2994, %v2996, %v2867
        %v3029 = vsel %vm2994, %v2997, %v2872
        %v3030 = vsel %vm2994, %v2998, %v2875
        %v3031 = vsel %vm2994, %v2999, %v2880
        %v3032 = vsel %vm2994, %v3000, %v2883
        %v3033 = vsel %vm2994, %v3001, %v2888
        %v3034 = vsel %vm2994, %v3002, %v2891
        %v3035 = vsel %vm2994, %v3003, %v2896
        %v3036 = vsel %vm2994, %v3004, %v2899
        %v3037 = vsel %vm2994, %v3005, %v2904
        %v3038 = vsel %vm2994, %v3006, %v2907
        %v3039 = vsel %vm2994, %v3007, %v2912
        %v3040 = vsel %vm2994, %v3008, %v2915
        %v3041 = vsel %vm2994, %v3009, %v2920
        %v3042 = vsel %vm2994, %v3010, %v2923
        %v3043 = vsel %vm2994, %v3011, %v2928
        %v3044 = vsel %vm2994, %v3012, %v2931
        %v3045 = vsel %vm2994, %v3013, %v2936
        %v3046 = vsel %vm2994, %v3014, %v2939
        %v3047 = vsel %vm2994, %v3015, %v2944
        %v3048 = vsel %vm2994, %v3016, %v2947
        %v3049 = vsel %vm2994, %v3017, %v2952
        %v3050 = vsel %vm2994, %v3018, %v2955
        %v3051 = vsel %vm2994, %v3019, %v2960
        %v3052 = vsel %vm2994, %v3020, %v2963
        %v3053 = vsel %vm2994, %v3021, %v2968
        %v3054 = vsel %vm2994, %v3022, %v2971
        %v3055 = vsel %vm2994, %v3023, %v2976
        %v3056 = vsel %vm2994, %v3024, %v2979
        %v3057 = vsel %vm2994, %v3025, %v2984
        %v3058 = vsel %vm2994, %v3026, %v2987
        %3059 = vst [vmem:[%s217] sm:$0xff] %v3027
        %3060 = vst [vmem:[%s217 + $0x8] sm:$0xff] %v3028
        %3061 = vst [vmem:[%s217 + $0x10] sm:$0xff] %v3029
        %3062 = vst [vmem:[%s217 + $0x18] sm:$0xff] %v3030
        %3063 = vst [vmem:[%s217 + $0x20] sm:$0xff] %v3031
        %3064 = vst [vmem:[%s217 + $0x28] sm:$0xff] %v3032
        %3065 = vst [vmem:[%s217 + $0x30] sm:$0xff] %v3033
        %3066 = vst [vmem:[%s217 + $0x38] sm:$0xff] %v3034
        %3067 = vst [vmem:[%s217 + $0x40] sm:$0xff] %v3035
        %3068 = vst [vmem:[%s217 + $0x48] sm:$0xff] %v3036
        %3069 = vst [vmem:[%s217 + $0x50] sm:$0xff] %v3037
        %3070 = vst [vmem:[%s217 + $0x58] sm:$0xff] %v3038
        %3071 = vst [vmem:[%s217 + $0x60] sm:$0xff] %v3039
        %3072 = vst [vmem:[%s217 + $0x68] sm:$0xff] %v3040
        %3073 = vst [vmem:[%s217 + $0x70] sm:$0xff] %v3041
        %3074 = vst [vmem:[%s217 + $0x78] sm:$0xff] %v3042
        %3075 = vst [vmem:[%s217 + $0x80] sm:$0xff] %v3043
        %3076 = vst [vmem:[%s217 + $0x88] sm:$0xff] %v3044
        %3077 = vst [vmem:[%s217 + $0x90] sm:$0xff] %v3045
        %3078 = vst [vmem:[%s217 + $0x98] sm:$0xff] %v3046
        %3079 = vst [vmem:[%s217 + $0xa0] sm:$0xff] %v3047
        %3080 = vst [vmem:[%s217 + $0xa8] sm:$0xff] %v3048
        %3081 = vst [vmem:[%s217 + $0xb0] sm:$0xff] %v3049
        %3082 = vst [vmem:[%s217 + $0xb8] sm:$0xff] %v3050
        %3083 = vst [vmem:[%s217 + $0xc0] sm:$0xff] %v3051
        %3084 = vst [vmem:[%s217 + $0xc8] sm:$0xff] %v3052
        %3085 = vst [vmem:[%s217 + $0xd0] sm:$0xff] %v3053
        %3086 = vst [vmem:[%s217 + $0xd8] sm:$0xff] %v3054
        %3087 = vst [vmem:[%s217 + $0xe0] sm:$0xff] %v3055
        %3088 = vst [vmem:[%s217 + $0xe8] sm:$0xff] %v3056
        %3089 = vst [vmem:[%s217 + $0xf0] sm:$0xff] %v3057
        %3090 = vst [vmem:[%s217 + $0xf8] sm:$0xff] %v3058
        %s3091 = sand.u32 %s137, 1
        %s3092 = scalar_lea.sflag [#allocation4], %s3091
        %s3093 = sand.u32 %s137, 1
        %s3094 = smul.addr %s3093, 256
        %s3095 = scalar_lea.vmem [#allocation3], %s3094
        // Predicated region
        $region41: #{tpu_custom_call.1} parent=39 // pred_check
          %p3096 = pneg %p147
        $region42: #{tpu_custom_call.1} parent=39 // pred_check_branch
          %3098 = sbr.rel (%p3096) target = $region44
        $region43: #{tpu_custom_call.1} parent=39 // pred_region
          %s3100 = ssub.s32 4096, 4096
          %3101 = vsyncadd %s3092, %s3100
          %s3102 = smul.addr %s19, 32
          %s3103 = smul.addr %s3102, 128
          %s3104 = scalar_lea.hbm %s5, %s3103
          %s3105 = sshll.u32 %s3095, 4
          %s3106 = int_to_ptr.vmem [resolvable:$true] %s3105
          %3111 = dma.vmem_to_hbm [thread:$0]  %s3106, 4096, %s3104, %s3092, 128, 128, 8
        $region44: #{tpu_custom_call.1} parent=39 // pred_fallthru
          _
      $region40: #{tpu_custom_call.1} parent=5 // pred_fallthru
        _
      %p3112 = scmp.le.s32.totalorder 2, %s14
      // Predicated region
      $region45: #{tpu_custom_call.1} parent=5 // pred_check
        %p3113 = pneg %p3112
      $region46: #{tpu_custom_call.1} parent=5 // pred_check_branch
        %3115 = sbr.rel (%p3113) target = $region48
      $region47: #{tpu_custom_call.1} parent=5 // pred_region
        %s3116 = ssub.s32 %s14, 2
        // Predicated region
        $region49: #{tpu_custom_call.1} parent=47 // pred_check
          %p3117 = pneg %p153
        $region50: #{tpu_custom_call.1} parent=47 // pred_check_branch
          %3119 = sbr.rel (%p3117) target = $region52
        $region51: #{tpu_custom_call.1} parent=47 // pred_region
          %s3120 = sand.u32 %s138, 1
          %s3121 = scalar_lea.sflag [#allocation4], %s3120
          %s3122 = sand.u32 %s138, 1
          %s3123 = smul.addr %s3122, 256
          %s3124 = scalar_lea.vmem [#allocation3], %s3123
          %3125 = dma.done %s3121, 4096
        $region52: #{tpu_custom_call.1} parent=47 // pred_fallthru
          _
      $region48: #{tpu_custom_call.1} parent=5 // pred_fallthru
        _
    $region6: #{tpu_custom_call.1} parent=1 // loop_footer
      %s18 = sadd.s32 1, %s14
    $region7: #{tpu_custom_call.1} parent=1 // loop_footer_branch
      %13 = sbr.rel target = $region3
    $region8: #{tpu_custom_call.1} parent=1 // loop_exit
      _
    %3126 = vsyncpa [#allocation4], 1
    %s3127 = scalar_lea.sflag [#allocation4], 1
    %3128 = vsyncpa %s3127, 1

</llo_original>
